<compile_context>
chip_gen: v7x
topology: tpu7x:2x2x1
jax: 0.10.0
libtpu: 0.0.40
codegen_flags: <defaults>
</compile_context>

<pallas_src>
import functools
import math

import jax
import jax.numpy as jnp
from jax.experimental import pallas as pl
from jax.experimental.pallas import tpu as pltpu


def _round_up(x, m):
    return ((x + m - 1) // m) * m


def _tiled_block_bytes(shape, dtype):
    """VMEM footprint of one block in native (8, 128) tiled layout."""
    itemsize = jnp.dtype(dtype).itemsize
    if len(shape) == 0:
        return itemsize
    if len(shape) == 1:
        return _round_up(shape[0], 128) * itemsize
    lead = 1
    for d in shape[:-2]:
        lead *= d
    return lead * _round_up(shape[-2], 8) * _round_up(shape[-1], 128) * itemsize


def _direct_conv_kernel(x_ref, w_ref, b_ref, o_ref, *, kh, kw, stride, oh, ow,
                        use_relu, compute_dtype):
    # x_ref: (1, Hp, Wp, Cin)    padded NHWC image, resident for this batch elem
    # w_ref: (KH*KW, Cin, TCO)   weights, Cout padded to lane-dense TCO
    # b_ref: (1, TCO)            f32 bias (zero-padded columns)
    # o_ref: (1, OH*OW, TCO)     lane-dense f32 output tile
    m = oh * ow
    tco = b_ref.shape[-1]

    # f32 accumulator initialised from the bias (added once per tile).
    acc = jnp.broadcast_to(b_ref[...], (m, tco))

    for idx in range(kh * kw):
        i, j = idx // kw, idx % kw
        # Contiguous window of the resident input tile (static slice).
        patch = x_ref[0,
                      i: i + (oh - 1) * stride + 1,
                      j: j + (ow - 1) * stride + 1,
                      :]
        if stride > 1:
            patch = patch[::stride, ::stride, :]
        # (OH, OW, Cin) -> (OH*OW, Cin); leading-dim collapse, minor dim kept.
        patch = patch.reshape(m, patch.shape[-1]).astype(compute_dtype)
        acc = acc + jnp.dot(patch, w_ref[idx],
                            preferred_element_type=jnp.float32)

    if use_relu:
        acc = jnp.maximum(acc, 0.0)
    o_ref[0] = acc.astype(o_ref.dtype)


class Conv2dPallas:
    """Pallas equivalent of the PyTorch Conv2d(+ReLU, +reshape) module."""

    def __init__(self, in_channels, out_channels, kernel_size, stride=1,
                 padding=0, use_relu=True, reshape=False, key=None,
                 compute_dtype=jnp.float32):
        self.in_channels = in_channels
        self.out_channels = out_channels
        self.kh = self.kw = kernel_size
        self.stride = stride
        self.padding = padding
        self.use_relu = use_relu
        self.reshape = reshape
        self.compute_dtype = compute_dtype  # set to jnp.bfloat16 on v6e/v7x

        if key is None:
            key = jax.random.PRNGKey(0)
        kw_key, kb_key = jax.random.split(key)
        fan_in = in_channels * kernel_size * kernel_size
        bound = 1.0 / math.sqrt(fan_in)
        # PyTorch weight layout: (Cout, Cin, KH, KW)
        self.weight = jax.random.uniform(
            kw_key, (out_channels, in_channels, kernel_size, kernel_size),
            minval=-bound, maxval=bound, dtype=jnp.float32)
        self.bias = jax.random.uniform(
            kb_key, (out_channels,), minval=-bound, maxval=bound,
            dtype=jnp.float32)

    def __call__(self, x_nchw):
        n, c, h, w = x_nchw.shape
        assert c == self.in_channels
        kh, kw_, s, p = self.kh, self.kw, self.stride, self.padding
        oh = (h + 2 * p - kh) // s + 1
        ow = (w + 2 * p - kw_) // s + 1
        m = oh * ow
        hp, wp = h + 2 * p, w + 2 * p
        cout = self.out_channels
        cout_pad = _round_up(cout, 128)
        tco = 256 if cout_pad % 256 == 0 else 128  # lane-dense Cout tile

        # Lightweight glue: NCHW -> padded NHWC (one pass), weight re-layout.
        x_nhwc = jnp.transpose(x_nchw, (0, 2, 3, 1))
        xp = jnp.pad(x_nhwc, ((0, 0), (p, p), (p, p), (0, 0)))
        xp = xp.astype(self.compute_dtype)

        # (Cout, Cin, KH, KW) -> (KH*KW, Cin, Cout_pad) with zero pad columns.
        w_r = jnp.transpose(self.weight, (2, 3, 1, 0)).reshape(kh * kw_, c, cout)
        w_r = jnp.pad(w_r, ((0, 0), (0, 0), (0, cout_pad - cout)))
        w_r = w_r.astype(self.compute_dtype)
        b_r = jnp.pad(self.bias, (0, cout_pad - cout)).reshape(1, cout_pad)
        b_r = b_r.astype(jnp.float32)

        kernel = functools.partial(
            _direct_conv_kernel, kh=kh, kw=kw_, stride=s, oh=oh, ow=ow,
            use_relu=self.use_relu, compute_dtype=self.compute_dtype)

        # VMEM budget: double-buffered input/output blocks + resident weights.
        # Clamp to <=56 MiB so the same config stays legal on v7x (64 MiB VMEM).
        in_bytes = _tiled_block_bytes((1, hp, wp, c), self.compute_dtype)
        out_bytes = _tiled_block_bytes((1, m, tco), jnp.float32)
        w_bytes = _tiled_block_bytes((kh * kw_, c, tco), self.compute_dtype)
        b_bytes = _tiled_block_bytes((1, tco), jnp.float32)
        vmem_limit = int(min(max(2 * (in_bytes + out_bytes) + w_bytes + b_bytes
                                 + (4 << 20), 32 << 20), 56 << 20))

        out_pad = pl.pallas_call(
            kernel,
            out_shape=jax.ShapeDtypeStruct((n, m, cout_pad), jnp.float32),
            grid_spec=pltpu.PrefetchScalarGridSpec(
                num_scalar_prefetch=0,
                grid=(n, cout_pad // tco),
                in_specs=[
                    # Whole padded image of one batch element, resident across
                    # the Cout axis (block index unchanged -> no re-DMA).
                    pl.BlockSpec((1, hp, wp, c), lambda bi, ci: (bi, 0, 0, 0)),
                    pl.BlockSpec((kh * kw_, c, tco), lambda bi, ci: (0, 0, ci)),
                    pl.BlockSpec((1, tco), lambda bi, ci: (0, ci)),
                ],
                out_specs=pl.BlockSpec((1, m, tco), lambda bi, ci: (bi, 0, ci)),
            ),
            compiler_params=pltpu.CompilerParams(
                dimension_semantics=("parallel", "parallel"),
                vmem_limit_bytes=vmem_limit),
        )(xp, w_r, b_r)

        out = out_pad[:, :, :cout].reshape(n, oh, ow, cout)
        out = jnp.transpose(out, (0, 3, 1, 2))  # back to NCHW (module contract)
        if self.reshape:
            out = out.reshape(n, -1)
        return out


if __name__ == "__main__":
    key = jax.random.PRNGKey(0)
    xkey, pkey = jax.random.split(key)

    # batch=2, Cin=4, 16x16 spatial, Cout=8, 3x3 kernel, stride=1, pad=1, ReLU.
    x = jax.random.normal(xkey, (2, 4, 16, 16), dtype=jnp.float32)

    conv = Conv2dPallas(in_channels=4, out_channels=8, kernel_size=3,
                        stride=1, padding=1, use_relu=True, reshape=False,
                        key=pkey, compute_dtype=jnp.float32)
    out = conv(x)
    out = jax.block_until_ready(out)

    # Reference check against XLA's conv (same semantics as torch.nn.Conv2d).
    ref = jax.lax.conv_general_dilated(
        x, conv.weight, window_strides=(1, 1),
        padding=((1, 1), (1, 1)),
        dimension_numbers=("NCHW", "OIHW", "NCHW"))
    ref = ref + conv.bias.reshape(1, -1, 1, 1)
    ref = jnp.maximum(ref, 0.0)

    assert out.shape == (2, 8, 16, 16), out.shape
    assert jnp.allclose(out, ref, atol=1e-4, rtol=1e-4)
    print("KERNEL_OK")
</pallas_src>

<mosaic_0001>
module attributes {stable_mosaic.version = 11 : i64} {
  func.func @_direct_conv_kernel(%arg0: i32, %arg1: i32, %arg2: memref<1x18x18x4xf32, #tpu.memory_space<vmem>>, %arg3: memref<9x4x128xf32, #tpu.memory_space<vmem>>, %arg4: memref<1x128xf32, #tpu.memory_space<vmem>>, %arg5: memref<1x256x128xf32, #tpu.memory_space<vmem>>) attributes {dimension_semantics = [#tpu.dimension_semantics<parallel>, #tpu.dimension_semantics<parallel>], iteration_bounds = array<i64: 2, 1>, scalar_prefetch = 0 : i64, scratch_operands = 0 : i64, tpu.core_type = #tpu.core_type<tc>, window_params = [{transform_indices = @transform_0, window_bounds = array<i64: 1, 18, 18, 4>}, {transform_indices = @transform_1, window_bounds = array<i64: 9, 4, 128>}, {transform_indices = @transform_2, window_bounds = array<i64: 1, 128>}, {transform_indices = @transform_3, window_bounds = array<i64: 1, 256, 128>}]} {
    %c0 = arith.constant 0 : index
    %c0_0 = arith.constant 0 : index
    %0 = vector.load %arg4[%c0, %c0_0] : memref<1x128xf32, #tpu.memory_space<vmem>>, vector<1x128xf32>
    %1 = vector.shape_cast %0 : vector<1x128xf32> to vector<1x128xf32>
    %2 = vector.broadcast %1 : vector<1x128xf32> to vector<256x128xf32>
    %c0_1 = arith.constant 0 : index
    %c0_2 = arith.constant 0 : index
    %c0_3 = arith.constant 0 : index
    %c0_4 = arith.constant 0 : index
    %3 = vector.load %arg2[%c0_1, %c0_2, %c0_3, %c0_4] : memref<1x18x18x4xf32, #tpu.memory_space<vmem>>, vector<1x16x16x4xf32>
    %4 = vector.shape_cast %3 : vector<1x16x16x4xf32> to vector<16x16x4xf32>
    %5 = vector.shape_cast %4 : vector<16x16x4xf32> to vector<256x4xf32>
    %c0_5 = arith.constant 0 : index
    %c0_6 = arith.constant 0 : index
    %c0_7 = arith.constant 0 : index
    %6 = vector.load %arg3[%c0_5, %c0_6, %c0_7] : memref<9x4x128xf32, #tpu.memory_space<vmem>>, vector<1x4x128xf32>
    %7 = vector.shape_cast %6 : vector<1x4x128xf32> to vector<4x128xf32>
    %cst = arith.constant dense<0.000000e+00> : vector<256x128xf32>
    %8 = tpu.matmul %5, %7, %cst {dimension_numbers = #tpu.dot_dimension_numbers<[1], [0], [0], [1], [0, 0, 1, 1], [], []>} : vector<256x4xf32>, vector<4x128xf32>, vector<256x128xf32> -> vector<256x128xf32>
    %9 = arith.addf %2, %8 : vector<256x128xf32>
    %c0_8 = arith.constant 0 : index
    %c0_9 = arith.constant 0 : index
    %c1 = arith.constant 1 : index
    %c0_10 = arith.constant 0 : index
    %10 = vector.load %arg2[%c0_8, %c0_9, %c1, %c0_10] : memref<1x18x18x4xf32, #tpu.memory_space<vmem>>, vector<1x16x16x4xf32>
    %11 = vector.shape_cast %10 : vector<1x16x16x4xf32> to vector<16x16x4xf32>
    %12 = vector.shape_cast %11 : vector<16x16x4xf32> to vector<256x4xf32>
    %c1_11 = arith.constant 1 : index
    %c0_12 = arith.constant 0 : index
    %c0_13 = arith.constant 0 : index
    %13 = vector.load %arg3[%c1_11, %c0_12, %c0_13] : memref<9x4x128xf32, #tpu.memory_space<vmem>>, vector<1x4x128xf32>
    %14 = vector.shape_cast %13 : vector<1x4x128xf32> to vector<4x128xf32>
    %cst_14 = arith.constant dense<0.000000e+00> : vector<256x128xf32>
    %15 = tpu.matmul %12, %14, %cst_14 {dimension_numbers = #tpu.dot_dimension_numbers<[1], [0], [0], [1], [0, 0, 1, 1], [], []>} : vector<256x4xf32>, vector<4x128xf32>, vector<256x128xf32> -> vector<256x128xf32>
    %16 = arith.addf %9, %15 : vector<256x128xf32>
    %c0_15 = arith.constant 0 : index
    %c0_16 = arith.constant 0 : index
    %c2 = arith.constant 2 : index
    %c0_17 = arith.constant 0 : index
    %17 = vector.load %arg2[%c0_15, %c0_16, %c2, %c0_17] : memref<1x18x18x4xf32, #tpu.memory_space<vmem>>, vector<1x16x16x4xf32>
    %18 = vector.shape_cast %17 : vector<1x16x16x4xf32> to vector<16x16x4xf32>
    %19 = vector.shape_cast %18 : vector<16x16x4xf32> to vector<256x4xf32>
    %c2_18 = arith.constant 2 : index
    %c0_19 = arith.constant 0 : index
    %c0_20 = arith.constant 0 : index
    %20 = vector.load %arg3[%c2_18, %c0_19, %c0_20] : memref<9x4x128xf32, #tpu.memory_space<vmem>>, vector<1x4x128xf32>
    %21 = vector.shape_cast %20 : vector<1x4x128xf32> to vector<4x128xf32>
    %cst_21 = arith.constant dense<0.000000e+00> : vector<256x128xf32>
    %22 = tpu.matmul %19, %21, %cst_21 {dimension_numbers = #tpu.dot_dimension_numbers<[1], [0], [0], [1], [0, 0, 1, 1], [], []>} : vector<256x4xf32>, vector<4x128xf32>, vector<256x128xf32> -> vector<256x128xf32>
    %23 = arith.addf %16, %22 : vector<256x128xf32>
    %c0_22 = arith.constant 0 : index
    %c1_23 = arith.constant 1 : index
    %c0_24 = arith.constant 0 : index
    %c0_25 = arith.constant 0 : index
    %24 = vector.load %arg2[%c0_22, %c1_23, %c0_24, %c0_25] : memref<1x18x18x4xf32, #tpu.memory_space<vmem>>, vector<1x16x16x4xf32>
    %25 = vector.shape_cast %24 : vector<1x16x16x4xf32> to vector<16x16x4xf32>
    %26 = vector.shape_cast %25 : vector<16x16x4xf32> to vector<256x4xf32>
    %c3 = arith.constant 3 : index
    %c0_26 = arith.constant 0 : index
    %c0_27 = arith.constant 0 : index
    %27 = vector.load %arg3[%c3, %c0_26, %c0_27] : memref<9x4x128xf32, #tpu.memory_space<vmem>>, vector<1x4x128xf32>
    %28 = vector.shape_cast %27 : vector<1x4x128xf32> to vector<4x128xf32>
    %cst_28 = arith.constant dense<0.000000e+00> : vector<256x128xf32>
    %29 = tpu.matmul %26, %28, %cst_28 {dimension_numbers = #tpu.dot_dimension_numbers<[1], [0], [0], [1], [0, 0, 1, 1], [], []>} : vector<256x4xf32>, vector<4x128xf32>, vector<256x128xf32> -> vector<256x128xf32>
    %30 = arith.addf %23, %29 : vector<256x128xf32>
    %c0_29 = arith.constant 0 : index
    %c1_30 = arith.constant 1 : index
    %c1_31 = arith.constant 1 : index
    %c0_32 = arith.constant 0 : index
    %31 = vector.load %arg2[%c0_29, %c1_30, %c1_31, %c0_32] : memref<1x18x18x4xf32, #tpu.memory_space<vmem>>, vector<1x16x16x4xf32>
    %32 = vector.shape_cast %31 : vector<1x16x16x4xf32> to vector<16x16x4xf32>
    %33 = vector.shape_cast %32 : vector<16x16x4xf32> to vector<256x4xf32>
    %c4 = arith.constant 4 : index
    %c0_33 = arith.constant 0 : index
    %c0_34 = arith.constant 0 : index
    %34 = vector.load %arg3[%c4, %c0_33, %c0_34] : memref<9x4x128xf32, #tpu.memory_space<vmem>>, vector<1x4x128xf32>
    %35 = vector.shape_cast %34 : vector<1x4x128xf32> to vector<4x128xf32>
    %cst_35 = arith.constant dense<0.000000e+00> : vector<256x128xf32>
    %36 = tpu.matmul %33, %35, %cst_35 {dimension_numbers = #tpu.dot_dimension_numbers<[1], [0], [0], [1], [0, 0, 1, 1], [], []>} : vector<256x4xf32>, vector<4x128xf32>, vector<256x128xf32> -> vector<256x128xf32>
    %37 = arith.addf %30, %36 : vector<256x128xf32>
    %c0_36 = arith.constant 0 : index
    %c1_37 = arith.constant 1 : index
    %c2_38 = arith.constant 2 : index
    %c0_39 = arith.constant 0 : index
    %38 = vector.load %arg2[%c0_36, %c1_37, %c2_38, %c0_39] : memref<1x18x18x4xf32, #tpu.memory_space<vmem>>, vector<1x16x16x4xf32>
    %39 = vector.shape_cast %38 : vector<1x16x16x4xf32> to vector<16x16x4xf32>
    %40 = vector.shape_cast %39 : vector<16x16x4xf32> to vector<256x4xf32>
    %c5 = arith.constant 5 : index
    %c0_40 = arith.constant 0 : index
    %c0_41 = arith.constant 0 : index
    %41 = vector.load %arg3[%c5, %c0_40, %c0_41] : memref<9x4x128xf32, #tpu.memory_space<vmem>>, vector<1x4x128xf32>
    %42 = vector.shape_cast %41 : vector<1x4x128xf32> to vector<4x128xf32>
    %cst_42 = arith.constant dense<0.000000e+00> : vector<256x128xf32>
    %43 = tpu.matmul %40, %42, %cst_42 {dimension_numbers = #tpu.dot_dimension_numbers<[1], [0], [0], [1], [0, 0, 1, 1], [], []>} : vector<256x4xf32>, vector<4x128xf32>, vector<256x128xf32> -> vector<256x128xf32>
    %44 = arith.addf %37, %43 : vector<256x128xf32>
    %c0_43 = arith.constant 0 : index
    %c2_44 = arith.constant 2 : index
    %c0_45 = arith.constant 0 : index
    %c0_46 = arith.constant 0 : index
    %45 = vector.load %arg2[%c0_43, %c2_44, %c0_45, %c0_46] : memref<1x18x18x4xf32, #tpu.memory_space<vmem>>, vector<1x16x16x4xf32>
    %46 = vector.shape_cast %45 : vector<1x16x16x4xf32> to vector<16x16x4xf32>
    %47 = vector.shape_cast %46 : vector<16x16x4xf32> to vector<256x4xf32>
    %c6 = arith.constant 6 : index
    %c0_47 = arith.constant 0 : index
    %c0_48 = arith.constant 0 : index
    %48 = vector.load %arg3[%c6, %c0_47, %c0_48] : memref<9x4x128xf32, #tpu.memory_space<vmem>>, vector<1x4x128xf32>
    %49 = vector.shape_cast %48 : vector<1x4x128xf32> to vector<4x128xf32>
    %cst_49 = arith.constant dense<0.000000e+00> : vector<256x128xf32>
    %50 = tpu.matmul %47, %49, %cst_49 {dimension_numbers = #tpu.dot_dimension_numbers<[1], [0], [0], [1], [0, 0, 1, 1], [], []>} : vector<256x4xf32>, vector<4x128xf32>, vector<256x128xf32> -> vector<256x128xf32>
    %51 = arith.addf %44, %50 : vector<256x128xf32>
    %c0_50 = arith.constant 0 : index
    %c2_51 = arith.constant 2 : index
    %c1_52 = arith.constant 1 : index
    %c0_53 = arith.constant 0 : index
    %52 = vector.load %arg2[%c0_50, %c2_51, %c1_52, %c0_53] : memref<1x18x18x4xf32, #tpu.memory_space<vmem>>, vector<1x16x16x4xf32>
    %53 = vector.shape_cast %52 : vector<1x16x16x4xf32> to vector<16x16x4xf32>
    %54 = vector.shape_cast %53 : vector<16x16x4xf32> to vector<256x4xf32>
    %c7 = arith.constant 7 : index
    %c0_54 = arith.constant 0 : index
    %c0_55 = arith.constant 0 : index
    %55 = vector.load %arg3[%c7, %c0_54, %c0_55] : memref<9x4x128xf32, #tpu.memory_space<vmem>>, vector<1x4x128xf32>
    %56 = vector.shape_cast %55 : vector<1x4x128xf32> to vector<4x128xf32>
    %cst_56 = arith.constant dense<0.000000e+00> : vector<256x128xf32>
    %57 = tpu.matmul %54, %56, %cst_56 {dimension_numbers = #tpu.dot_dimension_numbers<[1], [0], [0], [1], [0, 0, 1, 1], [], []>} : vector<256x4xf32>, vector<4x128xf32>, vector<256x128xf32> -> vector<256x128xf32>
    %58 = arith.addf %51, %57 : vector<256x128xf32>
    %c0_57 = arith.constant 0 : index
    %c2_58 = arith.constant 2 : index
    %c2_59 = arith.constant 2 : index
    %c0_60 = arith.constant 0 : index
    %59 = vector.load %arg2[%c0_57, %c2_58, %c2_59, %c0_60] : memref<1x18x18x4xf32, #tpu.memory_space<vmem>>, vector<1x16x16x4xf32>
    %60 = vector.shape_cast %59 : vector<1x16x16x4xf32> to vector<16x16x4xf32>
    %61 = vector.shape_cast %60 : vector<16x16x4xf32> to vector<256x4xf32>
    %c8 = arith.constant 8 : index
    %c0_61 = arith.constant 0 : index
    %c0_62 = arith.constant 0 : index
    %62 = vector.load %arg3[%c8, %c0_61, %c0_62] : memref<9x4x128xf32, #tpu.memory_space<vmem>>, vector<1x4x128xf32>
    %63 = vector.shape_cast %62 : vector<1x4x128xf32> to vector<4x128xf32>
    %cst_63 = arith.constant dense<0.000000e+00> : vector<256x128xf32>
    %64 = tpu.matmul %61, %63, %cst_63 {dimension_numbers = #tpu.dot_dimension_numbers<[1], [0], [0], [1], [0, 0, 1, 1], [], []>} : vector<256x4xf32>, vector<4x128xf32>, vector<256x128xf32> -> vector<256x128xf32>
    %65 = arith.addf %58, %64 : vector<256x128xf32>
    %cst_64 = arith.constant 0.000000e+00 : f32
    %66 = vector.broadcast %cst_64 : f32 to vector<256x128xf32>
    %67 = arith.maximumf %65, %66 : vector<256x128xf32>
    %c0_65 = arith.constant 0 : index
    %c0_66 = arith.constant 0 : index
    %c0_67 = arith.constant 0 : index
    %68 = vector.load %arg5[%c0_65, %c0_66, %c0_67] : memref<1x256x128xf32, #tpu.memory_space<vmem>>, vector<1x256x128xf32>
    %69 = vector.shape_cast %68 : vector<1x256x128xf32> to vector<256x128xf32>
    %70 = vector.shape_cast %67 : vector<256x128xf32> to vector<1x256x128xf32>
    tpu.vector_store %arg5[%c0_65, %c0_66, %c0_67], %70 {strides = array<i32>} : memref<1x256x128xf32, #tpu.memory_space<vmem>>, vector<1x256x128xf32>,
    return
  }
  func.func @transform_0(%arg0: i32, %arg1: i32) -> (i32, i32, i32, i32) {
    %c0_i32 = arith.constant 0 : i32
    %c0_i32_0 = arith.constant 0 : i32
    %c0_i32_1 = arith.constant 0 : i32
    %c0_i32_2 = arith.constant 0 : i32
    return %arg0, %c0_i32, %c0_i32_0, %c0_i32_1 : i32, i32, i32, i32
  }
  func.func @transform_1(%arg0: i32, %arg1: i32) -> (i32, i32, i32) {
    %c0_i32 = arith.constant 0 : i32
    %c0_i32_0 = arith.constant 0 : i32
    %c0_i32_1 = arith.constant 0 : i32
    return %c0_i32, %c0_i32_0, %arg1 : i32, i32, i32
  }
  func.func @transform_2(%arg0: i32, %arg1: i32) -> (i32, i32) {
    %c0_i32 = arith.constant 0 : i32
    %c0_i32_0 = arith.constant 0 : i32
    return %c0_i32, %arg1 : i32, i32
  }
  func.func @transform_3(%arg0: i32, %arg1: i32) -> (i32, i32, i32) {
    %c0_i32 = arith.constant 0 : i32
    %c0_i32_0 = arith.constant 0 : i32
    return %arg0, %c0_i32, %arg1 : i32, i32, i32
  }
}

</mosaic_0001>

<llo_original>
// kernel: tpu_custom_call.1
$region0: #{tpu_custom_call.1}
  #allocation0 [shape = 'u32[]', space=smem, size = 0x4, offset = 0x4, fixed_abs, tag = 'smem constant byte address 0x4 - core index']
  #allocation1 [shape = 'u32[144,128]{1,0:T(1,128)}', space=vmem, size = 0x12000, scoped, tag = 'internal scratch']
  %s0 = inlined_call_operand.vmem [shape: f32[2,18,18,4], index: 0, kind: input, shape index: {}]
  %s1 = inlined_call_operand.vmem [shape: f32[9,4,128], index: 1, kind: input, shape index: {}]
  %s2 = inlined_call_operand.vmem [shape: f32[1,128], index: 2, kind: input, shape index: {}]
  %s3 = inlined_call_operand.hbm [shape: f32[2,256,128], index: 3, kind: output, shape index: {}]
  %s4 = sld [smem:[#allocation0]]
  $region45: #{tpu_custom_call.1} parent=0
    _
  %s6 = ssub.s32 1, %s4
  %s7 = scalar_select 0, %s6, %s4
  $region1: #{tpu_custom_call.1} parent=0
    #allocation2 [shape = 'u8[262144]{0}', space=vmem, size = 0x40000, scoped, tag = 'output window, operand 0']
    #allocation3 [shape = 's32[2]{0}', space=sflag, size = 0x8, scoped, tag = 'scoped memory for tpu_custom_call.1']
    %8 = vsyncpa [#allocation3], 0
    %s9 = scalar_lea.sflag [#allocation3], 1
    %10 = vsyncpa %s9, 0
    loop: start=0, step=1, limit=4
    $region2: #{tpu_custom_call.1} parent=1 // loop_pre_header
      _
    $region3: #{tpu_custom_call.1} parent=1 // loop_header
      %s12 = sphi 0, %s16
      %p13 = scmp.ge.s32.totalorder %s12, 4
      %s19 = sphi 0, %s31
      %s20 = sphi 0, %s27
      %s21 = sphi 0, %s19
      %s22 = sphi 0, %s20
      %s23 = sphi 0, %s21
      %s24 = sphi 0, %s22
      %s34 = sphi 0, %s36
      %s37 = sphi 0, %s34
      %s38 = sphi 0, %s37
      %s54 = sphi 0, %s38
      %s60 = sphi 0, %s62
      %s63 = sphi 0, %s60
      %s64 = sphi 0, %s63
      %s80 = sphi 0, %s64
      %s86 = sphi 0, %s88
      %s89 = sphi 0, %s86
      %s90 = sphi 0, %s89
      %s106 = sphi 0, %s90
      %s114 = sphi 0, %s116
      %s117 = sphi 0, %s114
      %s118 = sphi 0, %s117
      %s134 = sphi 0, %s118
    $region4: #{tpu_custom_call.1} parent=1 // loop_header_branch
      %15 = sbr.rel (%p13) target = $region8
    $region5: #{tpu_custom_call.1} parent=1 // loop_body
      %s17 = ssub.s32 %s12, 1
      %s18 = ssub.s32 %s12, 2
      %s25 = sadd.s32 1, %s20
      %p26 = scmp.ge.s32.totalorder %s25, 1
      %s27 = scalar_select %p26, 0, %s25
      %s28 = sadd.s32 1, %s19
      %s29 = scalar_select %p26, %s28, %s19
      %p30 = scmp.ge.s32.totalorder %s29, 2
      %s31 = scalar_select %p30, 0, %s29
      %s32 = ssub.s32 %s19, %s31
      %p33 = scmp.eq.s32.totalorder %s32, 0
      %s35 = sadd.s32 %s34, 1
      %s36 = scalar_select %p33, %s34, %s35
      %p39 = pneg %p33
      %p40 = scmp.eq.s32.totalorder %s12, 1
      %p41 = por %p39, %p40
      %p42 = scmp.ne.s32.totalorder %s34, %s37
      %p43 = scmp.eq.s32.totalorder %s12, 0
      %p44 = por %p42, %p43
      %p45 = scmp.ne.s32.totalorder %s34, %s37
      %p46 = scmp.eq.s32.totalorder %s17, 1
      %p47 = por %p45, %p46
      %p48 = scmp.ne.s32.totalorder %s37, %s38
      %p49 = scmp.eq.s32.totalorder %s17, 0
      %p50 = por %p48, %p49
      %p51 = scmp.ne.s32.totalorder %s37, %s38
      %p52 = scmp.eq.s32.totalorder %s18, 1
      %p53 = por %p51, %p52
      %p55 = scmp.ne.s32.totalorder %s38, %s54
      %p56 = scmp.eq.s32.totalorder %s18, 0
      %p57 = por %p55, %p56
      %s58 = ssub.s32 %s20, %s27
      %p59 = scmp.eq.s32.totalorder %s58, 0
      %s61 = sadd.s32 %s60, 1
      %s62 = scalar_select %p59, %s60, %s61
      %p65 = pneg %p59
      %p66 = scmp.eq.s32.totalorder %s12, 1
      %p67 = por %p65, %p66
      %p68 = scmp.ne.s32.totalorder %s60, %s63
      %p69 = scmp.eq.s32.totalorder %s12, 0
      %p70 = por %p68, %p69
      %p71 = scmp.ne.s32.totalorder %s60, %s63
      %p72 = scmp.eq.s32.totalorder %s17, 1
      %p73 = por %p71, %p72
      %p74 = scmp.ne.s32.totalorder %s63, %s64
      %p75 = scmp.eq.s32.totalorder %s17, 0
      %p76 = por %p74, %p75
      %p77 = scmp.ne.s32.totalorder %s63, %s64
      %p78 = scmp.eq.s32.totalorder %s18, 1
      %p79 = por %p77, %p78
      %p81 = scmp.ne.s32.totalorder %s64, %s80
      %p82 = scmp.eq.s32.totalorder %s18, 0
      %p83 = por %p81, %p82
      %s84 = ssub.s32 %s20, %s27
      %p85 = scmp.eq.s32.totalorder %s84, 0
      %s87 = sadd.s32 %s86, 1
      %s88 = scalar_select %p85, %s86, %s87
      %p91 = pneg %p85
      %p92 = scmp.eq.s32.totalorder %s12, 1
      %p93 = por %p91, %p92
      %p94 = scmp.ne.s32.totalorder %s86, %s89
      %p95 = scmp.eq.s32.totalorder %s12, 0
      %p96 = por %p94, %p95
      %p97 = scmp.ne.s32.totalorder %s86, %s89
      %p98 = scmp.eq.s32.totalorder %s17, 1
      %p99 = por %p97, %p98
      %p100 = scmp.ne.s32.totalorder %s89, %s90
      %p101 = scmp.eq.s32.totalorder %s17, 0
      %p102 = por %p100, %p101
      %p103 = scmp.ne.s32.totalorder %s89, %s90
      %p104 = scmp.eq.s32.totalorder %s18, 1
      %p105 = por %p103, %p104
      %p107 = scmp.ne.s32.totalorder %s90, %s106
      %p108 = scmp.eq.s32.totalorder %s18, 0
      %p109 = por %p107, %p108
      %s110 = ssub.s32 %s19, %s31
      %s111 = ssub.s32 %s20, %s27
      %s112 = sor.u32 %s110, %s111
      %p113 = scmp.eq.s32.totalorder %s112, 0
      %s115 = sadd.s32 %s114, 1
      %s116 = scalar_select %p113, %s114, %s115
      %p119 = pneg %p113
      %p120 = scmp.eq.s32.totalorder %s12, 1
      %p121 = por %p119, %p120
      %p122 = scmp.ne.s32.totalorder %s114, %s117
      %p123 = scmp.eq.s32.totalorder %s12, 0
      %p124 = por %p122, %p123
      %p125 = scmp.ne.s32.totalorder %s114, %s117
      %p126 = scmp.eq.s32.totalorder %s17, 1
      %p127 = por %p125, %p126
      %p128 = scmp.ne.s32.totalorder %s117, %s118
      %p129 = scmp.eq.s32.totalorder %s17, 0
      %p130 = por %p128, %p129
      %p131 = scmp.ne.s32.totalorder %s117, %s118
      %p132 = scmp.eq.s32.totalorder %s18, 1
      %p133 = por %p131, %p132
      %p135 = scmp.ne.s32.totalorder %s118, %s134
      %p136 = scmp.eq.s32.totalorder %s18, 0
      %p137 = por %p135, %p136
      %p138 = scmp.le.s32.totalorder 1, %s12
      %p139 = scmp.lt.s32.totalorder %s12, 3
      %p140 = pnand %p138, %p139
      %p141 = pneg %p140
      // Predicated region
      $region9: #{tpu_custom_call.1} parent=5 // pred_check
        _
      $region10: #{tpu_custom_call.1} parent=5 // pred_check_branch
        %143 = sbr.rel (%p140) target = $region12
      $region11: #{tpu_custom_call.1} parent=5 // pred_region
        %s144 = ssub.s32 %s12, 1
        // Predicated region
        $region13: #{tpu_custom_call.1} parent=11 // pred_check
          %p145 = pneg %p76
        $region14: #{tpu_custom_call.1} parent=11 // pred_check_branch
          %147 = sbr.rel (%p145) target = $region16
        $region15: #{tpu_custom_call.1} parent=11 // pred_region
          %p148 = scmp.lt.s32.totalorder %s22, 0
          %s149 = scalar_select %p148, %s22, 0
          %s150 = smul.addr %s149, 4
          %s151 = scalar_lea.vmem %s1, %s150
        $region16: #{tpu_custom_call.1} parent=11 // pred_fallthru
          _
        // Predicated region
        $region17: #{tpu_custom_call.1} parent=11 // pred_check
          %p152 = pneg %p102
        $region18: #{tpu_custom_call.1} parent=11 // pred_check_branch
          %154 = sbr.rel (%p152) target = $region20
        $region19: #{tpu_custom_call.1} parent=11 // pred_region
          %p155 = scmp.lt.s32.totalorder %s22, 0
          %s156 = scalar_select %p155, %s22, 0
          %s157 = scalar_lea.vmem %s2, %s156
        $region20: #{tpu_custom_call.1} parent=11 // pred_fallthru
          _
      $region12: #{tpu_custom_call.1} parent=5 // pred_fallthru
        _
      %p158 = scmp.lt.s32.totalorder %s12, 2
      // Predicated region
      $region21: #{tpu_custom_call.1} parent=5 // pred_check
        %p159 = pneg %p158
      $region22: #{tpu_custom_call.1} parent=5 // pred_check_branch
        %161 = sbr.rel (%p159) target = $region24
      $region23: #{tpu_custom_call.1} parent=5 // pred_region
        // Predicated region
        $region25: #{tpu_custom_call.1} parent=23 // pred_check
          %p162 = pneg %p44
        $region26: #{tpu_custom_call.1} parent=23 // pred_check_branch
          %164 = sbr.rel (%p162) target = $region28
        $region27: #{tpu_custom_call.1} parent=23 // pred_region
          %p165 = scmp.lt.s32.totalorder %s19, 1
          %s166 = scalar_select %p165, %s19, 1
          %s167 = smul.addr %s166, 54
          %s168 = smul.addr %s167, 8
          %s169 = scalar_lea.vmem %s0, %s168
        $region28: #{tpu_custom_call.1} parent=23 // pred_fallthru
          _
      $region24: #{tpu_custom_call.1} parent=5 // pred_fallthru
        _
      %p170 = scmp.le.s32.totalorder 1, %s12
      %p171 = scmp.lt.s32.totalorder %s12, 3
      %p172 = pnand %p170, %p171
      %p173 = pneg %p172
      // Predicated region
      $region29: #{tpu_custom_call.1} parent=5 // pred_check
        _
      $region30: #{tpu_custom_call.1} parent=5 // pred_check_branch
        %175 = sbr.rel (%p172) target = $region32
      $region31: #{tpu_custom_call.1} parent=5 // pred_region
        %s176 = ssub.s32 %s12, 1
        %p177 = scmp.lt.s32.totalorder %s21, 1
        %s178 = scalar_select %p177, %s21, 1
        %s179 = smul.addr %s178, 54
        %s180 = smul.addr %s179, 8
        %s181 = scalar_lea.vmem %s0, %s180
        %p182 = pneg %p50
        %p183 = pneg %p47
        %p184 = scmp.lt.s32.totalorder %s22, 0
        %s185 = scalar_select %p184, %s22, 0
        %s186 = smul.addr %s185, 4
        %s187 = scalar_lea.vmem %s1, %s186
        %p188 = pneg %p76
        %p189 = pneg %p73
        %p190 = scmp.lt.s32.totalorder %s22, 0
        %s191 = scalar_select %p190, %s22, 0
        %s192 = scalar_lea.vmem %s2, %s191
        %p193 = pneg %p102
        %p194 = pneg %p99
        %p195 = pneg %p130
        %p196 = pneg %p127
        %s197 = sand.u32 %s117, 1
        %s198 = scalar_lea.sflag [#allocation3], %s197
        %s199 = sand.u32 %s117, 1
        %s200 = smul.addr %s199, 256
        %s201 = scalar_lea.vmem [#allocation2], %s200
        %p202 = scmp.lt.s32.totalorder %s21, 1
        %s203 = scalar_select %p202, %s21, 1
        %s204 = smul.addr %s203, 54
        %s205 = smul.addr %s204, 8
        %s206 = scalar_lea.vmem %s0, %s205
        %p207 = scmp.lt.s32.totalorder %s22, 0
        %s208 = scalar_select %p207, %s22, 0
        %s209 = smul.addr %s208, 4
        %s210 = scalar_lea.vmem %s1, %s209
        %p211 = scmp.lt.s32.totalorder %s22, 0
        %s212 = scalar_select %p211, %s22, 0
        %s213 = scalar_lea.vmem %s2, %s212
        %v214 = vld [vmem:[%s213] sm:$0x1]
        %v216 = vlaneseq
        %v217 = vshrl.u32 %v216, 7
        %v218 = vsub.s32 0, %v217
        %v219 = vrot.slane %v214, %v218
        %v221 = vld [vmem:[%s206] sm:$0xff]
        %v222 = vld [vmem:[%s206 + $0x8] sm:$0xff]
        %v223 = vld [vmem:[%s206 + $0x18] sm:$0xff]
        %v224 = vld [vmem:[%s206 + $0x20] sm:$0xff]
        %v225 = vld [vmem:[%s206 + $0x30] sm:$0xff]
        %v226 = vld [vmem:[%s206 + $0x38] sm:$0xff]
        %v227 = vld [vmem:[%s206 + $0x48] sm:$0xff]
        %v228 = vld [vmem:[%s206 + $0x50] sm:$0xff]
        %v229 = vld [vmem:[%s206 + $0x60] sm:$0xff]
        %v230 = vld [vmem:[%s206 + $0x68] sm:$0xff]
        %v231 = vld [vmem:[%s206 + $0x78] sm:$0xff]
        %v232 = vld [vmem:[%s206 + $0x80] sm:$0xff]
        %v233 = vld [vmem:[%s206 + $0x90] sm:$0xff]
        %v234 = vld [vmem:[%s206 + $0x98] sm:$0xff]
        %v235 = vld [vmem:[%s206 + $0xa8] sm:$0xff]
        %v236 = vld [vmem:[%s206 + $0xb0] sm:$0xff]
        %v237 = vld [vmem:[%s206 + $0xc0] sm:$0xff]
        %v238 = vld [vmem:[%s206 + $0xc8] sm:$0xff]
        %v239 = vld [vmem:[%s206 + $0xd8] sm:$0xff]
        %v240 = vld [vmem:[%s206 + $0xe0] sm:$0xff]
        %v241 = vld [vmem:[%s206 + $0xf0] sm:$0xff]
        %v242 = vld [vmem:[%s206 + $0xf8] sm:$0xff]
        %v243 = vld [vmem:[%s206 + $0x108] sm:$0xff]
        %v244 = vld [vmem:[%s206 + $0x110] sm:$0xff]
        %v245 = vld [vmem:[%s206 + $0x120] sm:$0xff]
        %v246 = vld [vmem:[%s206 + $0x128] sm:$0xff]
        %v247 = vld [vmem:[%s206 + $0x138] sm:$0xff]
        %v248 = vld [vmem:[%s206 + $0x140] sm:$0xff]
        %v249 = vld [vmem:[%s206 + $0x150] sm:$0xff]
        %v250 = vld [vmem:[%s206 + $0x158] sm:$0xff]
        %v251 = vld [vmem:[%s206 + $0x168] sm:$0xff]
        %v252 = vld [vmem:[%s206 + $0x170] sm:$0xff]
        %v253 = vld [vmem:[%s210] sm:$0xf]
        %vm254 = vcmask 31744
        %v256 = vsel %vm254, %v221, 0
        %v259 = vsel %vm254, %v222, 0
        %v262 = vsel %vm254, %v223, 0
        %v265 = vsel %vm254, %v224, 0
        %v268 = vsel %vm254, %v225, 0
        %v271 = vsel %vm254, %v226, 0
        %v274 = vsel %vm254, %v227, 0
        %v277 = vsel %vm254, %v228, 0
        %v280 = vsel %vm254, %v229, 0
        %v283 = vsel %vm254, %v230, 0
        %v286 = vsel %vm254, %v231, 0
        %v289 = vsel %vm254, %v232, 0
        %v292 = vsel %vm254, %v233, 0
        %v295 = vsel %vm254, %v234, 0
        %v298 = vsel %vm254, %v235, 0
        %v301 = vsel %vm254, %v236, 0
        %v304 = vsel %vm254, %v237, 0
        %v307 = vsel %vm254, %v238, 0
        %v310 = vsel %vm254, %v239, 0
        %v313 = vsel %vm254, %v240, 0
        %v316 = vsel %vm254, %v241, 0
        %v319 = vsel %vm254, %v242, 0
        %v322 = vsel %vm254, %v243, 0
        %v325 = vsel %vm254, %v244, 0
        %v328 = vsel %vm254, %v245, 0
        %v331 = vsel %vm254, %v246, 0
        %v334 = vsel %vm254, %v247, 0
        %v337 = vsel %vm254, %v248, 0
        %v340 = vsel %vm254, %v249, 0
        %v343 = vsel %vm254, %v250, 0
        %v346 = vsel %vm254, %v251, 0
        %v349 = vsel %vm254, %v252, 0
        %vm351 = vcmask 1043456
        %v353 = vsel %vm351, %v253, 0
        %355 = vmatprep.subr.mxu0 0.0
        %356 = vmatpush1.msra.mxu0 %v353
        %357 = vmatprep.subr.mxu0 0.0
        %358 = vmatpush1.msra.mxu0 0.0
        %359 = vmatprep.subr.mxu0 0.0
        %360 = vmatpush1.msra.mxu0 0.0
        %361 = vmatprep.subr.mxu0 0.0
        %362 = vmatpush1.msra.mxu0 0.0
        %363 = vmatprep.subr.mxu0 0.0
        %364 = vmatpush1.msra.mxu0 0.0
        %365 = vmatprep.subr.mxu0 0.0
        %366 = vmatpush1.msra.mxu0 0.0
        %367 = vmatprep.subr.mxu0 0.0
        %368 = vmatpush1.msra.mxu0 0.0
        %369 = vmatprep.subr.mxu0 0.0
        %370 = vmatpush1.msra.mxu0 0.0
        %371 = vmatprep.subr.mxu0 0.0
        %372 = vmatpush1.msra.mxu0 0.0
        %373 = vmatprep.subr.mxu0 0.0
        %374 = vmatpush1.msra.mxu0 0.0
        %375 = vmatprep.subr.mxu0 0.0
        %376 = vmatpush1.msra.mxu0 0.0
        %377 = vmatprep.subr.mxu0 0.0
        %378 = vmatpush1.msra.mxu0 0.0
        %379 = vmatprep.subr.mxu0 0.0
        %380 = vmatpush1.msra.mxu0 0.0
        %381 = vmatprep.subr.mxu0 0.0
        %382 = vmatpush1.msra.mxu0 0.0
        %383 = vmatprep.subr.mxu0 0.0
        %384 = vmatpush1.msra.mxu0 0.0
        %385 = vmatprep.subr.mxu0 0.0
        %386 = vmatpush1.msra.mxu0 0.0
        %387 = vmatprep.subr.mxu0 0.0
        %388 = vmatpush1.msra.mxu0 0.0
        %389 = vmatprep.subr.mxu0 0.0
        %390 = vmatpush1.msra.mxu0 0.0
        %391 = vmatprep.subr.mxu0 0.0
        %392 = vmatpush1.msra.mxu0 0.0
        %393 = vmatprep.subr.mxu0 0.0
        %394 = vmatpush1.msra.mxu0 0.0
        %395 = vmatprep.subr.mxu0 0.0
        %396 = vmatpush1.msra.mxu0 0.0
        %397 = vmatprep.subr.mxu0 0.0
        %398 = vmatpush1.msra.mxu0 0.0
        %399 = vmatprep.subr.mxu0 0.0
        %400 = vmatpush1.msra.mxu0 0.0
        %401 = vmatprep.subr.mxu0 0.0
        %402 = vmatpush1.msra.mxu0 0.0
        %403 = vmatprep.subr.mxu0 0.0
        %404 = vmatpush1.msra.mxu0 0.0
        %405 = vmatprep.subr.mxu0 0.0
        %406 = vmatpush1.msra.mxu0 0.0
        %407 = vmatprep.subr.mxu0 0.0
        %408 = vmatpush1.msra.mxu0 0.0
        %409 = vmatprep.subr.mxu0 0.0
        %410 = vmatpush1.msra.mxu0 0.0
        %411 = vmatprep.subr.mxu0 0.0
        %412 = vmatpush1.msra.mxu0 0.0
        %413 = vmatprep.subr.mxu0 0.0
        %414 = vmatpush1.msra.mxu0 0.0
        %415 = vmatprep.subr.mxu0 0.0
        %416 = vmatpush1.msra.mxu0 0.0
        %417 = vmatprep.subr.mxu0 0.0
        %418 = vmatpush1.msra.mxu0 0.0
        %419 = vmatprep.mubr.f32.mxu0 0.0
        %420 = vmatmul.mubr.f32.gmra.mrb[0].mxu0 %v256
        %v421 = vpop.f32.mrb[0].mxu0
        %v422 = vadd.f32 0.0, %v421
        %v423 = vpop.f32.mrb[0].mxu0
        %424 = vmatprep.mubr.f32.mxu0 0.0
        %425 = vmatmul.mubr.f32.gmra.mrb[0].mxu0 %v259
        %v426 = vpop.f32.mrb[0].mxu0
        %v427 = vadd.f32 0.0, %v426
        %v428 = vpop.f32.mrb[0].mxu0
        %429 = vmatprep.mubr.f32.mxu0 0.0
        %430 = vmatmul.mubr.f32.gmra.mrb[0].mxu0 %v262
        %v431 = vpop.f32.mrb[0].mxu0
        %v432 = vadd.f32 0.0, %v431
        %v433 = vpop.f32.mrb[0].mxu0
        %434 = vmatprep.mubr.f32.mxu0 0.0
        %435 = vmatmul.mubr.f32.gmra.mrb[0].mxu0 %v265
        %v436 = vpop.f32.mrb[0].mxu0
        %v437 = vadd.f32 0.0, %v436
        %v438 = vpop.f32.mrb[0].mxu0
        %439 = vmatprep.mubr.f32.mxu0 0.0
        %440 = vmatmul.mubr.f32.gmra.mrb[0].mxu0 %v268
        %v441 = vpop.f32.mrb[0].mxu0
        %v442 = vadd.f32 0.0, %v441
        %v443 = vpop.f32.mrb[0].mxu0
        %444 = vmatprep.mubr.f32.mxu0 0.0
        %445 = vmatmul.mubr.f32.gmra.mrb[0].mxu0 %v271
        %v446 = vpop.f32.mrb[0].mxu0
        %v447 = vadd.f32 0.0, %v446
        %v448 = vpop.f32.mrb[0].mxu0
        %449 = vmatprep.mubr.f32.mxu0 0.0
        %450 = vmatmul.mubr.f32.gmra.mrb[0].mxu0 %v274
        %v451 = vpop.f32.mrb[0].mxu0
        %v452 = vadd.f32 0.0, %v451
        %v453 = vpop.f32.mrb[0].mxu0
        %454 = vmatprep.mubr.f32.mxu0 0.0
        %455 = vmatmul.mubr.f32.gmra.mrb[0].mxu0 %v277
        %v456 = vpop.f32.mrb[0].mxu0
        %v457 = vadd.f32 0.0, %v456
        %v458 = vpop.f32.mrb[0].mxu0
        %459 = vmatprep.mubr.f32.mxu0 0.0
        %460 = vmatmul.mubr.f32.gmra.mrb[0].mxu0 %v280
        %v461 = vpop.f32.mrb[0].mxu0
        %v462 = vadd.f32 0.0, %v461
        %v463 = vpop.f32.mrb[0].mxu0
        %464 = vmatprep.mubr.f32.mxu0 0.0
        %465 = vmatmul.mubr.f32.gmra.mrb[0].mxu0 %v283
        %v466 = vpop.f32.mrb[0].mxu0
        %v467 = vadd.f32 0.0, %v466
        %v468 = vpop.f32.mrb[0].mxu0
        %469 = vmatprep.mubr.f32.mxu0 0.0
        %470 = vmatmul.mubr.f32.gmra.mrb[0].mxu0 %v286
        %v471 = vpop.f32.mrb[0].mxu0
        %v472 = vadd.f32 0.0, %v471
        %v473 = vpop.f32.mrb[0].mxu0
        %474 = vmatprep.mubr.f32.mxu0 0.0
        %475 = vmatmul.mubr.f32.gmra.mrb[0].mxu0 %v289
        %v476 = vpop.f32.mrb[0].mxu0
        %v477 = vadd.f32 0.0, %v476
        %v478 = vpop.f32.mrb[0].mxu0
        %479 = vmatprep.mubr.f32.mxu0 0.0
        %480 = vmatmul.mubr.f32.gmra.mrb[0].mxu0 %v292
        %v481 = vpop.f32.mrb[0].mxu0
        %v482 = vadd.f32 0.0, %v481
        %v483 = vpop.f32.mrb[0].mxu0
        %484 = vmatprep.mubr.f32.mxu0 0.0
        %485 = vmatmul.mubr.f32.gmra.mrb[0].mxu0 %v295
        %v486 = vpop.f32.mrb[0].mxu0
        %v487 = vadd.f32 0.0, %v486
        %v488 = vpop.f32.mrb[0].mxu0
        %489 = vmatprep.mubr.f32.mxu0 0.0
        %490 = vmatmul.mubr.f32.gmra.mrb[0].mxu0 %v298
        %v491 = vpop.f32.mrb[0].mxu0
        %v492 = vadd.f32 0.0, %v491
        %v493 = vpop.f32.mrb[0].mxu0
        %494 = vmatprep.mubr.f32.mxu0 0.0
        %495 = vmatmul.mubr.f32.gmra.mrb[0].mxu0 %v301
        %v496 = vpop.f32.mrb[0].mxu0
        %v497 = vadd.f32 0.0, %v496
        %v498 = vpop.f32.mrb[0].mxu0
        %499 = vmatprep.mubr.f32.mxu0 0.0
        %500 = vmatmul.mubr.f32.gmra.mrb[0].mxu0 %v304
        %v501 = vpop.f32.mrb[0].mxu0
        %v502 = vadd.f32 0.0, %v501
        %v503 = vpop.f32.mrb[0].mxu0
        %504 = vmatprep.mubr.f32.mxu0 0.0
        %505 = vmatmul.mubr.f32.gmra.mrb[0].mxu0 %v307
        %v506 = vpop.f32.mrb[0].mxu0
        %v507 = vadd.f32 0.0, %v506
        %v508 = vpop.f32.mrb[0].mxu0
        %509 = vmatprep.mubr.f32.mxu0 0.0
        %510 = vmatmul.mubr.f32.gmra.mrb[0].mxu0 %v310
        %v511 = vpop.f32.mrb[0].mxu0
        %v512 = vadd.f32 0.0, %v511
        %v513 = vpop.f32.mrb[0].mxu0
        %514 = vmatprep.mubr.f32.mxu0 0.0
        %515 = vmatmul.mubr.f32.gmra.mrb[0].mxu0 %v313
        %v516 = vpop.f32.mrb[0].mxu0
        %v517 = vadd.f32 0.0, %v516
        %v518 = vpop.f32.mrb[0].mxu0
        %519 = vmatprep.mubr.f32.mxu0 0.0
        %520 = vmatmul.mubr.f32.gmra.mrb[0].mxu0 %v316
        %v521 = vpop.f32.mrb[0].mxu0
        %v522 = vadd.f32 0.0, %v521
        %v523 = vpop.f32.mrb[0].mxu0
        %524 = vmatprep.mubr.f32.mxu0 0.0
        %525 = vmatmul.mubr.f32.gmra.mrb[0].mxu0 %v319
        %v526 = vpop.f32.mrb[0].mxu0
        %v527 = vadd.f32 0.0, %v526
        %v528 = vpop.f32.mrb[0].mxu0
        %529 = vmatprep.mubr.f32.mxu0 0.0
        %530 = vmatmul.mubr.f32.gmra.mrb[0].mxu0 %v322
        %v531 = vpop.f32.mrb[0].mxu0
        %v532 = vadd.f32 0.0, %v531
        %v533 = vpop.f32.mrb[0].mxu0
        %534 = vmatprep.mubr.f32.mxu0 0.0
        %535 = vmatmul.mubr.f32.gmra.mrb[0].mxu0 %v325
        %v536 = vpop.f32.mrb[0].mxu0
        %v537 = vadd.f32 0.0, %v536
        %v538 = vpop.f32.mrb[0].mxu0
        %539 = vmatprep.mubr.f32.mxu0 0.0
        %540 = vmatmul.mubr.f32.gmra.mrb[0].mxu0 %v328
        %v541 = vpop.f32.mrb[0].mxu0
        %v542 = vadd.f32 0.0, %v541
        %v543 = vpop.f32.mrb[0].mxu0
        %544 = vmatprep.mubr.f32.mxu0 0.0
        %545 = vmatmul.mubr.f32.gmra.mrb[0].mxu0 %v331
        %v546 = vpop.f32.mrb[0].mxu0
        %v547 = vadd.f32 0.0, %v546
        %v548 = vpop.f32.mrb[0].mxu0
        %549 = vmatprep.mubr.f32.mxu0 0.0
        %550 = vmatmul.mubr.f32.gmra.mrb[0].mxu0 %v334
        %v551 = vpop.f32.mrb[0].mxu0
        %v552 = vadd.f32 0.0, %v551
        %v553 = vpop.f32.mrb[0].mxu0
        %554 = vmatprep.mubr.f32.mxu0 0.0
        %555 = vmatmul.mubr.f32.gmra.mrb[0].mxu0 %v337
        %v556 = vpop.f32.mrb[0].mxu0
        %v557 = vadd.f32 0.0, %v556
        %v558 = vpop.f32.mrb[0].mxu0
        %559 = vmatprep.mubr.f32.mxu0 0.0
        %560 = vmatmul.mubr.f32.gmra.mrb[0].mxu0 %v340
        %v561 = vpop.f32.mrb[0].mxu0
        %v562 = vadd.f32 0.0, %v561
        %v563 = vpop.f32.mrb[0].mxu0
        %564 = vmatprep.mubr.f32.mxu0 0.0
        %565 = vmatmul.mubr.f32.gmra.mrb[0].mxu0 %v343
        %v566 = vpop.f32.mrb[0].mxu0
        %v567 = vadd.f32 0.0, %v566
        %v568 = vpop.f32.mrb[0].mxu0
        %569 = vmatprep.mubr.f32.mxu0 0.0
        %570 = vmatmul.mubr.f32.gmra.mrb[0].mxu0 %v346
        %v571 = vpop.f32.mrb[0].mxu0
        %v572 = vadd.f32 0.0, %v571
        %v573 = vpop.f32.mrb[0].mxu0
        %574 = vmatprep.mubr.f32.mxu0 0.0
        %575 = vmatmul.mubr.f32.gmra.mrb[0].mxu0 %v349
        %v576 = vpop.f32.mrb[0].mxu0
        %v577 = vadd.f32 0.0, %v576
        %v578 = vpop.f32.mrb[0].mxu0
        %579 = vdwg.mxu0
        %v580 = vadd.f32 %v219, %v422
        %v581 = vadd.f32 %v219, %v427
        %v582 = vadd.f32 %v219, %v432
        %v583 = vadd.f32 %v219, %v437
        %v584 = vadd.f32 %v219, %v442
        %v585 = vadd.f32 %v219, %v447
        %v586 = vadd.f32 %v219, %v452
        %v587 = vadd.f32 %v219, %v457
        %v588 = vadd.f32 %v219, %v462
        %v589 = vadd.f32 %v219, %v467
        %v590 = vadd.f32 %v219, %v472
        %v591 = vadd.f32 %v219, %v477
        %v592 = vadd.f32 %v219, %v482
        %v593 = vadd.f32 %v219, %v487
        %v594 = vadd.f32 %v219, %v492
        %v595 = vadd.f32 %v219, %v497
        %v596 = vadd.f32 %v219, %v502
        %v597 = vadd.f32 %v219, %v507
        %v598 = vadd.f32 %v219, %v512
        %v599 = vadd.f32 %v219, %v517
        %v600 = vadd.f32 %v219, %v522
        %v601 = vadd.f32 %v219, %v527
        %v602 = vadd.f32 %v219, %v532
        %v603 = vadd.f32 %v219, %v537
        %v604 = vadd.f32 %v219, %v542
        %v605 = vadd.f32 %v219, %v547
        %v606 = vadd.f32 %v219, %v552
        %v607 = vadd.f32 %v219, %v557
        %v608 = vadd.f32 %v219, %v562
        %v609 = vadd.f32 %v219, %v567
        %v610 = vadd.f32 %v219, %v572
        %v611 = vadd.f32 %v219, %v577
        %v612 = vld [vmem:[%s206 + $0x1] sm:$0xff]
        %v613 = vld [vmem:[%s206 + $0x9] sm:$0xff]
        %v614 = vld [vmem:[%s206 + $0x19] sm:$0xff]
        %v615 = vld [vmem:[%s206 + $0x21] sm:$0xff]
        %v616 = vld [vmem:[%s206 + $0x31] sm:$0xff]
        %v617 = vld [vmem:[%s206 + $0x39] sm:$0xff]
        %v618 = vld [vmem:[%s206 + $0x49] sm:$0xff]
        %v619 = vld [vmem:[%s206 + $0x51] sm:$0xff]
        %v620 = vld [vmem:[%s206 + $0x61] sm:$0xff]
        %v621 = vld [vmem:[%s206 + $0x69] sm:$0xff]
        %v622 = vld [vmem:[%s206 + $0x79] sm:$0xff]
        %v623 = vld [vmem:[%s206 + $0x81] sm:$0xff]
        %v624 = vld [vmem:[%s206 + $0x91] sm:$0xff]
        %v625 = vld [vmem:[%s206 + $0x99] sm:$0xff]
        %v626 = vld [vmem:[%s206 + $0xa9] sm:$0xff]
        %v627 = vld [vmem:[%s206 + $0xb1] sm:$0xff]
        %v628 = vld [vmem:[%s206 + $0xc1] sm:$0xff]
        %v629 = vld [vmem:[%s206 + $0xc9] sm:$0xff]
        %v630 = vld [vmem:[%s206 + $0xd9] sm:$0xff]
        %v631 = vld [vmem:[%s206 + $0xe1] sm:$0xff]
        %v632 = vld [vmem:[%s206 + $0xf1] sm:$0xff]
        %v633 = vld [vmem:[%s206 + $0xf9] sm:$0xff]
        %v634 = vld [vmem:[%s206 + $0x109] sm:$0xff]
        %v635 = vld [vmem:[%s206 + $0x111] sm:$0xff]
        %v636 = vld [vmem:[%s206 + $0x121] sm:$0xff]
        %v637 = vld [vmem:[%s206 + $0x129] sm:$0xff]
        %v638 = vld [vmem:[%s206 + $0x139] sm:$0xff]
        %v639 = vld [vmem:[%s206 + $0x141] sm:$0xff]
        %v640 = vld [vmem:[%s206 + $0x151] sm:$0xff]
        %v641 = vld [vmem:[%s206 + $0x159] sm:$0xff]
        %v642 = vld [vmem:[%s206 + $0x169] sm:$0xff]
        %v643 = vld [vmem:[%s206 + $0x171] sm:$0xff]
        %s644 = scalar_lea.vmem %s210, 4
        %v645 = vld [vmem:[%s644] sm:$0xf]
        %v647 = vsel %vm254, %v612, 0
        %v650 = vsel %vm254, %v613, 0
        %v653 = vsel %vm254, %v614, 0
        %v656 = vsel %vm254, %v615, 0
        %v659 = vsel %vm254, %v616, 0
        %v662 = vsel %vm254, %v617, 0
        %v665 = vsel %vm254, %v618, 0
        %v668 = vsel %vm254, %v619, 0
        %v671 = vsel %vm254, %v620, 0
        %v674 = vsel %vm254, %v621, 0
        %v677 = vsel %vm254, %v622, 0
        %v680 = vsel %vm254, %v623, 0
        %v683 = vsel %vm254, %v624, 0
        %v686 = vsel %vm254, %v625, 0
        %v689 = vsel %vm254, %v626, 0
        %v692 = vsel %vm254, %v627, 0
        %v695 = vsel %vm254, %v628, 0
        %v698 = vsel %vm254, %v629, 0
        %v701 = vsel %vm254, %v630, 0
        %v704 = vsel %vm254, %v631, 0
        %v707 = vsel %vm254, %v632, 0
        %v710 = vsel %vm254, %v633, 0
        %v713 = vsel %vm254, %v634, 0
        %v716 = vsel %vm254, %v635, 0
        %v719 = vsel %vm254, %v636, 0
        %v722 = vsel %vm254, %v637, 0
        %v725 = vsel %vm254, %v638, 0
        %v728 = vsel %vm254, %v639, 0
        %v731 = vsel %vm254, %v640, 0
        %v734 = vsel %vm254, %v641, 0
        %v737 = vsel %vm254, %v642, 0
        %v740 = vsel %vm254, %v643, 0
        %v743 = vsel %vm351, %v645, 0
        %745 = vmatprep.subr.mxu0 0.0
        %746 = vmatpush1.msra.mxu0 %v743
        %747 = vmatprep.subr.mxu0 0.0
        %748 = vmatpush1.msra.mxu0 0.0
        %749 = vmatprep.subr.mxu0 0.0
        %750 = vmatpush1.msra.mxu0 0.0
        %751 = vmatprep.subr.mxu0 0.0
        %752 = vmatpush1.msra.mxu0 0.0
        %753 = vmatprep.subr.mxu0 0.0
        %754 = vmatpush1.msra.mxu0 0.0
        %755 = vmatprep.subr.mxu0 0.0
        %756 = vmatpush1.msra.mxu0 0.0
        %757 = vmatprep.subr.mxu0 0.0
        %758 = vmatpush1.msra.mxu0 0.0
        %759 = vmatprep.subr.mxu0 0.0
        %760 = vmatpush1.msra.mxu0 0.0
        %761 = vmatprep.subr.mxu0 0.0
        %762 = vmatpush1.msra.mxu0 0.0
        %763 = vmatprep.subr.mxu0 0.0
        %764 = vmatpush1.msra.mxu0 0.0
        %765 = vmatprep.subr.mxu0 0.0
        %766 = vmatpush1.msra.mxu0 0.0
        %767 = vmatprep.subr.mxu0 0.0
        %768 = vmatpush1.msra.mxu0 0.0
        %769 = vmatprep.subr.mxu0 0.0
        %770 = vmatpush1.msra.mxu0 0.0
        %771 = vmatprep.subr.mxu0 0.0
        %772 = vmatpush1.msra.mxu0 0.0
        %773 = vmatprep.subr.mxu0 0.0
        %774 = vmatpush1.msra.mxu0 0.0
        %775 = vmatprep.subr.mxu0 0.0
        %776 = vmatpush1.msra.mxu0 0.0
        %777 = vmatprep.subr.mxu0 0.0
        %778 = vmatpush1.msra.mxu0 0.0
        %779 = vmatprep.subr.mxu0 0.0
        %780 = vmatpush1.msra.mxu0 0.0
        %781 = vmatprep.subr.mxu0 0.0
        %782 = vmatpush1.msra.mxu0 0.0
        %783 = vmatprep.subr.mxu0 0.0
        %784 = vmatpush1.msra.mxu0 0.0
        %785 = vmatprep.subr.mxu0 0.0
        %786 = vmatpush1.msra.mxu0 0.0
        %787 = vmatprep.subr.mxu0 0.0
        %788 = vmatpush1.msra.mxu0 0.0
        %789 = vmatprep.subr.mxu0 0.0
        %790 = vmatpush1.msra.mxu0 0.0
        %791 = vmatprep.subr.mxu0 0.0
        %792 = vmatpush1.msra.mxu0 0.0
        %793 = vmatprep.subr.mxu0 0.0
        %794 = vmatpush1.msra.mxu0 0.0
        %795 = vmatprep.subr.mxu0 0.0
        %796 = vmatpush1.msra.mxu0 0.0
        %797 = vmatprep.subr.mxu0 0.0
        %798 = vmatpush1.msra.mxu0 0.0
        %799 = vmatprep.subr.mxu0 0.0
        %800 = vmatpush1.msra.mxu0 0.0
        %801 = vmatprep.subr.mxu0 0.0
        %802 = vmatpush1.msra.mxu0 0.0
        %803 = vmatprep.subr.mxu0 0.0
        %804 = vmatpush1.msra.mxu0 0.0
        %805 = vmatprep.subr.mxu0 0.0
        %806 = vmatpush1.msra.mxu0 0.0
        %807 = vmatprep.subr.mxu0 0.0
        %808 = vmatpush1.msra.mxu0 0.0
        %809 = vmatprep.mubr.f32.mxu0 0.0
        %810 = vmatmul.mubr.f32.gmra.mrb[0].mxu0 %v647
        %v811 = vpop.f32.mrb[0].mxu0
        %v812 = vadd.f32 0.0, %v811
        %v813 = vpop.f32.mrb[0].mxu0
        %814 = vmatprep.mubr.f32.mxu0 0.0
        %815 = vmatmul.mubr.f32.gmra.mrb[0].mxu0 %v650
        %v816 = vpop.f32.mrb[0].mxu0
        %v817 = vadd.f32 0.0, %v816
        %v818 = vpop.f32.mrb[0].mxu0
        %819 = vmatprep.mubr.f32.mxu0 0.0
        %820 = vmatmul.mubr.f32.gmra.mrb[0].mxu0 %v653
        %v821 = vpop.f32.mrb[0].mxu0
        %v822 = vadd.f32 0.0, %v821
        %v823 = vpop.f32.mrb[0].mxu0
        %824 = vmatprep.mubr.f32.mxu0 0.0
        %825 = vmatmul.mubr.f32.gmra.mrb[0].mxu0 %v656
        %v826 = vpop.f32.mrb[0].mxu0
        %v827 = vadd.f32 0.0, %v826
        %v828 = vpop.f32.mrb[0].mxu0
        %829 = vmatprep.mubr.f32.mxu0 0.0
        %830 = vmatmul.mubr.f32.gmra.mrb[0].mxu0 %v659
        %v831 = vpop.f32.mrb[0].mxu0
        %v832 = vadd.f32 0.0, %v831
        %v833 = vpop.f32.mrb[0].mxu0
        %834 = vmatprep.mubr.f32.mxu0 0.0
        %835 = vmatmul.mubr.f32.gmra.mrb[0].mxu0 %v662
        %v836 = vpop.f32.mrb[0].mxu0
        %v837 = vadd.f32 0.0, %v836
        %v838 = vpop.f32.mrb[0].mxu0
        %839 = vmatprep.mubr.f32.mxu0 0.0
        %840 = vmatmul.mubr.f32.gmra.mrb[0].mxu0 %v665
        %v841 = vpop.f32.mrb[0].mxu0
        %v842 = vadd.f32 0.0, %v841
        %v843 = vpop.f32.mrb[0].mxu0
        %844 = vmatprep.mubr.f32.mxu0 0.0
        %845 = vmatmul.mubr.f32.gmra.mrb[0].mxu0 %v668
        %v846 = vpop.f32.mrb[0].mxu0
        %v847 = vadd.f32 0.0, %v846
        %v848 = vpop.f32.mrb[0].mxu0
        %849 = vmatprep.mubr.f32.mxu0 0.0
        %850 = vmatmul.mubr.f32.gmra.mrb[0].mxu0 %v671
        %v851 = vpop.f32.mrb[0].mxu0
        %v852 = vadd.f32 0.0, %v851
        %v853 = vpop.f32.mrb[0].mxu0
        %854 = vmatprep.mubr.f32.mxu0 0.0
        %855 = vmatmul.mubr.f32.gmra.mrb[0].mxu0 %v674
        %v856 = vpop.f32.mrb[0].mxu0
        %v857 = vadd.f32 0.0, %v856
        %v858 = vpop.f32.mrb[0].mxu0
        %859 = vmatprep.mubr.f32.mxu0 0.0
        %860 = vmatmul.mubr.f32.gmra.mrb[0].mxu0 %v677
        %v861 = vpop.f32.mrb[0].mxu0
        %v862 = vadd.f32 0.0, %v861
        %v863 = vpop.f32.mrb[0].mxu0
        %864 = vmatprep.mubr.f32.mxu0 0.0
        %865 = vmatmul.mubr.f32.gmra.mrb[0].mxu0 %v680
        %v866 = vpop.f32.mrb[0].mxu0
        %v867 = vadd.f32 0.0, %v866
        %v868 = vpop.f32.mrb[0].mxu0
        %869 = vmatprep.mubr.f32.mxu0 0.0
        %870 = vmatmul.mubr.f32.gmra.mrb[0].mxu0 %v683
        %v871 = vpop.f32.mrb[0].mxu0
        %v872 = vadd.f32 0.0, %v871
        %v873 = vpop.f32.mrb[0].mxu0
        %874 = vmatprep.mubr.f32.mxu0 0.0
        %875 = vmatmul.mubr.f32.gmra.mrb[0].mxu0 %v686
        %v876 = vpop.f32.mrb[0].mxu0
        %v877 = vadd.f32 0.0, %v876
        %v878 = vpop.f32.mrb[0].mxu0
        %879 = vmatprep.mubr.f32.mxu0 0.0
        %880 = vmatmul.mubr.f32.gmra.mrb[0].mxu0 %v689
        %v881 = vpop.f32.mrb[0].mxu0
        %v882 = vadd.f32 0.0, %v881
        %v883 = vpop.f32.mrb[0].mxu0
        %884 = vmatprep.mubr.f32.mxu0 0.0
        %885 = vmatmul.mubr.f32.gmra.mrb[0].mxu0 %v692
        %v886 = vpop.f32.mrb[0].mxu0
        %v887 = vadd.f32 0.0, %v886
        %v888 = vpop.f32.mrb[0].mxu0
        %889 = vmatprep.mubr.f32.mxu0 0.0
        %890 = vmatmul.mubr.f32.gmra.mrb[0].mxu0 %v695
        %v891 = vpop.f32.mrb[0].mxu0
        %v892 = vadd.f32 0.0, %v891
        %v893 = vpop.f32.mrb[0].mxu0
        %894 = vmatprep.mubr.f32.mxu0 0.0
        %895 = vmatmul.mubr.f32.gmra.mrb[0].mxu0 %v698
        %v896 = vpop.f32.mrb[0].mxu0
        %v897 = vadd.f32 0.0, %v896
        %v898 = vpop.f32.mrb[0].mxu0
        %899 = vmatprep.mubr.f32.mxu0 0.0
        %900 = vmatmul.mubr.f32.gmra.mrb[0].mxu0 %v701
        %v901 = vpop.f32.mrb[0].mxu0
        %v902 = vadd.f32 0.0, %v901
        %v903 = vpop.f32.mrb[0].mxu0
        %904 = vmatprep.mubr.f32.mxu0 0.0
        %905 = vmatmul.mubr.f32.gmra.mrb[0].mxu0 %v704
        %v906 = vpop.f32.mrb[0].mxu0
        %v907 = vadd.f32 0.0, %v906
        %v908 = vpop.f32.mrb[0].mxu0
        %909 = vmatprep.mubr.f32.mxu0 0.0
        %910 = vmatmul.mubr.f32.gmra.mrb[0].mxu0 %v707
        %v911 = vpop.f32.mrb[0].mxu0
        %v912 = vadd.f32 0.0, %v911
        %v913 = vpop.f32.mrb[0].mxu0
        %914 = vmatprep.mubr.f32.mxu0 0.0
        %915 = vmatmul.mubr.f32.gmra.mrb[0].mxu0 %v710
        %v916 = vpop.f32.mrb[0].mxu0
        %v917 = vadd.f32 0.0, %v916
        %v918 = vpop.f32.mrb[0].mxu0
        %919 = vmatprep.mubr.f32.mxu0 0.0
        %920 = vmatmul.mubr.f32.gmra.mrb[0].mxu0 %v713
        %v921 = vpop.f32.mrb[0].mxu0
        %v922 = vadd.f32 0.0, %v921
        %v923 = vpop.f32.mrb[0].mxu0
        %924 = vmatprep.mubr.f32.mxu0 0.0
        %925 = vmatmul.mubr.f32.gmra.mrb[0].mxu0 %v716
        %v926 = vpop.f32.mrb[0].mxu0
        %v927 = vadd.f32 0.0, %v926
        %v928 = vpop.f32.mrb[0].mxu0
        %929 = vmatprep.mubr.f32.mxu0 0.0
        %930 = vmatmul.mubr.f32.gmra.mrb[0].mxu0 %v719
        %v931 = vpop.f32.mrb[0].mxu0
        %v932 = vadd.f32 0.0, %v931
        %v933 = vpop.f32.mrb[0].mxu0
        %934 = vmatprep.mubr.f32.mxu0 0.0
        %935 = vmatmul.mubr.f32.gmra.mrb[0].mxu0 %v722
        %v936 = vpop.f32.mrb[0].mxu0
        %v937 = vadd.f32 0.0, %v936
        %v938 = vpop.f32.mrb[0].mxu0
        %939 = vmatprep.mubr.f32.mxu0 0.0
        %940 = vmatmul.mubr.f32.gmra.mrb[0].mxu0 %v725
        %v941 = vpop.f32.mrb[0].mxu0
        %v942 = vadd.f32 0.0, %v941
        %v943 = vpop.f32.mrb[0].mxu0
        %944 = vmatprep.mubr.f32.mxu0 0.0
        %945 = vmatmul.mubr.f32.gmra.mrb[0].mxu0 %v728
        %v946 = vpop.f32.mrb[0].mxu0
        %v947 = vadd.f32 0.0, %v946
        %v948 = vpop.f32.mrb[0].mxu0
        %949 = vmatprep.mubr.f32.mxu0 0.0
        %950 = vmatmul.mubr.f32.gmra.mrb[0].mxu0 %v731
        %v951 = vpop.f32.mrb[0].mxu0
        %v952 = vadd.f32 0.0, %v951
        %v953 = vpop.f32.mrb[0].mxu0
        %954 = vmatprep.mubr.f32.mxu0 0.0
        %955 = vmatmul.mubr.f32.gmra.mrb[0].mxu0 %v734
        %v956 = vpop.f32.mrb[0].mxu0
        %v957 = vadd.f32 0.0, %v956
        %v958 = vpop.f32.mrb[0].mxu0
        %959 = vmatprep.mubr.f32.mxu0 0.0
        %960 = vmatmul.mubr.f32.gmra.mrb[0].mxu0 %v737
        %v961 = vpop.f32.mrb[0].mxu0
        %v962 = vadd.f32 0.0, %v961
        %v963 = vpop.f32.mrb[0].mxu0
        %964 = vmatprep.mubr.f32.mxu0 0.0
        %965 = vmatmul.mubr.f32.gmra.mrb[0].mxu0 %v740
        %v966 = vpop.f32.mrb[0].mxu0
        %v967 = vadd.f32 0.0, %v966
        %v968 = vpop.f32.mrb[0].mxu0
        %969 = vdwg.mxu0
        %v970 = vadd.f32 %v580, %v812
        %v971 = vadd.f32 %v581, %v817
        %v972 = vadd.f32 %v582, %v822
        %v973 = vadd.f32 %v583, %v827
        %v974 = vadd.f32 %v584, %v832
        %v975 = vadd.f32 %v585, %v837
        %v976 = vadd.f32 %v586, %v842
        %v977 = vadd.f32 %v587, %v847
        %v978 = vadd.f32 %v588, %v852
        %v979 = vadd.f32 %v589, %v857
        %v980 = vadd.f32 %v590, %v862
        %v981 = vadd.f32 %v591, %v867
        %v982 = vadd.f32 %v592, %v872
        %v983 = vadd.f32 %v593, %v877
        %v984 = vadd.f32 %v594, %v882
        %v985 = vadd.f32 %v595, %v887
        %v986 = vadd.f32 %v596, %v892
        %v987 = vadd.f32 %v597, %v897
        %v988 = vadd.f32 %v598, %v902
        %v989 = vadd.f32 %v599, %v907
        %v990 = vadd.f32 %v600, %v912
        %v991 = vadd.f32 %v601, %v917
        %v992 = vadd.f32 %v602, %v922
        %v993 = vadd.f32 %v603, %v927
        %v994 = vadd.f32 %v604, %v932
        %v995 = vadd.f32 %v605, %v937
        %v996 = vadd.f32 %v606, %v942
        %v997 = vadd.f32 %v607, %v947
        %v998 = vadd.f32 %v608, %v952
        %v999 = vadd.f32 %v609, %v957
        %v1000 = vadd.f32 %v610, %v962
        %v1001 = vadd.f32 %v611, %v967
        %v1002 = vld [vmem:[%s206 + $0x2] sm:$0xff]
        %v1003 = vld [vmem:[%s206 + $0xa] sm:$0xff]
        %v1004 = vld [vmem:[%s206 + $0x1a] sm:$0xff]
        %v1005 = vld [vmem:[%s206 + $0x22] sm:$0xff]
        %v1006 = vld [vmem:[%s206 + $0x32] sm:$0xff]
        %v1007 = vld [vmem:[%s206 + $0x3a] sm:$0xff]
        %v1008 = vld [vmem:[%s206 + $0x4a] sm:$0xff]
        %v1009 = vld [vmem:[%s206 + $0x52] sm:$0xff]
        %v1010 = vld [vmem:[%s206 + $0x62] sm:$0xff]
        %v1011 = vld [vmem:[%s206 + $0x6a] sm:$0xff]
        %v1012 = vld [vmem:[%s206 + $0x7a] sm:$0xff]
        %v1013 = vld [vmem:[%s206 + $0x82] sm:$0xff]
        %v1014 = vld [vmem:[%s206 + $0x92] sm:$0xff]
        %v1015 = vld [vmem:[%s206 + $0x9a] sm:$0xff]
        %v1016 = vld [vmem:[%s206 + $0xaa] sm:$0xff]
        %v1017 = vld [vmem:[%s206 + $0xb2] sm:$0xff]
        %v1018 = vld [vmem:[%s206 + $0xc2] sm:$0xff]
        %v1019 = vld [vmem:[%s206 + $0xca] sm:$0xff]
        %v1020 = vld [vmem:[%s206 + $0xda] sm:$0xff]
        %v1021 = vld [vmem:[%s206 + $0xe2] sm:$0xff]
        %v1022 = vld [vmem:[%s206 + $0xf2] sm:$0xff]
        %v1023 = vld [vmem:[%s206 + $0xfa] sm:$0xff]
        %v1024 = vld [vmem:[%s206 + $0x10a] sm:$0xff]
        %v1025 = vld [vmem:[%s206 + $0x112] sm:$0xff]
        %v1026 = vld [vmem:[%s206 + $0x122] sm:$0xff]
        %v1027 = vld [vmem:[%s206 + $0x12a] sm:$0xff]
        %v1028 = vld [vmem:[%s206 + $0x13a] sm:$0xff]
        %v1029 = vld [vmem:[%s206 + $0x142] sm:$0xff]
        %v1030 = vld [vmem:[%s206 + $0x152] sm:$0xff]
        %v1031 = vld [vmem:[%s206 + $0x15a] sm:$0xff]
        %v1032 = vld [vmem:[%s206 + $0x16a] sm:$0xff]
        %v1033 = vld [vmem:[%s206 + $0x172] sm:$0xff]
        %s1034 = scalar_lea.vmem %s210, 8
        %v1035 = vld [vmem:[%s1034] sm:$0xf]
        %v1037 = vsel %vm254, %v1002, 0
        %v1040 = vsel %vm254, %v1003, 0
        %v1043 = vsel %vm254, %v1004, 0
        %v1046 = vsel %vm254, %v1005, 0
        %v1049 = vsel %vm254, %v1006, 0
        %v1052 = vsel %vm254, %v1007, 0
        %v1055 = vsel %vm254, %v1008, 0
        %v1058 = vsel %vm254, %v1009, 0
        %v1061 = vsel %vm254, %v1010, 0
        %v1064 = vsel %vm254, %v1011, 0
        %v1067 = vsel %vm254, %v1012, 0
        %v1070 = vsel %vm254, %v1013, 0
        %v1073 = vsel %vm254, %v1014, 0
        %v1076 = vsel %vm254, %v1015, 0
        %v1079 = vsel %vm254, %v1016, 0
        %v1082 = vsel %vm254, %v1017, 0
        %v1085 = vsel %vm254, %v1018, 0
        %v1088 = vsel %vm254, %v1019, 0
        %v1091 = vsel %vm254, %v1020, 0
        %v1094 = vsel %vm254, %v1021, 0
        %v1097 = vsel %vm254, %v1022, 0
        %v1100 = vsel %vm254, %v1023, 0
        %v1103 = vsel %vm254, %v1024, 0
        %v1106 = vsel %vm254, %v1025, 0
        %v1109 = vsel %vm254, %v1026, 0
        %v1112 = vsel %vm254, %v1027, 0
        %v1115 = vsel %vm254, %v1028, 0
        %v1118 = vsel %vm254, %v1029, 0
        %v1121 = vsel %vm254, %v1030, 0
        %v1124 = vsel %vm254, %v1031, 0
        %v1127 = vsel %vm254, %v1032, 0
        %v1130 = vsel %vm254, %v1033, 0
        %v1133 = vsel %vm351, %v1035, 0
        %1135 = vmatprep.subr.mxu0 0.0
        %1136 = vmatpush1.msra.mxu0 %v1133
        %1137 = vmatprep.subr.mxu0 0.0
        %1138 = vmatpush1.msra.mxu0 0.0
        %1139 = vmatprep.subr.mxu0 0.0
        %1140 = vmatpush1.msra.mxu0 0.0
        %1141 = vmatprep.subr.mxu0 0.0
        %1142 = vmatpush1.msra.mxu0 0.0
        %1143 = vmatprep.subr.mxu0 0.0
        %1144 = vmatpush1.msra.mxu0 0.0
        %1145 = vmatprep.subr.mxu0 0.0
        %1146 = vmatpush1.msra.mxu0 0.0
        %1147 = vmatprep.subr.mxu0 0.0
        %1148 = vmatpush1.msra.mxu0 0.0
        %1149 = vmatprep.subr.mxu0 0.0
        %1150 = vmatpush1.msra.mxu0 0.0
        %1151 = vmatprep.subr.mxu0 0.0
        %1152 = vmatpush1.msra.mxu0 0.0
        %1153 = vmatprep.subr.mxu0 0.0
        %1154 = vmatpush1.msra.mxu0 0.0
        %1155 = vmatprep.subr.mxu0 0.0
        %1156 = vmatpush1.msra.mxu0 0.0
        %1157 = vmatprep.subr.mxu0 0.0
        %1158 = vmatpush1.msra.mxu0 0.0
        %1159 = vmatprep.subr.mxu0 0.0
        %1160 = vmatpush1.msra.mxu0 0.0
        %1161 = vmatprep.subr.mxu0 0.0
        %1162 = vmatpush1.msra.mxu0 0.0
        %1163 = vmatprep.subr.mxu0 0.0
        %1164 = vmatpush1.msra.mxu0 0.0
        %1165 = vmatprep.subr.mxu0 0.0
        %1166 = vmatpush1.msra.mxu0 0.0
        %1167 = vmatprep.subr.mxu0 0.0
        %1168 = vmatpush1.msra.mxu0 0.0
        %1169 = vmatprep.subr.mxu0 0.0
        %1170 = vmatpush1.msra.mxu0 0.0
        %1171 = vmatprep.subr.mxu0 0.0
        %1172 = vmatpush1.msra.mxu0 0.0
        %1173 = vmatprep.subr.mxu0 0.0
        %1174 = vmatpush1.msra.mxu0 0.0
        %1175 = vmatprep.subr.mxu0 0.0
        %1176 = vmatpush1.msra.mxu0 0.0
        %1177 = vmatprep.subr.mxu0 0.0
        %1178 = vmatpush1.msra.mxu0 0.0
        %1179 = vmatprep.subr.mxu0 0.0
        %1180 = vmatpush1.msra.mxu0 0.0
        %1181 = vmatprep.subr.mxu0 0.0
        %1182 = vmatpush1.msra.mxu0 0.0
        %1183 = vmatprep.subr.mxu0 0.0
        %1184 = vmatpush1.msra.mxu0 0.0
        %1185 = vmatprep.subr.mxu0 0.0
        %1186 = vmatpush1.msra.mxu0 0.0
        %1187 = vmatprep.subr.mxu0 0.0
        %1188 = vmatpush1.msra.mxu0 0.0
        %1189 = vmatprep.subr.mxu0 0.0
        %1190 = vmatpush1.msra.mxu0 0.0
        %1191 = vmatprep.subr.mxu0 0.0
        %1192 = vmatpush1.msra.mxu0 0.0
        %1193 = vmatprep.subr.mxu0 0.0
        %1194 = vmatpush1.msra.mxu0 0.0
        %1195 = vmatprep.subr.mxu0 0.0
        %1196 = vmatpush1.msra.mxu0 0.0
        %1197 = vmatprep.subr.mxu0 0.0
        %1198 = vmatpush1.msra.mxu0 0.0
        %1199 = vmatprep.mubr.f32.mxu0 0.0
        %1200 = vmatmul.mubr.f32.gmra.mrb[0].mxu0 %v1037
        %v1201 = vpop.f32.mrb[0].mxu0
        %v1202 = vadd.f32 0.0, %v1201
        %v1203 = vpop.f32.mrb[0].mxu0
        %1204 = vmatprep.mubr.f32.mxu0 0.0
        %1205 = vmatmul.mubr.f32.gmra.mrb[0].mxu0 %v1040
        %v1206 = vpop.f32.mrb[0].mxu0
        %v1207 = vadd.f32 0.0, %v1206
        %v1208 = vpop.f32.mrb[0].mxu0
        %1209 = vmatprep.mubr.f32.mxu0 0.0
        %1210 = vmatmul.mubr.f32.gmra.mrb[0].mxu0 %v1043
        %v1211 = vpop.f32.mrb[0].mxu0
        %v1212 = vadd.f32 0.0, %v1211
        %v1213 = vpop.f32.mrb[0].mxu0
        %1214 = vmatprep.mubr.f32.mxu0 0.0
        %1215 = vmatmul.mubr.f32.gmra.mrb[0].mxu0 %v1046
        %v1216 = vpop.f32.mrb[0].mxu0
        %v1217 = vadd.f32 0.0, %v1216
        %v1218 = vpop.f32.mrb[0].mxu0
        %1219 = vmatprep.mubr.f32.mxu0 0.0
        %1220 = vmatmul.mubr.f32.gmra.mrb[0].mxu0 %v1049
        %v1221 = vpop.f32.mrb[0].mxu0
        %v1222 = vadd.f32 0.0, %v1221
        %v1223 = vpop.f32.mrb[0].mxu0
        %1224 = vmatprep.mubr.f32.mxu0 0.0
        %1225 = vmatmul.mubr.f32.gmra.mrb[0].mxu0 %v1052
        %v1226 = vpop.f32.mrb[0].mxu0
        %v1227 = vadd.f32 0.0, %v1226
        %v1228 = vpop.f32.mrb[0].mxu0
        %1229 = vmatprep.mubr.f32.mxu0 0.0
        %1230 = vmatmul.mubr.f32.gmra.mrb[0].mxu0 %v1055
        %v1231 = vpop.f32.mrb[0].mxu0
        %v1232 = vadd.f32 0.0, %v1231
        %v1233 = vpop.f32.mrb[0].mxu0
        %1234 = vmatprep.mubr.f32.mxu0 0.0
        %1235 = vmatmul.mubr.f32.gmra.mrb[0].mxu0 %v1058
        %v1236 = vpop.f32.mrb[0].mxu0
        %v1237 = vadd.f32 0.0, %v1236
        %v1238 = vpop.f32.mrb[0].mxu0
        %1239 = vmatprep.mubr.f32.mxu0 0.0
        %1240 = vmatmul.mubr.f32.gmra.mrb[0].mxu0 %v1061
        %v1241 = vpop.f32.mrb[0].mxu0
        %v1242 = vadd.f32 0.0, %v1241
        %v1243 = vpop.f32.mrb[0].mxu0
        %1244 = vmatprep.mubr.f32.mxu0 0.0
        %1245 = vmatmul.mubr.f32.gmra.mrb[0].mxu0 %v1064
        %v1246 = vpop.f32.mrb[0].mxu0
        %v1247 = vadd.f32 0.0, %v1246
        %v1248 = vpop.f32.mrb[0].mxu0
        %1249 = vmatprep.mubr.f32.mxu0 0.0
        %1250 = vmatmul.mubr.f32.gmra.mrb[0].mxu0 %v1067
        %v1251 = vpop.f32.mrb[0].mxu0
        %v1252 = vadd.f32 0.0, %v1251
        %v1253 = vpop.f32.mrb[0].mxu0
        %1254 = vmatprep.mubr.f32.mxu0 0.0
        %1255 = vmatmul.mubr.f32.gmra.mrb[0].mxu0 %v1070
        %v1256 = vpop.f32.mrb[0].mxu0
        %v1257 = vadd.f32 0.0, %v1256
        %v1258 = vpop.f32.mrb[0].mxu0
        %1259 = vmatprep.mubr.f32.mxu0 0.0
        %1260 = vmatmul.mubr.f32.gmra.mrb[0].mxu0 %v1073
        %v1261 = vpop.f32.mrb[0].mxu0
        %v1262 = vadd.f32 0.0, %v1261
        %v1263 = vpop.f32.mrb[0].mxu0
        %1264 = vmatprep.mubr.f32.mxu0 0.0
        %1265 = vmatmul.mubr.f32.gmra.mrb[0].mxu0 %v1076
        %v1266 = vpop.f32.mrb[0].mxu0
        %v1267 = vadd.f32 0.0, %v1266
        %v1268 = vpop.f32.mrb[0].mxu0
        %1269 = vmatprep.mubr.f32.mxu0 0.0
        %1270 = vmatmul.mubr.f32.gmra.mrb[0].mxu0 %v1079
        %v1271 = vpop.f32.mrb[0].mxu0
        %v1272 = vadd.f32 0.0, %v1271
        %v1273 = vpop.f32.mrb[0].mxu0
        %1274 = vmatprep.mubr.f32.mxu0 0.0
        %1275 = vmatmul.mubr.f32.gmra.mrb[0].mxu0 %v1082
        %v1276 = vpop.f32.mrb[0].mxu0
        %v1277 = vadd.f32 0.0, %v1276
        %v1278 = vpop.f32.mrb[0].mxu0
        %1279 = vmatprep.mubr.f32.mxu0 0.0
        %1280 = vmatmul.mubr.f32.gmra.mrb[0].mxu0 %v1085
        %v1281 = vpop.f32.mrb[0].mxu0
        %v1282 = vadd.f32 0.0, %v1281
        %v1283 = vpop.f32.mrb[0].mxu0
        %1284 = vmatprep.mubr.f32.mxu0 0.0
        %1285 = vmatmul.mubr.f32.gmra.mrb[0].mxu0 %v1088
        %v1286 = vpop.f32.mrb[0].mxu0
        %v1287 = vadd.f32 0.0, %v1286
        %v1288 = vpop.f32.mrb[0].mxu0
        %1289 = vmatprep.mubr.f32.mxu0 0.0
        %1290 = vmatmul.mubr.f32.gmra.mrb[0].mxu0 %v1091
        %v1291 = vpop.f32.mrb[0].mxu0
        %v1292 = vadd.f32 0.0, %v1291
        %v1293 = vpop.f32.mrb[0].mxu0
        %1294 = vmatprep.mubr.f32.mxu0 0.0
        %1295 = vmatmul.mubr.f32.gmra.mrb[0].mxu0 %v1094
        %v1296 = vpop.f32.mrb[0].mxu0
        %v1297 = vadd.f32 0.0, %v1296
        %v1298 = vpop.f32.mrb[0].mxu0
        %1299 = vmatprep.mubr.f32.mxu0 0.0
        %1300 = vmatmul.mubr.f32.gmra.mrb[0].mxu0 %v1097
        %v1301 = vpop.f32.mrb[0].mxu0
        %v1302 = vadd.f32 0.0, %v1301
        %v1303 = vpop.f32.mrb[0].mxu0
        %1304 = vmatprep.mubr.f32.mxu0 0.0
        %1305 = vmatmul.mubr.f32.gmra.mrb[0].mxu0 %v1100
        %v1306 = vpop.f32.mrb[0].mxu0
        %v1307 = vadd.f32 0.0, %v1306
        %v1308 = vpop.f32.mrb[0].mxu0
        %1309 = vmatprep.mubr.f32.mxu0 0.0
        %1310 = vmatmul.mubr.f32.gmra.mrb[0].mxu0 %v1103
        %v1311 = vpop.f32.mrb[0].mxu0
        %v1312 = vadd.f32 0.0, %v1311
        %v1313 = vpop.f32.mrb[0].mxu0
        %1314 = vmatprep.mubr.f32.mxu0 0.0
        %1315 = vmatmul.mubr.f32.gmra.mrb[0].mxu0 %v1106
        %v1316 = vpop.f32.mrb[0].mxu0
        %v1317 = vadd.f32 0.0, %v1316
        %v1318 = vpop.f32.mrb[0].mxu0
        %1319 = vmatprep.mubr.f32.mxu0 0.0
        %1320 = vmatmul.mubr.f32.gmra.mrb[0].mxu0 %v1109
        %v1321 = vpop.f32.mrb[0].mxu0
        %v1322 = vadd.f32 0.0, %v1321
        %v1323 = vpop.f32.mrb[0].mxu0
        %1324 = vmatprep.mubr.f32.mxu0 0.0
        %1325 = vmatmul.mubr.f32.gmra.mrb[0].mxu0 %v1112
        %v1326 = vpop.f32.mrb[0].mxu0
        %v1327 = vadd.f32 0.0, %v1326
        %v1328 = vpop.f32.mrb[0].mxu0
        %1329 = vmatprep.mubr.f32.mxu0 0.0
        %1330 = vmatmul.mubr.f32.gmra.mrb[0].mxu0 %v1115
        %v1331 = vpop.f32.mrb[0].mxu0
        %v1332 = vadd.f32 0.0, %v1331
        %v1333 = vpop.f32.mrb[0].mxu0
        %1334 = vmatprep.mubr.f32.mxu0 0.0
        %1335 = vmatmul.mubr.f32.gmra.mrb[0].mxu0 %v1118
        %v1336 = vpop.f32.mrb[0].mxu0
        %v1337 = vadd.f32 0.0, %v1336
        %v1338 = vpop.f32.mrb[0].mxu0
        %1339 = vmatprep.mubr.f32.mxu0 0.0
        %1340 = vmatmul.mubr.f32.gmra.mrb[0].mxu0 %v1121
        %v1341 = vpop.f32.mrb[0].mxu0
        %v1342 = vadd.f32 0.0, %v1341
        %v1343 = vpop.f32.mrb[0].mxu0
        %1344 = vmatprep.mubr.f32.mxu0 0.0
        %1345 = vmatmul.mubr.f32.gmra.mrb[0].mxu0 %v1124
        %v1346 = vpop.f32.mrb[0].mxu0
        %v1347 = vadd.f32 0.0, %v1346
        %v1348 = vpop.f32.mrb[0].mxu0
        %1349 = vmatprep.mubr.f32.mxu0 0.0
        %1350 = vmatmul.mubr.f32.gmra.mrb[0].mxu0 %v1127
        %v1351 = vpop.f32.mrb[0].mxu0
        %v1352 = vadd.f32 0.0, %v1351
        %v1353 = vpop.f32.mrb[0].mxu0
        %1354 = vmatprep.mubr.f32.mxu0 0.0
        %1355 = vmatmul.mubr.f32.gmra.mrb[0].mxu0 %v1130
        %v1356 = vpop.f32.mrb[0].mxu0
        %v1357 = vadd.f32 0.0, %v1356
        %v1358 = vpop.f32.mrb[0].mxu0
        %1359 = vdwg.mxu0
        %v1360 = vadd.f32 %v970, %v1202
        %v1361 = vadd.f32 %v971, %v1207
        %v1362 = vadd.f32 %v972, %v1212
        %v1363 = vadd.f32 %v973, %v1217
        %v1364 = vadd.f32 %v974, %v1222
        %v1365 = vadd.f32 %v975, %v1227
        %v1366 = vadd.f32 %v976, %v1232
        %v1367 = vadd.f32 %v977, %v1237
        %v1368 = vadd.f32 %v978, %v1242
        %v1369 = vadd.f32 %v979, %v1247
        %v1370 = vadd.f32 %v980, %v1252
        %v1371 = vadd.f32 %v981, %v1257
        %v1372 = vadd.f32 %v982, %v1262
        %v1373 = vadd.f32 %v983, %v1267
        %v1374 = vadd.f32 %v984, %v1272
        %v1375 = vadd.f32 %v985, %v1277
        %v1376 = vadd.f32 %v986, %v1282
        %v1377 = vadd.f32 %v987, %v1287
        %v1378 = vadd.f32 %v988, %v1292
        %v1379 = vadd.f32 %v989, %v1297
        %v1380 = vadd.f32 %v990, %v1302
        %v1381 = vadd.f32 %v991, %v1307
        %v1382 = vadd.f32 %v992, %v1312
        %v1383 = vadd.f32 %v993, %v1317
        %v1384 = vadd.f32 %v994, %v1322
        %v1385 = vadd.f32 %v995, %v1327
        %v1386 = vadd.f32 %v996, %v1332
        %v1387 = vadd.f32 %v997, %v1337
        %v1388 = vadd.f32 %v998, %v1342
        %v1389 = vadd.f32 %v999, %v1347
        %v1390 = vadd.f32 %v1000, %v1352
        %v1391 = vadd.f32 %v1001, %v1357
        %s1392 = scalar_lea.vmem %s206, 24
        %v1393 = vld [vmem:[%s1392] sm:$0xff]
        %v1394 = vld [vmem:[%s1392 + $0x8] sm:$0xff]
        %v1395 = vld [vmem:[%s1392 + $0x18] sm:$0xff]
        %v1396 = vld [vmem:[%s1392 + $0x20] sm:$0xff]
        %v1397 = vld [vmem:[%s1392 + $0x30] sm:$0xff]
        %v1398 = vld [vmem:[%s1392 + $0x38] sm:$0xff]
        %v1399 = vld [vmem:[%s1392 + $0x48] sm:$0xff]
        %v1400 = vld [vmem:[%s1392 + $0x50] sm:$0xff]
        %v1401 = vld [vmem:[%s1392 + $0x60] sm:$0xff]
        %v1402 = vld [vmem:[%s1392 + $0x68] sm:$0xff]
        %v1403 = vld [vmem:[%s1392 + $0x78] sm:$0xff]
        %v1404 = vld [vmem:[%s1392 + $0x80] sm:$0xff]
        %v1405 = vld [vmem:[%s1392 + $0x90] sm:$0xff]
        %v1406 = vld [vmem:[%s1392 + $0x98] sm:$0xff]
        %v1407 = vld [vmem:[%s1392 + $0xa8] sm:$0xff]
        %v1408 = vld [vmem:[%s1392 + $0xb0] sm:$0xff]
        %v1409 = vld [vmem:[%s1392 + $0xc0] sm:$0xff]
        %v1410 = vld [vmem:[%s1392 + $0xc8] sm:$0xff]
        %v1411 = vld [vmem:[%s1392 + $0xd8] sm:$0xff]
        %v1412 = vld [vmem:[%s1392 + $0xe0] sm:$0xff]
        %v1413 = vld [vmem:[%s1392 + $0xf0] sm:$0xff]
        %v1414 = vld [vmem:[%s1392 + $0xf8] sm:$0xff]
        %v1415 = vld [vmem:[%s1392 + $0x108] sm:$0xff]
        %v1416 = vld [vmem:[%s1392 + $0x110] sm:$0xff]
        %v1417 = vld [vmem:[%s1392 + $0x120] sm:$0xff]
        %v1418 = vld [vmem:[%s1392 + $0x128] sm:$0xff]
        %v1419 = vld [vmem:[%s1392 + $0x138] sm:$0xff]
        %v1420 = vld [vmem:[%s1392 + $0x140] sm:$0xff]
        %v1421 = vld [vmem:[%s1392 + $0x150] sm:$0xff]
        %v1422 = vld [vmem:[%s1392 + $0x158] sm:$0xff]
        %v1423 = vld [vmem:[%s1392 + $0x168] sm:$0xff]
        %v1424 = vld [vmem:[%s1392 + $0x170] sm:$0xff]
        %s1425 = scalar_lea.vmem %s210, 12
        %v1426 = vld [vmem:[%s1425] sm:$0xf]
        %v1428 = vsel %vm254, %v1393, 0
        %v1431 = vsel %vm254, %v1394, 0
        %v1434 = vsel %vm254, %v1395, 0
        %v1437 = vsel %vm254, %v1396, 0
        %v1440 = vsel %vm254, %v1397, 0
        %v1443 = vsel %vm254, %v1398, 0
        %v1446 = vsel %vm254, %v1399, 0
        %v1449 = vsel %vm254, %v1400, 0
        %v1452 = vsel %vm254, %v1401, 0
        %v1455 = vsel %vm254, %v1402, 0
        %v1458 = vsel %vm254, %v1403, 0
        %v1461 = vsel %vm254, %v1404, 0
        %v1464 = vsel %vm254, %v1405, 0
        %v1467 = vsel %vm254, %v1406, 0
        %v1470 = vsel %vm254, %v1407, 0
        %v1473 = vsel %vm254, %v1408, 0
        %v1476 = vsel %vm254, %v1409, 0
        %v1479 = vsel %vm254, %v1410, 0
        %v1482 = vsel %vm254, %v1411, 0
        %v1485 = vsel %vm254, %v1412, 0
        %v1488 = vsel %vm254, %v1413, 0
        %v1491 = vsel %vm254, %v1414, 0
        %v1494 = vsel %vm254, %v1415, 0
        %v1497 = vsel %vm254, %v1416, 0
        %v1500 = vsel %vm254, %v1417, 0
        %v1503 = vsel %vm254, %v1418, 0
        %v1506 = vsel %vm254, %v1419, 0
        %v1509 = vsel %vm254, %v1420, 0
        %v1512 = vsel %vm254, %v1421, 0
        %v1515 = vsel %vm254, %v1422, 0
        %v1518 = vsel %vm254, %v1423, 0
        %v1521 = vsel %vm254, %v1424, 0
        %v1524 = vsel %vm351, %v1426, 0
        %1526 = vmatprep.subr.mxu0 0.0
        %1527 = vmatpush1.msra.mxu0 %v1524
        %1528 = vmatprep.subr.mxu0 0.0
        %1529 = vmatpush1.msra.mxu0 0.0
        %1530 = vmatprep.subr.mxu0 0.0
        %1531 = vmatpush1.msra.mxu0 0.0
        %1532 = vmatprep.subr.mxu0 0.0
        %1533 = vmatpush1.msra.mxu0 0.0
        %1534 = vmatprep.subr.mxu0 0.0
        %1535 = vmatpush1.msra.mxu0 0.0
        %1536 = vmatprep.subr.mxu0 0.0
        %1537 = vmatpush1.msra.mxu0 0.0
        %1538 = vmatprep.subr.mxu0 0.0
        %1539 = vmatpush1.msra.mxu0 0.0
        %1540 = vmatprep.subr.mxu0 0.0
        %1541 = vmatpush1.msra.mxu0 0.0
        %1542 = vmatprep.subr.mxu0 0.0
        %1543 = vmatpush1.msra.mxu0 0.0
        %1544 = vmatprep.subr.mxu0 0.0
        %1545 = vmatpush1.msra.mxu0 0.0
        %1546 = vmatprep.subr.mxu0 0.0
        %1547 = vmatpush1.msra.mxu0 0.0
        %1548 = vmatprep.subr.mxu0 0.0
        %1549 = vmatpush1.msra.mxu0 0.0
        %1550 = vmatprep.subr.mxu0 0.0
        %1551 = vmatpush1.msra.mxu0 0.0
        %1552 = vmatprep.subr.mxu0 0.0
        %1553 = vmatpush1.msra.mxu0 0.0
        %1554 = vmatprep.subr.mxu0 0.0
        %1555 = vmatpush1.msra.mxu0 0.0
        %1556 = vmatprep.subr.mxu0 0.0
        %1557 = vmatpush1.msra.mxu0 0.0
        %1558 = vmatprep.subr.mxu0 0.0
        %1559 = vmatpush1.msra.mxu0 0.0
        %1560 = vmatprep.subr.mxu0 0.0
        %1561 = vmatpush1.msra.mxu0 0.0
        %1562 = vmatprep.subr.mxu0 0.0
        %1563 = vmatpush1.msra.mxu0 0.0
        %1564 = vmatprep.subr.mxu0 0.0
        %1565 = vmatpush1.msra.mxu0 0.0
        %1566 = vmatprep.subr.mxu0 0.0
        %1567 = vmatpush1.msra.mxu0 0.0
        %1568 = vmatprep.subr.mxu0 0.0
        %1569 = vmatpush1.msra.mxu0 0.0
        %1570 = vmatprep.subr.mxu0 0.0
        %1571 = vmatpush1.msra.mxu0 0.0
        %1572 = vmatprep.subr.mxu0 0.0
        %1573 = vmatpush1.msra.mxu0 0.0
        %1574 = vmatprep.subr.mxu0 0.0
        %1575 = vmatpush1.msra.mxu0 0.0
        %1576 = vmatprep.subr.mxu0 0.0
        %1577 = vmatpush1.msra.mxu0 0.0
        %1578 = vmatprep.subr.mxu0 0.0
        %1579 = vmatpush1.msra.mxu0 0.0
        %1580 = vmatprep.subr.mxu0 0.0
        %1581 = vmatpush1.msra.mxu0 0.0
        %1582 = vmatprep.subr.mxu0 0.0
        %1583 = vmatpush1.msra.mxu0 0.0
        %1584 = vmatprep.subr.mxu0 0.0
        %1585 = vmatpush1.msra.mxu0 0.0
        %1586 = vmatprep.subr.mxu0 0.0
        %1587 = vmatpush1.msra.mxu0 0.0
        %1588 = vmatprep.subr.mxu0 0.0
        %1589 = vmatpush1.msra.mxu0 0.0
        %1590 = vmatprep.mubr.f32.mxu0 0.0
        %1591 = vmatmul.mubr.f32.gmra.mrb[0].mxu0 %v1428
        %v1592 = vpop.f32.mrb[0].mxu0
        %v1593 = vadd.f32 0.0, %v1592
        %v1594 = vpop.f32.mrb[0].mxu0
        %1595 = vmatprep.mubr.f32.mxu0 0.0
        %1596 = vmatmul.mubr.f32.gmra.mrb[0].mxu0 %v1431
        %v1597 = vpop.f32.mrb[0].mxu0
        %v1598 = vadd.f32 0.0, %v1597
        %v1599 = vpop.f32.mrb[0].mxu0
        %1600 = vmatprep.mubr.f32.mxu0 0.0
        %1601 = vmatmul.mubr.f32.gmra.mrb[0].mxu0 %v1434
        %v1602 = vpop.f32.mrb[0].mxu0
        %v1603 = vadd.f32 0.0, %v1602
        %v1604 = vpop.f32.mrb[0].mxu0
        %1605 = vmatprep.mubr.f32.mxu0 0.0
        %1606 = vmatmul.mubr.f32.gmra.mrb[0].mxu0 %v1437
        %v1607 = vpop.f32.mrb[0].mxu0
        %v1608 = vadd.f32 0.0, %v1607
        %v1609 = vpop.f32.mrb[0].mxu0
        %1610 = vmatprep.mubr.f32.mxu0 0.0
        %1611 = vmatmul.mubr.f32.gmra.mrb[0].mxu0 %v1440
        %v1612 = vpop.f32.mrb[0].mxu0
        %v1613 = vadd.f32 0.0, %v1612
        %v1614 = vpop.f32.mrb[0].mxu0
        %1615 = vmatprep.mubr.f32.mxu0 0.0
        %1616 = vmatmul.mubr.f32.gmra.mrb[0].mxu0 %v1443
        %v1617 = vpop.f32.mrb[0].mxu0
        %v1618 = vadd.f32 0.0, %v1617
        %v1619 = vpop.f32.mrb[0].mxu0
        %1620 = vmatprep.mubr.f32.mxu0 0.0
        %1621 = vmatmul.mubr.f32.gmra.mrb[0].mxu0 %v1446
        %v1622 = vpop.f32.mrb[0].mxu0
        %v1623 = vadd.f32 0.0, %v1622
        %v1624 = vpop.f32.mrb[0].mxu0
        %1625 = vmatprep.mubr.f32.mxu0 0.0
        %1626 = vmatmul.mubr.f32.gmra.mrb[0].mxu0 %v1449
        %v1627 = vpop.f32.mrb[0].mxu0
        %v1628 = vadd.f32 0.0, %v1627
        %v1629 = vpop.f32.mrb[0].mxu0
        %1630 = vmatprep.mubr.f32.mxu0 0.0
        %1631 = vmatmul.mubr.f32.gmra.mrb[0].mxu0 %v1452
        %v1632 = vpop.f32.mrb[0].mxu0
        %v1633 = vadd.f32 0.0, %v1632
        %v1634 = vpop.f32.mrb[0].mxu0
        %1635 = vmatprep.mubr.f32.mxu0 0.0
        %1636 = vmatmul.mubr.f32.gmra.mrb[0].mxu0 %v1455
        %v1637 = vpop.f32.mrb[0].mxu0
        %v1638 = vadd.f32 0.0, %v1637
        %v1639 = vpop.f32.mrb[0].mxu0
        %1640 = vmatprep.mubr.f32.mxu0 0.0
        %1641 = vmatmul.mubr.f32.gmra.mrb[0].mxu0 %v1458
        %v1642 = vpop.f32.mrb[0].mxu0
        %v1643 = vadd.f32 0.0, %v1642
        %v1644 = vpop.f32.mrb[0].mxu0
        %1645 = vmatprep.mubr.f32.mxu0 0.0
        %1646 = vmatmul.mubr.f32.gmra.mrb[0].mxu0 %v1461
        %v1647 = vpop.f32.mrb[0].mxu0
        %v1648 = vadd.f32 0.0, %v1647
        %v1649 = vpop.f32.mrb[0].mxu0
        %1650 = vmatprep.mubr.f32.mxu0 0.0
        %1651 = vmatmul.mubr.f32.gmra.mrb[0].mxu0 %v1464
        %v1652 = vpop.f32.mrb[0].mxu0
        %v1653 = vadd.f32 0.0, %v1652
        %v1654 = vpop.f32.mrb[0].mxu0
        %1655 = vmatprep.mubr.f32.mxu0 0.0
        %1656 = vmatmul.mubr.f32.gmra.mrb[0].mxu0 %v1467
        %v1657 = vpop.f32.mrb[0].mxu0
        %v1658 = vadd.f32 0.0, %v1657
        %v1659 = vpop.f32.mrb[0].mxu0
        %1660 = vmatprep.mubr.f32.mxu0 0.0
        %1661 = vmatmul.mubr.f32.gmra.mrb[0].mxu0 %v1470
        %v1662 = vpop.f32.mrb[0].mxu0
        %v1663 = vadd.f32 0.0, %v1662
        %v1664 = vpop.f32.mrb[0].mxu0
        %1665 = vmatprep.mubr.f32.mxu0 0.0
        %1666 = vmatmul.mubr.f32.gmra.mrb[0].mxu0 %v1473
        %v1667 = vpop.f32.mrb[0].mxu0
        %v1668 = vadd.f32 0.0, %v1667
        %v1669 = vpop.f32.mrb[0].mxu0
        %1670 = vmatprep.mubr.f32.mxu0 0.0
        %1671 = vmatmul.mubr.f32.gmra.mrb[0].mxu0 %v1476
        %v1672 = vpop.f32.mrb[0].mxu0
        %v1673 = vadd.f32 0.0, %v1672
        %v1674 = vpop.f32.mrb[0].mxu0
        %1675 = vmatprep.mubr.f32.mxu0 0.0
        %1676 = vmatmul.mubr.f32.gmra.mrb[0].mxu0 %v1479
        %v1677 = vpop.f32.mrb[0].mxu0
        %v1678 = vadd.f32 0.0, %v1677
        %v1679 = vpop.f32.mrb[0].mxu0
        %1680 = vmatprep.mubr.f32.mxu0 0.0
        %1681 = vmatmul.mubr.f32.gmra.mrb[0].mxu0 %v1482
        %v1682 = vpop.f32.mrb[0].mxu0
        %v1683 = vadd.f32 0.0, %v1682
        %v1684 = vpop.f32.mrb[0].mxu0
        %1685 = vmatprep.mubr.f32.mxu0 0.0
        %1686 = vmatmul.mubr.f32.gmra.mrb[0].mxu0 %v1485
        %v1687 = vpop.f32.mrb[0].mxu0
        %v1688 = vadd.f32 0.0, %v1687
        %v1689 = vpop.f32.mrb[0].mxu0
        %1690 = vmatprep.mubr.f32.mxu0 0.0
        %1691 = vmatmul.mubr.f32.gmra.mrb[0].mxu0 %v1488
        %v1692 = vpop.f32.mrb[0].mxu0
        %v1693 = vadd.f32 0.0, %v1692
        %v1694 = vpop.f32.mrb[0].mxu0
        %1695 = vmatprep.mubr.f32.mxu0 0.0
        %1696 = vmatmul.mubr.f32.gmra.mrb[0].mxu0 %v1491
        %v1697 = vpop.f32.mrb[0].mxu0
        %v1698 = vadd.f32 0.0, %v1697
        %v1699 = vpop.f32.mrb[0].mxu0
        %1700 = vmatprep.mubr.f32.mxu0 0.0
        %1701 = vmatmul.mubr.f32.gmra.mrb[0].mxu0 %v1494
        %v1702 = vpop.f32.mrb[0].mxu0
        %v1703 = vadd.f32 0.0, %v1702
        %v1704 = vpop.f32.mrb[0].mxu0
        %1705 = vmatprep.mubr.f32.mxu0 0.0
        %1706 = vmatmul.mubr.f32.gmra.mrb[0].mxu0 %v1497
        %v1707 = vpop.f32.mrb[0].mxu0
        %v1708 = vadd.f32 0.0, %v1707
        %v1709 = vpop.f32.mrb[0].mxu0
        %1710 = vmatprep.mubr.f32.mxu0 0.0
        %1711 = vmatmul.mubr.f32.gmra.mrb[0].mxu0 %v1500
        %v1712 = vpop.f32.mrb[0].mxu0
        %v1713 = vadd.f32 0.0, %v1712
        %v1714 = vpop.f32.mrb[0].mxu0
        %1715 = vmatprep.mubr.f32.mxu0 0.0
        %1716 = vmatmul.mubr.f32.gmra.mrb[0].mxu0 %v1503
        %v1717 = vpop.f32.mrb[0].mxu0
        %v1718 = vadd.f32 0.0, %v1717
        %v1719 = vpop.f32.mrb[0].mxu0
        %1720 = vmatprep.mubr.f32.mxu0 0.0
        %1721 = vmatmul.mubr.f32.gmra.mrb[0].mxu0 %v1506
        %v1722 = vpop.f32.mrb[0].mxu0
        %v1723 = vadd.f32 0.0, %v1722
        %v1724 = vpop.f32.mrb[0].mxu0
        %1725 = vmatprep.mubr.f32.mxu0 0.0
        %1726 = vmatmul.mubr.f32.gmra.mrb[0].mxu0 %v1509
        %v1727 = vpop.f32.mrb[0].mxu0
        %v1728 = vadd.f32 0.0, %v1727
        %v1729 = vpop.f32.mrb[0].mxu0
        %1730 = vmatprep.mubr.f32.mxu0 0.0
        %1731 = vmatmul.mubr.f32.gmra.mrb[0].mxu0 %v1512
        %v1732 = vpop.f32.mrb[0].mxu0
        %v1733 = vadd.f32 0.0, %v1732
        %v1734 = vpop.f32.mrb[0].mxu0
        %1735 = vmatprep.mubr.f32.mxu0 0.0
        %1736 = vmatmul.mubr.f32.gmra.mrb[0].mxu0 %v1515
        %v1737 = vpop.f32.mrb[0].mxu0
        %v1738 = vadd.f32 0.0, %v1737
        %v1739 = vpop.f32.mrb[0].mxu0
        %1740 = vmatprep.mubr.f32.mxu0 0.0
        %1741 = vmatmul.mubr.f32.gmra.mrb[0].mxu0 %v1518
        %v1742 = vpop.f32.mrb[0].mxu0
        %v1743 = vadd.f32 0.0, %v1742
        %v1744 = vpop.f32.mrb[0].mxu0
        %1745 = vmatprep.mubr.f32.mxu0 0.0
        %1746 = vmatmul.mubr.f32.gmra.mrb[0].mxu0 %v1521
        %v1747 = vpop.f32.mrb[0].mxu0
        %v1748 = vadd.f32 0.0, %v1747
        %v1749 = vpop.f32.mrb[0].mxu0
        %1750 = vdwg.mxu0
        %v1751 = vadd.f32 %v1360, %v1593
        %v1752 = vadd.f32 %v1361, %v1598
        %v1753 = vadd.f32 %v1362, %v1603
        %v1754 = vadd.f32 %v1363, %v1608
        %v1755 = vadd.f32 %v1364, %v1613
        %v1756 = vadd.f32 %v1365, %v1618
        %v1757 = vadd.f32 %v1366, %v1623
        %v1758 = vadd.f32 %v1367, %v1628
        %v1759 = vadd.f32 %v1368, %v1633
        %v1760 = vadd.f32 %v1369, %v1638
        %v1761 = vadd.f32 %v1370, %v1643
        %v1762 = vadd.f32 %v1371, %v1648
        %v1763 = vadd.f32 %v1372, %v1653
        %v1764 = vadd.f32 %v1373, %v1658
        %v1765 = vadd.f32 %v1374, %v1663
        %v1766 = vadd.f32 %v1375, %v1668
        %v1767 = vadd.f32 %v1376, %v1673
        %v1768 = vadd.f32 %v1377, %v1678
        %v1769 = vadd.f32 %v1378, %v1683
        %v1770 = vadd.f32 %v1379, %v1688
        %v1771 = vadd.f32 %v1380, %v1693
        %v1772 = vadd.f32 %v1381, %v1698
        %v1773 = vadd.f32 %v1382, %v1703
        %v1774 = vadd.f32 %v1383, %v1708
        %v1775 = vadd.f32 %v1384, %v1713
        %v1776 = vadd.f32 %v1385, %v1718
        %v1777 = vadd.f32 %v1386, %v1723
        %v1778 = vadd.f32 %v1387, %v1728
        %v1779 = vadd.f32 %v1388, %v1733
        %v1780 = vadd.f32 %v1389, %v1738
        %v1781 = vadd.f32 %v1390, %v1743
        %v1782 = vadd.f32 %v1391, %v1748
        %v1783 = vld [vmem:[%s1392 + $0x1] sm:$0xff]
        %v1784 = vld [vmem:[%s1392 + $0x9] sm:$0xff]
        %v1785 = vld [vmem:[%s1392 + $0x19] sm:$0xff]
        %v1786 = vld [vmem:[%s1392 + $0x21] sm:$0xff]
        %v1787 = vld [vmem:[%s1392 + $0x31] sm:$0xff]
        %v1788 = vld [vmem:[%s1392 + $0x39] sm:$0xff]
        %v1789 = vld [vmem:[%s1392 + $0x49] sm:$0xff]
        %v1790 = vld [vmem:[%s1392 + $0x51] sm:$0xff]
        %v1791 = vld [vmem:[%s1392 + $0x61] sm:$0xff]
        %v1792 = vld [vmem:[%s1392 + $0x69] sm:$0xff]
        %v1793 = vld [vmem:[%s1392 + $0x79] sm:$0xff]
        %v1794 = vld [vmem:[%s1392 + $0x81] sm:$0xff]
        %v1795 = vld [vmem:[%s1392 + $0x91] sm:$0xff]
        %v1796 = vld [vmem:[%s1392 + $0x99] sm:$0xff]
        %v1797 = vld [vmem:[%s1392 + $0xa9] sm:$0xff]
        %v1798 = vld [vmem:[%s1392 + $0xb1] sm:$0xff]
        %v1799 = vld [vmem:[%s1392 + $0xc1] sm:$0xff]
        %v1800 = vld [vmem:[%s1392 + $0xc9] sm:$0xff]
        %v1801 = vld [vmem:[%s1392 + $0xd9] sm:$0xff]
        %v1802 = vld [vmem:[%s1392 + $0xe1] sm:$0xff]
        %v1803 = vld [vmem:[%s1392 + $0xf1] sm:$0xff]
        %v1804 = vld [vmem:[%s1392 + $0xf9] sm:$0xff]
        %v1805 = vld [vmem:[%s1392 + $0x109] sm:$0xff]
        %v1806 = vld [vmem:[%s1392 + $0x111] sm:$0xff]
        %v1807 = vld [vmem:[%s1392 + $0x121] sm:$0xff]
        %v1808 = vld [vmem:[%s1392 + $0x129] sm:$0xff]
        %v1809 = vld [vmem:[%s1392 + $0x139] sm:$0xff]
        %v1810 = vld [vmem:[%s1392 + $0x141] sm:$0xff]
        %v1811 = vld [vmem:[%s1392 + $0x151] sm:$0xff]
        %v1812 = vld [vmem:[%s1392 + $0x159] sm:$0xff]
        %v1813 = vld [vmem:[%s1392 + $0x169] sm:$0xff]
        %v1814 = vld [vmem:[%s1392 + $0x171] sm:$0xff]
        %s1815 = scalar_lea.vmem %s210, 16
        %v1816 = vld [vmem:[%s1815] sm:$0xf]
        %v1818 = vsel %vm254, %v1783, 0
        %v1821 = vsel %vm254, %v1784, 0
        %v1824 = vsel %vm254, %v1785, 0
        %v1827 = vsel %vm254, %v1786, 0
        %v1830 = vsel %vm254, %v1787, 0
        %v1833 = vsel %vm254, %v1788, 0
        %v1836 = vsel %vm254, %v1789, 0
        %v1839 = vsel %vm254, %v1790, 0
        %v1842 = vsel %vm254, %v1791, 0
        %v1845 = vsel %vm254, %v1792, 0
        %v1848 = vsel %vm254, %v1793, 0
        %v1851 = vsel %vm254, %v1794, 0
        %v1854 = vsel %vm254, %v1795, 0
        %v1857 = vsel %vm254, %v1796, 0
        %v1860 = vsel %vm254, %v1797, 0
        %v1863 = vsel %vm254, %v1798, 0
        %v1866 = vsel %vm254, %v1799, 0
        %v1869 = vsel %vm254, %v1800, 0
        %v1872 = vsel %vm254, %v1801, 0
        %v1875 = vsel %vm254, %v1802, 0
        %v1878 = vsel %vm254, %v1803, 0
        %v1881 = vsel %vm254, %v1804, 0
        %v1884 = vsel %vm254, %v1805, 0
        %v1887 = vsel %vm254, %v1806, 0
        %v1890 = vsel %vm254, %v1807, 0
        %v1893 = vsel %vm254, %v1808, 0
        %v1896 = vsel %vm254, %v1809, 0
        %v1899 = vsel %vm254, %v1810, 0
        %v1902 = vsel %vm254, %v1811, 0
        %v1905 = vsel %vm254, %v1812, 0
        %v1908 = vsel %vm254, %v1813, 0
        %v1911 = vsel %vm254, %v1814, 0
        %v1914 = vsel %vm351, %v1816, 0
        %1916 = vmatprep.subr.mxu0 0.0
        %1917 = vmatpush1.msra.mxu0 %v1914
        %1918 = vmatprep.subr.mxu0 0.0
        %1919 = vmatpush1.msra.mxu0 0.0
        %1920 = vmatprep.subr.mxu0 0.0
        %1921 = vmatpush1.msra.mxu0 0.0
        %1922 = vmatprep.subr.mxu0 0.0
        %1923 = vmatpush1.msra.mxu0 0.0
        %1924 = vmatprep.subr.mxu0 0.0
        %1925 = vmatpush1.msra.mxu0 0.0
        %1926 = vmatprep.subr.mxu0 0.0
        %1927 = vmatpush1.msra.mxu0 0.0
        %1928 = vmatprep.subr.mxu0 0.0
        %1929 = vmatpush1.msra.mxu0 0.0
        %1930 = vmatprep.subr.mxu0 0.0
        %1931 = vmatpush1.msra.mxu0 0.0
        %1932 = vmatprep.subr.mxu0 0.0
        %1933 = vmatpush1.msra.mxu0 0.0
        %1934 = vmatprep.subr.mxu0 0.0
        %1935 = vmatpush1.msra.mxu0 0.0
        %1936 = vmatprep.subr.mxu0 0.0
        %1937 = vmatpush1.msra.mxu0 0.0
        %1938 = vmatprep.subr.mxu0 0.0
        %1939 = vmatpush1.msra.mxu0 0.0
        %1940 = vmatprep.subr.mxu0 0.0
        %1941 = vmatpush1.msra.mxu0 0.0
        %1942 = vmatprep.subr.mxu0 0.0
        %1943 = vmatpush1.msra.mxu0 0.0
        %1944 = vmatprep.subr.mxu0 0.0
        %1945 = vmatpush1.msra.mxu0 0.0
        %1946 = vmatprep.subr.mxu0 0.0
        %1947 = vmatpush1.msra.mxu0 0.0
        %1948 = vmatprep.subr.mxu0 0.0
        %1949 = vmatpush1.msra.mxu0 0.0
        %1950 = vmatprep.subr.mxu0 0.0
        %1951 = vmatpush1.msra.mxu0 0.0
        %1952 = vmatprep.subr.mxu0 0.0
        %1953 = vmatpush1.msra.mxu0 0.0
        %1954 = vmatprep.subr.mxu0 0.0
        %1955 = vmatpush1.msra.mxu0 0.0
        %1956 = vmatprep.subr.mxu0 0.0
        %1957 = vmatpush1.msra.mxu0 0.0
        %1958 = vmatprep.subr.mxu0 0.0
        %1959 = vmatpush1.msra.mxu0 0.0
        %1960 = vmatprep.subr.mxu0 0.0
        %1961 = vmatpush1.msra.mxu0 0.0
        %1962 = vmatprep.subr.mxu0 0.0
        %1963 = vmatpush1.msra.mxu0 0.0
        %1964 = vmatprep.subr.mxu0 0.0
        %1965 = vmatpush1.msra.mxu0 0.0
        %1966 = vmatprep.subr.mxu0 0.0
        %1967 = vmatpush1.msra.mxu0 0.0
        %1968 = vmatprep.subr.mxu0 0.0
        %1969 = vmatpush1.msra.mxu0 0.0
        %1970 = vmatprep.subr.mxu0 0.0
        %1971 = vmatpush1.msra.mxu0 0.0
        %1972 = vmatprep.subr.mxu0 0.0
        %1973 = vmatpush1.msra.mxu0 0.0
        %1974 = vmatprep.subr.mxu0 0.0
        %1975 = vmatpush1.msra.mxu0 0.0
        %1976 = vmatprep.subr.mxu0 0.0
        %1977 = vmatpush1.msra.mxu0 0.0
        %1978 = vmatprep.subr.mxu0 0.0
        %1979 = vmatpush1.msra.mxu0 0.0
        %1980 = vmatprep.mubr.f32.mxu0 0.0
        %1981 = vmatmul.mubr.f32.gmra.mrb[0].mxu0 %v1818
        %v1982 = vpop.f32.mrb[0].mxu0
        %v1983 = vadd.f32 0.0, %v1982
        %v1984 = vpop.f32.mrb[0].mxu0
        %1985 = vmatprep.mubr.f32.mxu0 0.0
        %1986 = vmatmul.mubr.f32.gmra.mrb[0].mxu0 %v1821
        %v1987 = vpop.f32.mrb[0].mxu0
        %v1988 = vadd.f32 0.0, %v1987
        %v1989 = vpop.f32.mrb[0].mxu0
        %1990 = vmatprep.mubr.f32.mxu0 0.0
        %1991 = vmatmul.mubr.f32.gmra.mrb[0].mxu0 %v1824
        %v1992 = vpop.f32.mrb[0].mxu0
        %v1993 = vadd.f32 0.0, %v1992
        %v1994 = vpop.f32.mrb[0].mxu0
        %1995 = vmatprep.mubr.f32.mxu0 0.0
        %1996 = vmatmul.mubr.f32.gmra.mrb[0].mxu0 %v1827
        %v1997 = vpop.f32.mrb[0].mxu0
        %v1998 = vadd.f32 0.0, %v1997
        %v1999 = vpop.f32.mrb[0].mxu0
        %2000 = vmatprep.mubr.f32.mxu0 0.0
        %2001 = vmatmul.mubr.f32.gmra.mrb[0].mxu0 %v1830
        %v2002 = vpop.f32.mrb[0].mxu0
        %v2003 = vadd.f32 0.0, %v2002
        %v2004 = vpop.f32.mrb[0].mxu0
        %2005 = vmatprep.mubr.f32.mxu0 0.0
        %2006 = vmatmul.mubr.f32.gmra.mrb[0].mxu0 %v1833
        %v2007 = vpop.f32.mrb[0].mxu0
        %v2008 = vadd.f32 0.0, %v2007
        %v2009 = vpop.f32.mrb[0].mxu0
        %2010 = vmatprep.mubr.f32.mxu0 0.0
        %2011 = vmatmul.mubr.f32.gmra.mrb[0].mxu0 %v1836
        %v2012 = vpop.f32.mrb[0].mxu0
        %v2013 = vadd.f32 0.0, %v2012
        %v2014 = vpop.f32.mrb[0].mxu0
        %2015 = vmatprep.mubr.f32.mxu0 0.0
        %2016 = vmatmul.mubr.f32.gmra.mrb[0].mxu0 %v1839
        %v2017 = vpop.f32.mrb[0].mxu0
        %v2018 = vadd.f32 0.0, %v2017
        %v2019 = vpop.f32.mrb[0].mxu0
        %2020 = vmatprep.mubr.f32.mxu0 0.0
        %2021 = vmatmul.mubr.f32.gmra.mrb[0].mxu0 %v1842
        %v2022 = vpop.f32.mrb[0].mxu0
        %v2023 = vadd.f32 0.0, %v2022
        %v2024 = vpop.f32.mrb[0].mxu0
        %2025 = vmatprep.mubr.f32.mxu0 0.0
        %2026 = vmatmul.mubr.f32.gmra.mrb[0].mxu0 %v1845
        %v2027 = vpop.f32.mrb[0].mxu0
        %v2028 = vadd.f32 0.0, %v2027
        %v2029 = vpop.f32.mrb[0].mxu0
        %2030 = vmatprep.mubr.f32.mxu0 0.0
        %2031 = vmatmul.mubr.f32.gmra.mrb[0].mxu0 %v1848
        %v2032 = vpop.f32.mrb[0].mxu0
        %v2033 = vadd.f32 0.0, %v2032
        %v2034 = vpop.f32.mrb[0].mxu0
        %2035 = vmatprep.mubr.f32.mxu0 0.0
        %2036 = vmatmul.mubr.f32.gmra.mrb[0].mxu0 %v1851
        %v2037 = vpop.f32.mrb[0].mxu0
        %v2038 = vadd.f32 0.0, %v2037
        %v2039 = vpop.f32.mrb[0].mxu0
        %2040 = vmatprep.mubr.f32.mxu0 0.0
        %2041 = vmatmul.mubr.f32.gmra.mrb[0].mxu0 %v1854
        %v2042 = vpop.f32.mrb[0].mxu0
        %v2043 = vadd.f32 0.0, %v2042
        %v2044 = vpop.f32.mrb[0].mxu0
        %2045 = vmatprep.mubr.f32.mxu0 0.0
        %2046 = vmatmul.mubr.f32.gmra.mrb[0].mxu0 %v1857
        %v2047 = vpop.f32.mrb[0].mxu0
        %v2048 = vadd.f32 0.0, %v2047
        %v2049 = vpop.f32.mrb[0].mxu0
        %2050 = vmatprep.mubr.f32.mxu0 0.0
        %2051 = vmatmul.mubr.f32.gmra.mrb[0].mxu0 %v1860
        %v2052 = vpop.f32.mrb[0].mxu0
        %v2053 = vadd.f32 0.0, %v2052
        %v2054 = vpop.f32.mrb[0].mxu0
        %2055 = vmatprep.mubr.f32.mxu0 0.0
        %2056 = vmatmul.mubr.f32.gmra.mrb[0].mxu0 %v1863
        %v2057 = vpop.f32.mrb[0].mxu0
        %v2058 = vadd.f32 0.0, %v2057
        %v2059 = vpop.f32.mrb[0].mxu0
        %2060 = vmatprep.mubr.f32.mxu0 0.0
        %2061 = vmatmul.mubr.f32.gmra.mrb[0].mxu0 %v1866
        %v2062 = vpop.f32.mrb[0].mxu0
        %v2063 = vadd.f32 0.0, %v2062
        %v2064 = vpop.f32.mrb[0].mxu0
        %2065 = vmatprep.mubr.f32.mxu0 0.0
        %2066 = vmatmul.mubr.f32.gmra.mrb[0].mxu0 %v1869
        %v2067 = vpop.f32.mrb[0].mxu0
        %v2068 = vadd.f32 0.0, %v2067
        %v2069 = vpop.f32.mrb[0].mxu0
        %2070 = vmatprep.mubr.f32.mxu0 0.0
        %2071 = vmatmul.mubr.f32.gmra.mrb[0].mxu0 %v1872
        %v2072 = vpop.f32.mrb[0].mxu0
        %v2073 = vadd.f32 0.0, %v2072
        %v2074 = vpop.f32.mrb[0].mxu0
        %2075 = vmatprep.mubr.f32.mxu0 0.0
        %2076 = vmatmul.mubr.f32.gmra.mrb[0].mxu0 %v1875
        %v2077 = vpop.f32.mrb[0].mxu0
        %v2078 = vadd.f32 0.0, %v2077
        %v2079 = vpop.f32.mrb[0].mxu0
        %2080 = vmatprep.mubr.f32.mxu0 0.0
        %2081 = vmatmul.mubr.f32.gmra.mrb[0].mxu0 %v1878
        %v2082 = vpop.f32.mrb[0].mxu0
        %v2083 = vadd.f32 0.0, %v2082
        %v2084 = vpop.f32.mrb[0].mxu0
        %2085 = vmatprep.mubr.f32.mxu0 0.0
        %2086 = vmatmul.mubr.f32.gmra.mrb[0].mxu0 %v1881
        %v2087 = vpop.f32.mrb[0].mxu0
        %v2088 = vadd.f32 0.0, %v2087
        %v2089 = vpop.f32.mrb[0].mxu0
        %2090 = vmatprep.mubr.f32.mxu0 0.0
        %2091 = vmatmul.mubr.f32.gmra.mrb[0].mxu0 %v1884
        %v2092 = vpop.f32.mrb[0].mxu0
        %v2093 = vadd.f32 0.0, %v2092
        %v2094 = vpop.f32.mrb[0].mxu0
        %2095 = vmatprep.mubr.f32.mxu0 0.0
        %2096 = vmatmul.mubr.f32.gmra.mrb[0].mxu0 %v1887
        %v2097 = vpop.f32.mrb[0].mxu0
        %v2098 = vadd.f32 0.0, %v2097
        %v2099 = vpop.f32.mrb[0].mxu0
        %2100 = vmatprep.mubr.f32.mxu0 0.0
        %2101 = vmatmul.mubr.f32.gmra.mrb[0].mxu0 %v1890
        %v2102 = vpop.f32.mrb[0].mxu0
        %v2103 = vadd.f32 0.0, %v2102
        %v2104 = vpop.f32.mrb[0].mxu0
        %2105 = vmatprep.mubr.f32.mxu0 0.0
        %2106 = vmatmul.mubr.f32.gmra.mrb[0].mxu0 %v1893
        %v2107 = vpop.f32.mrb[0].mxu0
        %v2108 = vadd.f32 0.0, %v2107
        %v2109 = vpop.f32.mrb[0].mxu0
        %2110 = vmatprep.mubr.f32.mxu0 0.0
        %2111 = vmatmul.mubr.f32.gmra.mrb[0].mxu0 %v1896
        %v2112 = vpop.f32.mrb[0].mxu0
        %v2113 = vadd.f32 0.0, %v2112
        %v2114 = vpop.f32.mrb[0].mxu0
        %2115 = vmatprep.mubr.f32.mxu0 0.0
        %2116 = vmatmul.mubr.f32.gmra.mrb[0].mxu0 %v1899
        %v2117 = vpop.f32.mrb[0].mxu0
        %v2118 = vadd.f32 0.0, %v2117
        %v2119 = vpop.f32.mrb[0].mxu0
        %2120 = vmatprep.mubr.f32.mxu0 0.0
        %2121 = vmatmul.mubr.f32.gmra.mrb[0].mxu0 %v1902
        %v2122 = vpop.f32.mrb[0].mxu0
        %v2123 = vadd.f32 0.0, %v2122
        %v2124 = vpop.f32.mrb[0].mxu0
        %2125 = vmatprep.mubr.f32.mxu0 0.0
        %2126 = vmatmul.mubr.f32.gmra.mrb[0].mxu0 %v1905
        %v2127 = vpop.f32.mrb[0].mxu0
        %v2128 = vadd.f32 0.0, %v2127
        %v2129 = vpop.f32.mrb[0].mxu0
        %2130 = vmatprep.mubr.f32.mxu0 0.0
        %2131 = vmatmul.mubr.f32.gmra.mrb[0].mxu0 %v1908
        %v2132 = vpop.f32.mrb[0].mxu0
        %v2133 = vadd.f32 0.0, %v2132
        %v2134 = vpop.f32.mrb[0].mxu0
        %2135 = vmatprep.mubr.f32.mxu0 0.0
        %2136 = vmatmul.mubr.f32.gmra.mrb[0].mxu0 %v1911
        %v2137 = vpop.f32.mrb[0].mxu0
        %v2138 = vadd.f32 0.0, %v2137
        %v2139 = vpop.f32.mrb[0].mxu0
        %2140 = vdwg.mxu0
        %v2141 = vadd.f32 %v1751, %v1983
        %v2142 = vadd.f32 %v1752, %v1988
        %v2143 = vadd.f32 %v1753, %v1993
        %v2144 = vadd.f32 %v1754, %v1998
        %v2145 = vadd.f32 %v1755, %v2003
        %v2146 = vadd.f32 %v1756, %v2008
        %v2147 = vadd.f32 %v1757, %v2013
        %v2148 = vadd.f32 %v1758, %v2018
        %v2149 = vadd.f32 %v1759, %v2023
        %v2150 = vadd.f32 %v1760, %v2028
        %v2151 = vadd.f32 %v1761, %v2033
        %v2152 = vadd.f32 %v1762, %v2038
        %v2153 = vadd.f32 %v1763, %v2043
        %v2154 = vadd.f32 %v1764, %v2048
        %v2155 = vadd.f32 %v1765, %v2053
        %v2156 = vadd.f32 %v1766, %v2058
        %v2157 = vadd.f32 %v1767, %v2063
        %v2158 = vadd.f32 %v1768, %v2068
        %v2159 = vadd.f32 %v1769, %v2073
        %v2160 = vadd.f32 %v1770, %v2078
        %v2161 = vadd.f32 %v1771, %v2083
        %v2162 = vadd.f32 %v1772, %v2088
        %v2163 = vadd.f32 %v1773, %v2093
        %v2164 = vadd.f32 %v1774, %v2098
        %v2165 = vadd.f32 %v1775, %v2103
        %v2166 = vadd.f32 %v1776, %v2108
        %v2167 = vadd.f32 %v1777, %v2113
        %v2168 = vadd.f32 %v1778, %v2118
        %v2169 = vadd.f32 %v1779, %v2123
        %v2170 = vadd.f32 %v1780, %v2128
        %v2171 = vadd.f32 %v1781, %v2133
        %v2172 = vadd.f32 %v1782, %v2138
        %v2173 = vld [vmem:[%s1392 + $0x2] sm:$0xff]
        %v2174 = vld [vmem:[%s1392 + $0xa] sm:$0xff]
        %v2175 = vld [vmem:[%s1392 + $0x1a] sm:$0xff]
        %v2176 = vld [vmem:[%s1392 + $0x22] sm:$0xff]
        %v2177 = vld [vmem:[%s1392 + $0x32] sm:$0xff]
        %v2178 = vld [vmem:[%s1392 + $0x3a] sm:$0xff]
        %v2179 = vld [vmem:[%s1392 + $0x4a] sm:$0xff]
        %v2180 = vld [vmem:[%s1392 + $0x52] sm:$0xff]
        %v2181 = vld [vmem:[%s1392 + $0x62] sm:$0xff]
        %v2182 = vld [vmem:[%s1392 + $0x6a] sm:$0xff]
        %v2183 = vld [vmem:[%s1392 + $0x7a] sm:$0xff]
        %v2184 = vld [vmem:[%s1392 + $0x82] sm:$0xff]
        %v2185 = vld [vmem:[%s1392 + $0x92] sm:$0xff]
        %v2186 = vld [vmem:[%s1392 + $0x9a] sm:$0xff]
        %v2187 = vld [vmem:[%s1392 + $0xaa] sm:$0xff]
        %v2188 = vld [vmem:[%s1392 + $0xb2] sm:$0xff]
        %v2189 = vld [vmem:[%s1392 + $0xc2] sm:$0xff]
        %v2190 = vld [vmem:[%s1392 + $0xca] sm:$0xff]
        %v2191 = vld [vmem:[%s1392 + $0xda] sm:$0xff]
        %v2192 = vld [vmem:[%s1392 + $0xe2] sm:$0xff]
        %v2193 = vld [vmem:[%s1392 + $0xf2] sm:$0xff]
        %v2194 = vld [vmem:[%s1392 + $0xfa] sm:$0xff]
        %v2195 = vld [vmem:[%s1392 + $0x10a] sm:$0xff]
        %v2196 = vld [vmem:[%s1392 + $0x112] sm:$0xff]
        %v2197 = vld [vmem:[%s1392 + $0x122] sm:$0xff]
        %v2198 = vld [vmem:[%s1392 + $0x12a] sm:$0xff]
        %v2199 = vld [vmem:[%s1392 + $0x13a] sm:$0xff]
        %v2200 = vld [vmem:[%s1392 + $0x142] sm:$0xff]
        %v2201 = vld [vmem:[%s1392 + $0x152] sm:$0xff]
        %v2202 = vld [vmem:[%s1392 + $0x15a] sm:$0xff]
        %v2203 = vld [vmem:[%s1392 + $0x16a] sm:$0xff]
        %v2204 = vld [vmem:[%s1392 + $0x172] sm:$0xff]
        %s2205 = scalar_lea.vmem %s210, 20
        %v2206 = vld [vmem:[%s2205] sm:$0xf]
        %v2208 = vsel %vm254, %v2173, 0
        %v2211 = vsel %vm254, %v2174, 0
        %v2214 = vsel %vm254, %v2175, 0
        %v2217 = vsel %vm254, %v2176, 0
        %v2220 = vsel %vm254, %v2177, 0
        %v2223 = vsel %vm254, %v2178, 0
        %v2226 = vsel %vm254, %v2179, 0
        %v2229 = vsel %vm254, %v2180, 0
        %v2232 = vsel %vm254, %v2181, 0
        %v2235 = vsel %vm254, %v2182, 0
        %v2238 = vsel %vm254, %v2183, 0
        %v2241 = vsel %vm254, %v2184, 0
        %v2244 = vsel %vm254, %v2185, 0
        %v2247 = vsel %vm254, %v2186, 0
        %v2250 = vsel %vm254, %v2187, 0
        %v2253 = vsel %vm254, %v2188, 0
        %v2256 = vsel %vm254, %v2189, 0
        %v2259 = vsel %vm254, %v2190, 0
        %v2262 = vsel %vm254, %v2191, 0
        %v2265 = vsel %vm254, %v2192, 0
        %v2268 = vsel %vm254, %v2193, 0
        %v2271 = vsel %vm254, %v2194, 0
        %v2274 = vsel %vm254, %v2195, 0
        %v2277 = vsel %vm254, %v2196, 0
        %v2280 = vsel %vm254, %v2197, 0
        %v2283 = vsel %vm254, %v2198, 0
        %v2286 = vsel %vm254, %v2199, 0
        %v2289 = vsel %vm254, %v2200, 0
        %v2292 = vsel %vm254, %v2201, 0
        %v2295 = vsel %vm254, %v2202, 0
        %v2298 = vsel %vm254, %v2203, 0
        %v2301 = vsel %vm254, %v2204, 0
        %v2304 = vsel %vm351, %v2206, 0
        %2306 = vmatprep.subr.mxu0 0.0
        %2307 = vmatpush1.msra.mxu0 %v2304
        %2308 = vmatprep.subr.mxu0 0.0
        %2309 = vmatpush1.msra.mxu0 0.0
        %2310 = vmatprep.subr.mxu0 0.0
        %2311 = vmatpush1.msra.mxu0 0.0
        %2312 = vmatprep.subr.mxu0 0.0
        %2313 = vmatpush1.msra.mxu0 0.0
        %2314 = vmatprep.subr.mxu0 0.0
        %2315 = vmatpush1.msra.mxu0 0.0
        %2316 = vmatprep.subr.mxu0 0.0
        %2317 = vmatpush1.msra.mxu0 0.0
        %2318 = vmatprep.subr.mxu0 0.0
        %2319 = vmatpush1.msra.mxu0 0.0
        %2320 = vmatprep.subr.mxu0 0.0
        %2321 = vmatpush1.msra.mxu0 0.0
        %2322 = vmatprep.subr.mxu0 0.0
        %2323 = vmatpush1.msra.mxu0 0.0
        %2324 = vmatprep.subr.mxu0 0.0
        %2325 = vmatpush1.msra.mxu0 0.0
        %2326 = vmatprep.subr.mxu0 0.0
        %2327 = vmatpush1.msra.mxu0 0.0
        %2328 = vmatprep.subr.mxu0 0.0
        %2329 = vmatpush1.msra.mxu0 0.0
        %2330 = vmatprep.subr.mxu0 0.0
        %2331 = vmatpush1.msra.mxu0 0.0
        %2332 = vmatprep.subr.mxu0 0.0
        %2333 = vmatpush1.msra.mxu0 0.0
        %2334 = vmatprep.subr.mxu0 0.0
        %2335 = vmatpush1.msra.mxu0 0.0
        %2336 = vmatprep.subr.mxu0 0.0
        %2337 = vmatpush1.msra.mxu0 0.0
        %2338 = vmatprep.subr.mxu0 0.0
        %2339 = vmatpush1.msra.mxu0 0.0
        %2340 = vmatprep.subr.mxu0 0.0
        %2341 = vmatpush1.msra.mxu0 0.0
        %2342 = vmatprep.subr.mxu0 0.0
        %2343 = vmatpush1.msra.mxu0 0.0
        %2344 = vmatprep.subr.mxu0 0.0
        %2345 = vmatpush1.msra.mxu0 0.0
        %2346 = vmatprep.subr.mxu0 0.0
        %2347 = vmatpush1.msra.mxu0 0.0
        %2348 = vmatprep.subr.mxu0 0.0
        %2349 = vmatpush1.msra.mxu0 0.0
        %2350 = vmatprep.subr.mxu0 0.0
        %2351 = vmatpush1.msra.mxu0 0.0
        %2352 = vmatprep.subr.mxu0 0.0
        %2353 = vmatpush1.msra.mxu0 0.0
        %2354 = vmatprep.subr.mxu0 0.0
        %2355 = vmatpush1.msra.mxu0 0.0
        %2356 = vmatprep.subr.mxu0 0.0
        %2357 = vmatpush1.msra.mxu0 0.0
        %2358 = vmatprep.subr.mxu0 0.0
        %2359 = vmatpush1.msra.mxu0 0.0
        %2360 = vmatprep.subr.mxu0 0.0
        %2361 = vmatpush1.msra.mxu0 0.0
        %2362 = vmatprep.subr.mxu0 0.0
        %2363 = vmatpush1.msra.mxu0 0.0
        %2364 = vmatprep.subr.mxu0 0.0
        %2365 = vmatpush1.msra.mxu0 0.0
        %2366 = vmatprep.subr.mxu0 0.0
        %2367 = vmatpush1.msra.mxu0 0.0
        %2368 = vmatprep.subr.mxu0 0.0
        %2369 = vmatpush1.msra.mxu0 0.0
        %2370 = vmatprep.mubr.f32.mxu0 0.0
        %2371 = vmatmul.mubr.f32.gmra.mrb[0].mxu0 %v2208
        %v2372 = vpop.f32.mrb[0].mxu0
        %v2373 = vadd.f32 0.0, %v2372
        %v2374 = vpop.f32.mrb[0].mxu0
        %2375 = vmatprep.mubr.f32.mxu0 0.0
        %2376 = vmatmul.mubr.f32.gmra.mrb[0].mxu0 %v2211
        %v2377 = vpop.f32.mrb[0].mxu0
        %v2378 = vadd.f32 0.0, %v2377
        %v2379 = vpop.f32.mrb[0].mxu0
        %2380 = vmatprep.mubr.f32.mxu0 0.0
        %2381 = vmatmul.mubr.f32.gmra.mrb[0].mxu0 %v2214
        %v2382 = vpop.f32.mrb[0].mxu0
        %v2383 = vadd.f32 0.0, %v2382
        %v2384 = vpop.f32.mrb[0].mxu0
        %2385 = vmatprep.mubr.f32.mxu0 0.0
        %2386 = vmatmul.mubr.f32.gmra.mrb[0].mxu0 %v2217
        %v2387 = vpop.f32.mrb[0].mxu0
        %v2388 = vadd.f32 0.0, %v2387
        %v2389 = vpop.f32.mrb[0].mxu0
        %2390 = vmatprep.mubr.f32.mxu0 0.0
        %2391 = vmatmul.mubr.f32.gmra.mrb[0].mxu0 %v2220
        %v2392 = vpop.f32.mrb[0].mxu0
        %v2393 = vadd.f32 0.0, %v2392
        %v2394 = vpop.f32.mrb[0].mxu0
        %2395 = vmatprep.mubr.f32.mxu0 0.0
        %2396 = vmatmul.mubr.f32.gmra.mrb[0].mxu0 %v2223
        %v2397 = vpop.f32.mrb[0].mxu0
        %v2398 = vadd.f32 0.0, %v2397
        %v2399 = vpop.f32.mrb[0].mxu0
        %2400 = vmatprep.mubr.f32.mxu0 0.0
        %2401 = vmatmul.mubr.f32.gmra.mrb[0].mxu0 %v2226
        %v2402 = vpop.f32.mrb[0].mxu0
        %v2403 = vadd.f32 0.0, %v2402
        %v2404 = vpop.f32.mrb[0].mxu0
        %2405 = vmatprep.mubr.f32.mxu0 0.0
        %2406 = vmatmul.mubr.f32.gmra.mrb[0].mxu0 %v2229
        %v2407 = vpop.f32.mrb[0].mxu0
        %v2408 = vadd.f32 0.0, %v2407
        %v2409 = vpop.f32.mrb[0].mxu0
        %2410 = vmatprep.mubr.f32.mxu0 0.0
        %2411 = vmatmul.mubr.f32.gmra.mrb[0].mxu0 %v2232
        %v2412 = vpop.f32.mrb[0].mxu0
        %v2413 = vadd.f32 0.0, %v2412
        %v2414 = vpop.f32.mrb[0].mxu0
        %2415 = vmatprep.mubr.f32.mxu0 0.0
        %2416 = vmatmul.mubr.f32.gmra.mrb[0].mxu0 %v2235
        %v2417 = vpop.f32.mrb[0].mxu0
        %v2418 = vadd.f32 0.0, %v2417
        %v2419 = vpop.f32.mrb[0].mxu0
        %2420 = vmatprep.mubr.f32.mxu0 0.0
        %2421 = vmatmul.mubr.f32.gmra.mrb[0].mxu0 %v2238
        %v2422 = vpop.f32.mrb[0].mxu0
        %v2423 = vadd.f32 0.0, %v2422
        %v2424 = vpop.f32.mrb[0].mxu0
        %2425 = vmatprep.mubr.f32.mxu0 0.0
        %2426 = vmatmul.mubr.f32.gmra.mrb[0].mxu0 %v2241
        %v2427 = vpop.f32.mrb[0].mxu0
        %v2428 = vadd.f32 0.0, %v2427
        %v2429 = vpop.f32.mrb[0].mxu0
        %2430 = vmatprep.mubr.f32.mxu0 0.0
        %2431 = vmatmul.mubr.f32.gmra.mrb[0].mxu0 %v2244
        %v2432 = vpop.f32.mrb[0].mxu0
        %v2433 = vadd.f32 0.0, %v2432
        %v2434 = vpop.f32.mrb[0].mxu0
        %2435 = vmatprep.mubr.f32.mxu0 0.0
        %2436 = vmatmul.mubr.f32.gmra.mrb[0].mxu0 %v2247
        %v2437 = vpop.f32.mrb[0].mxu0
        %v2438 = vadd.f32 0.0, %v2437
        %v2439 = vpop.f32.mrb[0].mxu0
        %2440 = vmatprep.mubr.f32.mxu0 0.0
        %2441 = vmatmul.mubr.f32.gmra.mrb[0].mxu0 %v2250
        %v2442 = vpop.f32.mrb[0].mxu0
        %v2443 = vadd.f32 0.0, %v2442
        %v2444 = vpop.f32.mrb[0].mxu0
        %2445 = vmatprep.mubr.f32.mxu0 0.0
        %2446 = vmatmul.mubr.f32.gmra.mrb[0].mxu0 %v2253
        %v2447 = vpop.f32.mrb[0].mxu0
        %v2448 = vadd.f32 0.0, %v2447
        %v2449 = vpop.f32.mrb[0].mxu0
        %2450 = vmatprep.mubr.f32.mxu0 0.0
        %2451 = vmatmul.mubr.f32.gmra.mrb[0].mxu0 %v2256
        %v2452 = vpop.f32.mrb[0].mxu0
        %v2453 = vadd.f32 0.0, %v2452
        %v2454 = vpop.f32.mrb[0].mxu0
        %2455 = vmatprep.mubr.f32.mxu0 0.0
        %2456 = vmatmul.mubr.f32.gmra.mrb[0].mxu0 %v2259
        %v2457 = vpop.f32.mrb[0].mxu0
        %v2458 = vadd.f32 0.0, %v2457
        %v2459 = vpop.f32.mrb[0].mxu0
        %2460 = vmatprep.mubr.f32.mxu0 0.0
        %2461 = vmatmul.mubr.f32.gmra.mrb[0].mxu0 %v2262
        %v2462 = vpop.f32.mrb[0].mxu0
        %v2463 = vadd.f32 0.0, %v2462
        %v2464 = vpop.f32.mrb[0].mxu0
        %2465 = vmatprep.mubr.f32.mxu0 0.0
        %2466 = vmatmul.mubr.f32.gmra.mrb[0].mxu0 %v2265
        %v2467 = vpop.f32.mrb[0].mxu0
        %v2468 = vadd.f32 0.0, %v2467
        %v2469 = vpop.f32.mrb[0].mxu0
        %2470 = vmatprep.mubr.f32.mxu0 0.0
        %2471 = vmatmul.mubr.f32.gmra.mrb[0].mxu0 %v2268
        %v2472 = vpop.f32.mrb[0].mxu0
        %v2473 = vadd.f32 0.0, %v2472
        %v2474 = vpop.f32.mrb[0].mxu0
        %2475 = vmatprep.mubr.f32.mxu0 0.0
        %2476 = vmatmul.mubr.f32.gmra.mrb[0].mxu0 %v2271
        %v2477 = vpop.f32.mrb[0].mxu0
        %v2478 = vadd.f32 0.0, %v2477
        %v2479 = vpop.f32.mrb[0].mxu0
        %2480 = vmatprep.mubr.f32.mxu0 0.0
        %2481 = vmatmul.mubr.f32.gmra.mrb[0].mxu0 %v2274
        %v2482 = vpop.f32.mrb[0].mxu0
        %v2483 = vadd.f32 0.0, %v2482
        %v2484 = vpop.f32.mrb[0].mxu0
        %2485 = vmatprep.mubr.f32.mxu0 0.0
        %2486 = vmatmul.mubr.f32.gmra.mrb[0].mxu0 %v2277
        %v2487 = vpop.f32.mrb[0].mxu0
        %v2488 = vadd.f32 0.0, %v2487
        %v2489 = vpop.f32.mrb[0].mxu0
        %2490 = vmatprep.mubr.f32.mxu0 0.0
        %2491 = vmatmul.mubr.f32.gmra.mrb[0].mxu0 %v2280
        %v2492 = vpop.f32.mrb[0].mxu0
        %v2493 = vadd.f32 0.0, %v2492
        %v2494 = vpop.f32.mrb[0].mxu0
        %2495 = vmatprep.mubr.f32.mxu0 0.0
        %2496 = vmatmul.mubr.f32.gmra.mrb[0].mxu0 %v2283
        %v2497 = vpop.f32.mrb[0].mxu0
        %v2498 = vadd.f32 0.0, %v2497
        %v2499 = vpop.f32.mrb[0].mxu0
        %2500 = vmatprep.mubr.f32.mxu0 0.0
        %2501 = vmatmul.mubr.f32.gmra.mrb[0].mxu0 %v2286
        %v2502 = vpop.f32.mrb[0].mxu0
        %v2503 = vadd.f32 0.0, %v2502
        %v2504 = vpop.f32.mrb[0].mxu0
        %2505 = vmatprep.mubr.f32.mxu0 0.0
        %2506 = vmatmul.mubr.f32.gmra.mrb[0].mxu0 %v2289
        %v2507 = vpop.f32.mrb[0].mxu0
        %v2508 = vadd.f32 0.0, %v2507
        %v2509 = vpop.f32.mrb[0].mxu0
        %2510 = vmatprep.mubr.f32.mxu0 0.0
        %2511 = vmatmul.mubr.f32.gmra.mrb[0].mxu0 %v2292
        %v2512 = vpop.f32.mrb[0].mxu0
        %v2513 = vadd.f32 0.0, %v2512
        %v2514 = vpop.f32.mrb[0].mxu0
        %2515 = vmatprep.mubr.f32.mxu0 0.0
        %2516 = vmatmul.mubr.f32.gmra.mrb[0].mxu0 %v2295
        %v2517 = vpop.f32.mrb[0].mxu0
        %v2518 = vadd.f32 0.0, %v2517
        %v2519 = vpop.f32.mrb[0].mxu0
        %2520 = vmatprep.mubr.f32.mxu0 0.0
        %2521 = vmatmul.mubr.f32.gmra.mrb[0].mxu0 %v2298
        %v2522 = vpop.f32.mrb[0].mxu0
        %v2523 = vadd.f32 0.0, %v2522
        %v2524 = vpop.f32.mrb[0].mxu0
        %2525 = vmatprep.mubr.f32.mxu0 0.0
        %2526 = vmatmul.mubr.f32.gmra.mrb[0].mxu0 %v2301
        %v2527 = vpop.f32.mrb[0].mxu0
        %v2528 = vadd.f32 0.0, %v2527
        %v2529 = vpop.f32.mrb[0].mxu0
        %2530 = vdwg.mxu0
        %v2531 = vadd.f32 %v2141, %v2373
        %v2532 = vadd.f32 %v2142, %v2378
        %v2533 = vadd.f32 %v2143, %v2383
        %v2534 = vadd.f32 %v2144, %v2388
        %v2535 = vadd.f32 %v2145, %v2393
        %v2536 = vadd.f32 %v2146, %v2398
        %v2537 = vadd.f32 %v2147, %v2403
        %v2538 = vadd.f32 %v2148, %v2408
        %v2539 = vadd.f32 %v2149, %v2413
        %v2540 = vadd.f32 %v2150, %v2418
        %v2541 = vadd.f32 %v2151, %v2423
        %v2542 = vadd.f32 %v2152, %v2428
        %v2543 = vadd.f32 %v2153, %v2433
        %v2544 = vadd.f32 %v2154, %v2438
        %v2545 = vadd.f32 %v2155, %v2443
        %v2546 = vadd.f32 %v2156, %v2448
        %v2547 = vadd.f32 %v2157, %v2453
        %v2548 = vadd.f32 %v2158, %v2458
        %v2549 = vadd.f32 %v2159, %v2463
        %v2550 = vadd.f32 %v2160, %v2468
        %v2551 = vadd.f32 %v2161, %v2473
        %v2552 = vadd.f32 %v2162, %v2478
        %v2553 = vadd.f32 %v2163, %v2483
        %v2554 = vadd.f32 %v2164, %v2488
        %v2555 = vadd.f32 %v2165, %v2493
        %v2556 = vadd.f32 %v2166, %v2498
        %v2557 = vadd.f32 %v2167, %v2503
        %v2558 = vadd.f32 %v2168, %v2508
        %v2559 = vadd.f32 %v2169, %v2513
        %v2560 = vadd.f32 %v2170, %v2518
        %v2561 = vadd.f32 %v2171, %v2523
        %v2562 = vadd.f32 %v2172, %v2528
        %s2563 = scalar_lea.vmem %s206, 48
        %v2564 = vld [vmem:[%s2563] sm:$0xff]
        %v2565 = vld [vmem:[%s2563 + $0x8] sm:$0xff]
        %v2566 = vld [vmem:[%s2563 + $0x18] sm:$0xff]
        %v2567 = vld [vmem:[%s2563 + $0x20] sm:$0xff]
        %v2568 = vld [vmem:[%s2563 + $0x30] sm:$0xff]
        %v2569 = vld [vmem:[%s2563 + $0x38] sm:$0xff]
        %v2570 = vld [vmem:[%s2563 + $0x48] sm:$0xff]
        %v2571 = vld [vmem:[%s2563 + $0x50] sm:$0xff]
        %v2572 = vld [vmem:[%s2563 + $0x60] sm:$0xff]
        %v2573 = vld [vmem:[%s2563 + $0x68] sm:$0xff]
        %v2574 = vld [vmem:[%s2563 + $0x78] sm:$0xff]
        %v2575 = vld [vmem:[%s2563 + $0x80] sm:$0xff]
        %v2576 = vld [vmem:[%s2563 + $0x90] sm:$0xff]
        %v2577 = vld [vmem:[%s2563 + $0x98] sm:$0xff]
        %v2578 = vld [vmem:[%s2563 + $0xa8] sm:$0xff]
        %v2579 = vld [vmem:[%s2563 + $0xb0] sm:$0xff]
        %v2580 = vld [vmem:[%s2563 + $0xc0] sm:$0xff]
        %v2581 = vld [vmem:[%s2563 + $0xc8] sm:$0xff]
        %v2582 = vld [vmem:[%s2563 + $0xd8] sm:$0xff]
        %v2583 = vld [vmem:[%s2563 + $0xe0] sm:$0xff]
        %v2584 = vld [vmem:[%s2563 + $0xf0] sm:$0xff]
        %v2585 = vld [vmem:[%s2563 + $0xf8] sm:$0xff]
        %v2586 = vld [vmem:[%s2563 + $0x108] sm:$0xff]
        %v2587 = vld [vmem:[%s2563 + $0x110] sm:$0xff]
        %v2588 = vld [vmem:[%s2563 + $0x120] sm:$0xff]
        %v2589 = vld [vmem:[%s2563 + $0x128] sm:$0xff]
        %v2590 = vld [vmem:[%s2563 + $0x138] sm:$0xff]
        %v2591 = vld [vmem:[%s2563 + $0x140] sm:$0xff]
        %v2592 = vld [vmem:[%s2563 + $0x150] sm:$0xff]
        %v2593 = vld [vmem:[%s2563 + $0x158] sm:$0xff]
        %v2594 = vld [vmem:[%s2563 + $0x168] sm:$0xff]
        %v2595 = vld [vmem:[%s2563 + $0x170] sm:$0xff]
        %s2596 = scalar_lea.vmem %s210, 24
        %v2597 = vld [vmem:[%s2596] sm:$0xf]
        %v2599 = vsel %vm254, %v2564, 0
        %v2602 = vsel %vm254, %v2565, 0
        %v2605 = vsel %vm254, %v2566, 0
        %v2608 = vsel %vm254, %v2567, 0
        %v2611 = vsel %vm254, %v2568, 0
        %v2614 = vsel %vm254, %v2569, 0
        %v2617 = vsel %vm254, %v2570, 0
        %v2620 = vsel %vm254, %v2571, 0
        %v2623 = vsel %vm254, %v2572, 0
        %v2626 = vsel %vm254, %v2573, 0
        %v2629 = vsel %vm254, %v2574, 0
        %v2632 = vsel %vm254, %v2575, 0
        %v2635 = vsel %vm254, %v2576, 0
        %v2638 = vsel %vm254, %v2577, 0
        %v2641 = vsel %vm254, %v2578, 0
        %v2644 = vsel %vm254, %v2579, 0
        %v2647 = vsel %vm254, %v2580, 0
        %v2650 = vsel %vm254, %v2581, 0
        %v2653 = vsel %vm254, %v2582, 0
        %v2656 = vsel %vm254, %v2583, 0
        %v2659 = vsel %vm254, %v2584, 0
        %v2662 = vsel %vm254, %v2585, 0
        %v2665 = vsel %vm254, %v2586, 0
        %v2668 = vsel %vm254, %v2587, 0
        %v2671 = vsel %vm254, %v2588, 0
        %v2674 = vsel %vm254, %v2589, 0
        %v2677 = vsel %vm254, %v2590, 0
        %v2680 = vsel %vm254, %v2591, 0
        %v2683 = vsel %vm254, %v2592, 0
        %v2686 = vsel %vm254, %v2593, 0
        %v2689 = vsel %vm254, %v2594, 0
        %v2692 = vsel %vm254, %v2595, 0
        %v2695 = vsel %vm351, %v2597, 0
        %2697 = vmatprep.subr.mxu0 0.0
        %2698 = vmatpush1.msra.mxu0 %v2695
        %2699 = vmatprep.subr.mxu0 0.0
        %2700 = vmatpush1.msra.mxu0 0.0
        %2701 = vmatprep.subr.mxu0 0.0
        %2702 = vmatpush1.msra.mxu0 0.0
        %2703 = vmatprep.subr.mxu0 0.0
        %2704 = vmatpush1.msra.mxu0 0.0
        %2705 = vmatprep.subr.mxu0 0.0
        %2706 = vmatpush1.msra.mxu0 0.0
        %2707 = vmatprep.subr.mxu0 0.0
        %2708 = vmatpush1.msra.mxu0 0.0
        %2709 = vmatprep.subr.mxu0 0.0
        %2710 = vmatpush1.msra.mxu0 0.0
        %2711 = vmatprep.subr.mxu0 0.0
        %2712 = vmatpush1.msra.mxu0 0.0
        %2713 = vmatprep.subr.mxu0 0.0
        %2714 = vmatpush1.msra.mxu0 0.0
        %2715 = vmatprep.subr.mxu0 0.0
        %2716 = vmatpush1.msra.mxu0 0.0
        %2717 = vmatprep.subr.mxu0 0.0
        %2718 = vmatpush1.msra.mxu0 0.0
        %2719 = vmatprep.subr.mxu0 0.0
        %2720 = vmatpush1.msra.mxu0 0.0
        %2721 = vmatprep.subr.mxu0 0.0
        %2722 = vmatpush1.msra.mxu0 0.0
        %2723 = vmatprep.subr.mxu0 0.0
        %2724 = vmatpush1.msra.mxu0 0.0
        %2725 = vmatprep.subr.mxu0 0.0
        %2726 = vmatpush1.msra.mxu0 0.0
        %2727 = vmatprep.subr.mxu0 0.0
        %2728 = vmatpush1.msra.mxu0 0.0
        %2729 = vmatprep.subr.mxu0 0.0
        %2730 = vmatpush1.msra.mxu0 0.0
        %2731 = vmatprep.subr.mxu0 0.0
        %2732 = vmatpush1.msra.mxu0 0.0
        %2733 = vmatprep.subr.mxu0 0.0
        %2734 = vmatpush1.msra.mxu0 0.0
        %2735 = vmatprep.subr.mxu0 0.0
        %2736 = vmatpush1.msra.mxu0 0.0
        %2737 = vmatprep.subr.mxu0 0.0
        %2738 = vmatpush1.msra.mxu0 0.0
        %2739 = vmatprep.subr.mxu0 0.0
        %2740 = vmatpush1.msra.mxu0 0.0
        %2741 = vmatprep.subr.mxu0 0.0
        %2742 = vmatpush1.msra.mxu0 0.0
        %2743 = vmatprep.subr.mxu0 0.0
        %2744 = vmatpush1.msra.mxu0 0.0
        %2745 = vmatprep.subr.mxu0 0.0
        %2746 = vmatpush1.msra.mxu0 0.0
        %2747 = vmatprep.subr.mxu0 0.0
        %2748 = vmatpush1.msra.mxu0 0.0
        %2749 = vmatprep.subr.mxu0 0.0
        %2750 = vmatpush1.msra.mxu0 0.0
        %2751 = vmatprep.subr.mxu0 0.0
        %2752 = vmatpush1.msra.mxu0 0.0
        %2753 = vmatprep.subr.mxu0 0.0
        %2754 = vmatpush1.msra.mxu0 0.0
        %2755 = vmatprep.subr.mxu0 0.0
        %2756 = vmatpush1.msra.mxu0 0.0
        %2757 = vmatprep.subr.mxu0 0.0
        %2758 = vmatpush1.msra.mxu0 0.0
        %2759 = vmatprep.subr.mxu0 0.0
        %2760 = vmatpush1.msra.mxu0 0.0
        %2761 = vmatprep.mubr.f32.mxu0 0.0
        %2762 = vmatmul.mubr.f32.gmra.mrb[0].mxu0 %v2599
        %v2763 = vpop.f32.mrb[0].mxu0
        %v2764 = vadd.f32 0.0, %v2763
        %v2765 = vpop.f32.mrb[0].mxu0
        %2766 = vmatprep.mubr.f32.mxu0 0.0
        %2767 = vmatmul.mubr.f32.gmra.mrb[0].mxu0 %v2602
        %v2768 = vpop.f32.mrb[0].mxu0
        %v2769 = vadd.f32 0.0, %v2768
        %v2770 = vpop.f32.mrb[0].mxu0
        %2771 = vmatprep.mubr.f32.mxu0 0.0
        %2772 = vmatmul.mubr.f32.gmra.mrb[0].mxu0 %v2605
        %v2773 = vpop.f32.mrb[0].mxu0
        %v2774 = vadd.f32 0.0, %v2773
        %v2775 = vpop.f32.mrb[0].mxu0
        %2776 = vmatprep.mubr.f32.mxu0 0.0
        %2777 = vmatmul.mubr.f32.gmra.mrb[0].mxu0 %v2608
        %v2778 = vpop.f32.mrb[0].mxu0
        %v2779 = vadd.f32 0.0, %v2778
        %v2780 = vpop.f32.mrb[0].mxu0
        %2781 = vmatprep.mubr.f32.mxu0 0.0
        %2782 = vmatmul.mubr.f32.gmra.mrb[0].mxu0 %v2611
        %v2783 = vpop.f32.mrb[0].mxu0
        %v2784 = vadd.f32 0.0, %v2783
        %v2785 = vpop.f32.mrb[0].mxu0
        %2786 = vmatprep.mubr.f32.mxu0 0.0
        %2787 = vmatmul.mubr.f32.gmra.mrb[0].mxu0 %v2614
        %v2788 = vpop.f32.mrb[0].mxu0
        %v2789 = vadd.f32 0.0, %v2788
        %v2790 = vpop.f32.mrb[0].mxu0
        %2791 = vmatprep.mubr.f32.mxu0 0.0
        %2792 = vmatmul.mubr.f32.gmra.mrb[0].mxu0 %v2617
        %v2793 = vpop.f32.mrb[0].mxu0
        %v2794 = vadd.f32 0.0, %v2793
        %v2795 = vpop.f32.mrb[0].mxu0
        %2796 = vmatprep.mubr.f32.mxu0 0.0
        %2797 = vmatmul.mubr.f32.gmra.mrb[0].mxu0 %v2620
        %v2798 = vpop.f32.mrb[0].mxu0
        %v2799 = vadd.f32 0.0, %v2798
        %v2800 = vpop.f32.mrb[0].mxu0
        %2801 = vmatprep.mubr.f32.mxu0 0.0
        %2802 = vmatmul.mubr.f32.gmra.mrb[0].mxu0 %v2623
        %v2803 = vpop.f32.mrb[0].mxu0
        %v2804 = vadd.f32 0.0, %v2803
        %v2805 = vpop.f32.mrb[0].mxu0
        %2806 = vmatprep.mubr.f32.mxu0 0.0
        %2807 = vmatmul.mubr.f32.gmra.mrb[0].mxu0 %v2626
        %v2808 = vpop.f32.mrb[0].mxu0
        %v2809 = vadd.f32 0.0, %v2808
        %v2810 = vpop.f32.mrb[0].mxu0
        %2811 = vmatprep.mubr.f32.mxu0 0.0
        %2812 = vmatmul.mubr.f32.gmra.mrb[0].mxu0 %v2629
        %v2813 = vpop.f32.mrb[0].mxu0
        %v2814 = vadd.f32 0.0, %v2813
        %v2815 = vpop.f32.mrb[0].mxu0
        %2816 = vmatprep.mubr.f32.mxu0 0.0
        %2817 = vmatmul.mubr.f32.gmra.mrb[0].mxu0 %v2632
        %v2818 = vpop.f32.mrb[0].mxu0
        %v2819 = vadd.f32 0.0, %v2818
        %v2820 = vpop.f32.mrb[0].mxu0
        %2821 = vmatprep.mubr.f32.mxu0 0.0
        %2822 = vmatmul.mubr.f32.gmra.mrb[0].mxu0 %v2635
        %v2823 = vpop.f32.mrb[0].mxu0
        %v2824 = vadd.f32 0.0, %v2823
        %v2825 = vpop.f32.mrb[0].mxu0
        %2826 = vmatprep.mubr.f32.mxu0 0.0
        %2827 = vmatmul.mubr.f32.gmra.mrb[0].mxu0 %v2638
        %v2828 = vpop.f32.mrb[0].mxu0
        %v2829 = vadd.f32 0.0, %v2828
        %v2830 = vpop.f32.mrb[0].mxu0
        %2831 = vmatprep.mubr.f32.mxu0 0.0
        %2832 = vmatmul.mubr.f32.gmra.mrb[0].mxu0 %v2641
        %v2833 = vpop.f32.mrb[0].mxu0
        %v2834 = vadd.f32 0.0, %v2833
        %v2835 = vpop.f32.mrb[0].mxu0
        %2836 = vmatprep.mubr.f32.mxu0 0.0
        %2837 = vmatmul.mubr.f32.gmra.mrb[0].mxu0 %v2644
        %v2838 = vpop.f32.mrb[0].mxu0
        %v2839 = vadd.f32 0.0, %v2838
        %v2840 = vpop.f32.mrb[0].mxu0
        %2841 = vmatprep.mubr.f32.mxu0 0.0
        %2842 = vmatmul.mubr.f32.gmra.mrb[0].mxu0 %v2647
        %v2843 = vpop.f32.mrb[0].mxu0
        %v2844 = vadd.f32 0.0, %v2843
        %v2845 = vpop.f32.mrb[0].mxu0
        %2846 = vmatprep.mubr.f32.mxu0 0.0
        %2847 = vmatmul.mubr.f32.gmra.mrb[0].mxu0 %v2650
        %v2848 = vpop.f32.mrb[0].mxu0
        %v2849 = vadd.f32 0.0, %v2848
        %v2850 = vpop.f32.mrb[0].mxu0
        %2851 = vmatprep.mubr.f32.mxu0 0.0
        %2852 = vmatmul.mubr.f32.gmra.mrb[0].mxu0 %v2653
        %v2853 = vpop.f32.mrb[0].mxu0
        %v2854 = vadd.f32 0.0, %v2853
        %v2855 = vpop.f32.mrb[0].mxu0
        %2856 = vmatprep.mubr.f32.mxu0 0.0
        %2857 = vmatmul.mubr.f32.gmra.mrb[0].mxu0 %v2656
        %v2858 = vpop.f32.mrb[0].mxu0
        %v2859 = vadd.f32 0.0, %v2858
        %v2860 = vpop.f32.mrb[0].mxu0
        %2861 = vmatprep.mubr.f32.mxu0 0.0
        %2862 = vmatmul.mubr.f32.gmra.mrb[0].mxu0 %v2659
        %v2863 = vpop.f32.mrb[0].mxu0
        %v2864 = vadd.f32 0.0, %v2863
        %v2865 = vpop.f32.mrb[0].mxu0
        %2866 = vmatprep.mubr.f32.mxu0 0.0
        %2867 = vmatmul.mubr.f32.gmra.mrb[0].mxu0 %v2662
        %v2868 = vpop.f32.mrb[0].mxu0
        %v2869 = vadd.f32 0.0, %v2868
        %v2870 = vpop.f32.mrb[0].mxu0
        %2871 = vmatprep.mubr.f32.mxu0 0.0
        %2872 = vmatmul.mubr.f32.gmra.mrb[0].mxu0 %v2665
        %v2873 = vpop.f32.mrb[0].mxu0
        %v2874 = vadd.f32 0.0, %v2873
        %v2875 = vpop.f32.mrb[0].mxu0
        %2876 = vmatprep.mubr.f32.mxu0 0.0
        %2877 = vmatmul.mubr.f32.gmra.mrb[0].mxu0 %v2668
        %v2878 = vpop.f32.mrb[0].mxu0
        %v2879 = vadd.f32 0.0, %v2878
        %v2880 = vpop.f32.mrb[0].mxu0
        %2881 = vmatprep.mubr.f32.mxu0 0.0
        %2882 = vmatmul.mubr.f32.gmra.mrb[0].mxu0 %v2671
        %v2883 = vpop.f32.mrb[0].mxu0
        %v2884 = vadd.f32 0.0, %v2883
        %v2885 = vpop.f32.mrb[0].mxu0
        %2886 = vmatprep.mubr.f32.mxu0 0.0
        %2887 = vmatmul.mubr.f32.gmra.mrb[0].mxu0 %v2674
        %v2888 = vpop.f32.mrb[0].mxu0
        %v2889 = vadd.f32 0.0, %v2888
        %v2890 = vpop.f32.mrb[0].mxu0
        %2891 = vmatprep.mubr.f32.mxu0 0.0
        %2892 = vmatmul.mubr.f32.gmra.mrb[0].mxu0 %v2677
        %v2893 = vpop.f32.mrb[0].mxu0
        %v2894 = vadd.f32 0.0, %v2893
        %v2895 = vpop.f32.mrb[0].mxu0
        %2896 = vmatprep.mubr.f32.mxu0 0.0
        %2897 = vmatmul.mubr.f32.gmra.mrb[0].mxu0 %v2680
        %v2898 = vpop.f32.mrb[0].mxu0
        %v2899 = vadd.f32 0.0, %v2898
        %v2900 = vpop.f32.mrb[0].mxu0
        %2901 = vmatprep.mubr.f32.mxu0 0.0
        %2902 = vmatmul.mubr.f32.gmra.mrb[0].mxu0 %v2683
        %v2903 = vpop.f32.mrb[0].mxu0
        %v2904 = vadd.f32 0.0, %v2903
        %v2905 = vpop.f32.mrb[0].mxu0
        %2906 = vmatprep.mubr.f32.mxu0 0.0
        %2907 = vmatmul.mubr.f32.gmra.mrb[0].mxu0 %v2686
        %v2908 = vpop.f32.mrb[0].mxu0
        %v2909 = vadd.f32 0.0, %v2908
        %v2910 = vpop.f32.mrb[0].mxu0
        %2911 = vmatprep.mubr.f32.mxu0 0.0
        %2912 = vmatmul.mubr.f32.gmra.mrb[0].mxu0 %v2689
        %v2913 = vpop.f32.mrb[0].mxu0
        %v2914 = vadd.f32 0.0, %v2913
        %v2915 = vpop.f32.mrb[0].mxu0
        %2916 = vmatprep.mubr.f32.mxu0 0.0
        %2917 = vmatmul.mubr.f32.gmra.mrb[0].mxu0 %v2692
        %v2918 = vpop.f32.mrb[0].mxu0
        %v2919 = vadd.f32 0.0, %v2918
        %v2920 = vpop.f32.mrb[0].mxu0
        %2921 = vdwg.mxu0
        %v2922 = vadd.f32 %v2531, %v2764
        %v2923 = vadd.f32 %v2532, %v2769
        %v2924 = vadd.f32 %v2533, %v2774
        %v2925 = vadd.f32 %v2534, %v2779
        %v2926 = vadd.f32 %v2535, %v2784
        %v2927 = vadd.f32 %v2536, %v2789
        %v2928 = vadd.f32 %v2537, %v2794
        %v2929 = vadd.f32 %v2538, %v2799
        %v2930 = vadd.f32 %v2539, %v2804
        %v2931 = vadd.f32 %v2540, %v2809
        %v2932 = vadd.f32 %v2541, %v2814
        %v2933 = vadd.f32 %v2542, %v2819
        %v2934 = vadd.f32 %v2543, %v2824
        %v2935 = vadd.f32 %v2544, %v2829
        %v2936 = vadd.f32 %v2545, %v2834
        %v2937 = vadd.f32 %v2546, %v2839
        %v2938 = vadd.f32 %v2547, %v2844
        %v2939 = vadd.f32 %v2548, %v2849
        %v2940 = vadd.f32 %v2549, %v2854
        %v2941 = vadd.f32 %v2550, %v2859
        %v2942 = vadd.f32 %v2551, %v2864
        %v2943 = vadd.f32 %v2552, %v2869
        %v2944 = vadd.f32 %v2553, %v2874
        %v2945 = vadd.f32 %v2554, %v2879
        %v2946 = vadd.f32 %v2555, %v2884
        %v2947 = vadd.f32 %v2556, %v2889
        %v2948 = vadd.f32 %v2557, %v2894
        %v2949 = vadd.f32 %v2558, %v2899
        %v2950 = vadd.f32 %v2559, %v2904
        %v2951 = vadd.f32 %v2560, %v2909
        %v2952 = vadd.f32 %v2561, %v2914
        %v2953 = vadd.f32 %v2562, %v2919
        %v2954 = vld [vmem:[%s2563 + $0x1] sm:$0xff]
        %v2955 = vld [vmem:[%s2563 + $0x9] sm:$0xff]
        %v2956 = vld [vmem:[%s2563 + $0x19] sm:$0xff]
        %v2957 = vld [vmem:[%s2563 + $0x21] sm:$0xff]
        %v2958 = vld [vmem:[%s2563 + $0x31] sm:$0xff]
        %v2959 = vld [vmem:[%s2563 + $0x39] sm:$0xff]
        %v2960 = vld [vmem:[%s2563 + $0x49] sm:$0xff]
        %v2961 = vld [vmem:[%s2563 + $0x51] sm:$0xff]
        %v2962 = vld [vmem:[%s2563 + $0x61] sm:$0xff]
        %v2963 = vld [vmem:[%s2563 + $0x69] sm:$0xff]
        %v2964 = vld [vmem:[%s2563 + $0x79] sm:$0xff]
        %v2965 = vld [vmem:[%s2563 + $0x81] sm:$0xff]
        %v2966 = vld [vmem:[%s2563 + $0x91] sm:$0xff]
        %v2967 = vld [vmem:[%s2563 + $0x99] sm:$0xff]
        %v2968 = vld [vmem:[%s2563 + $0xa9] sm:$0xff]
        %v2969 = vld [vmem:[%s2563 + $0xb1] sm:$0xff]
        %v2970 = vld [vmem:[%s2563 + $0xc1] sm:$0xff]
        %v2971 = vld [vmem:[%s2563 + $0xc9] sm:$0xff]
        %v2972 = vld [vmem:[%s2563 + $0xd9] sm:$0xff]
        %v2973 = vld [vmem:[%s2563 + $0xe1] sm:$0xff]
        %v2974 = vld [vmem:[%s2563 + $0xf1] sm:$0xff]
        %v2975 = vld [vmem:[%s2563 + $0xf9] sm:$0xff]
        %v2976 = vld [vmem:[%s2563 + $0x109] sm:$0xff]
        %v2977 = vld [vmem:[%s2563 + $0x111] sm:$0xff]
        %v2978 = vld [vmem:[%s2563 + $0x121] sm:$0xff]
        %v2979 = vld [vmem:[%s2563 + $0x129] sm:$0xff]
        %v2980 = vld [vmem:[%s2563 + $0x139] sm:$0xff]
        %v2981 = vld [vmem:[%s2563 + $0x141] sm:$0xff]
        %v2982 = vld [vmem:[%s2563 + $0x151] sm:$0xff]
        %v2983 = vld [vmem:[%s2563 + $0x159] sm:$0xff]
        %v2984 = vld [vmem:[%s2563 + $0x169] sm:$0xff]
        %v2985 = vld [vmem:[%s2563 + $0x171] sm:$0xff]
        %s2986 = scalar_lea.vmem %s210, 28
        %v2987 = vld [vmem:[%s2986] sm:$0xf]
        %v2989 = vsel %vm254, %v2954, 0
        %v2992 = vsel %vm254, %v2955, 0
        %v2995 = vsel %vm254, %v2956, 0
        %v2998 = vsel %vm254, %v2957, 0
        %v3001 = vsel %vm254, %v2958, 0
        %v3004 = vsel %vm254, %v2959, 0
        %v3007 = vsel %vm254, %v2960, 0
        %v3010 = vsel %vm254, %v2961, 0
        %v3013 = vsel %vm254, %v2962, 0
        %v3016 = vsel %vm254, %v2963, 0
        %v3019 = vsel %vm254, %v2964, 0
        %v3022 = vsel %vm254, %v2965, 0
        %v3025 = vsel %vm254, %v2966, 0
        %v3028 = vsel %vm254, %v2967, 0
        %v3031 = vsel %vm254, %v2968, 0
        %v3034 = vsel %vm254, %v2969, 0
        %v3037 = vsel %vm254, %v2970, 0
        %v3040 = vsel %vm254, %v2971, 0
        %v3043 = vsel %vm254, %v2972, 0
        %v3046 = vsel %vm254, %v2973, 0
        %v3049 = vsel %vm254, %v2974, 0
        %v3052 = vsel %vm254, %v2975, 0
        %v3055 = vsel %vm254, %v2976, 0
        %v3058 = vsel %vm254, %v2977, 0
        %v3061 = vsel %vm254, %v2978, 0
        %v3064 = vsel %vm254, %v2979, 0
        %v3067 = vsel %vm254, %v2980, 0
        %v3070 = vsel %vm254, %v2981, 0
        %v3073 = vsel %vm254, %v2982, 0
        %v3076 = vsel %vm254, %v2983, 0
        %v3079 = vsel %vm254, %v2984, 0
        %v3082 = vsel %vm254, %v2985, 0
        %v3085 = vsel %vm351, %v2987, 0
        %3087 = vmatprep.subr.mxu0 0.0
        %3088 = vmatpush1.msra.mxu0 %v3085
        %3089 = vmatprep.subr.mxu0 0.0
        %3090 = vmatpush1.msra.mxu0 0.0
        %3091 = vmatprep.subr.mxu0 0.0
        %3092 = vmatpush1.msra.mxu0 0.0
        %3093 = vmatprep.subr.mxu0 0.0
        %3094 = vmatpush1.msra.mxu0 0.0
        %3095 = vmatprep.subr.mxu0 0.0
        %3096 = vmatpush1.msra.mxu0 0.0
        %3097 = vmatprep.subr.mxu0 0.0
        %3098 = vmatpush1.msra.mxu0 0.0
        %3099 = vmatprep.subr.mxu0 0.0
        %3100 = vmatpush1.msra.mxu0 0.0
        %3101 = vmatprep.subr.mxu0 0.0
        %3102 = vmatpush1.msra.mxu0 0.0
        %3103 = vmatprep.subr.mxu0 0.0
        %3104 = vmatpush1.msra.mxu0 0.0
        %3105 = vmatprep.subr.mxu0 0.0
        %3106 = vmatpush1.msra.mxu0 0.0
        %3107 = vmatprep.subr.mxu0 0.0
        %3108 = vmatpush1.msra.mxu0 0.0
        %3109 = vmatprep.subr.mxu0 0.0
        %3110 = vmatpush1.msra.mxu0 0.0
        %3111 = vmatprep.subr.mxu0 0.0
        %3112 = vmatpush1.msra.mxu0 0.0
        %3113 = vmatprep.subr.mxu0 0.0
        %3114 = vmatpush1.msra.mxu0 0.0
        %3115 = vmatprep.subr.mxu0 0.0
        %3116 = vmatpush1.msra.mxu0 0.0
        %3117 = vmatprep.subr.mxu0 0.0
        %3118 = vmatpush1.msra.mxu0 0.0
        %3119 = vmatprep.subr.mxu0 0.0
        %3120 = vmatpush1.msra.mxu0 0.0
        %3121 = vmatprep.subr.mxu0 0.0
        %3122 = vmatpush1.msra.mxu0 0.0
        %3123 = vmatprep.subr.mxu0 0.0
        %3124 = vmatpush1.msra.mxu0 0.0
        %3125 = vmatprep.subr.mxu0 0.0
        %3126 = vmatpush1.msra.mxu0 0.0
        %3127 = vmatprep.subr.mxu0 0.0
        %3128 = vmatpush1.msra.mxu0 0.0
        %3129 = vmatprep.subr.mxu0 0.0
        %3130 = vmatpush1.msra.mxu0 0.0
        %3131 = vmatprep.subr.mxu0 0.0
        %3132 = vmatpush1.msra.mxu0 0.0
        %3133 = vmatprep.subr.mxu0 0.0
        %3134 = vmatpush1.msra.mxu0 0.0
        %3135 = vmatprep.subr.mxu0 0.0
        %3136 = vmatpush1.msra.mxu0 0.0
        %3137 = vmatprep.subr.mxu0 0.0
        %3138 = vmatpush1.msra.mxu0 0.0
        %3139 = vmatprep.subr.mxu0 0.0
        %3140 = vmatpush1.msra.mxu0 0.0
        %3141 = vmatprep.subr.mxu0 0.0
        %3142 = vmatpush1.msra.mxu0 0.0
        %3143 = vmatprep.subr.mxu0 0.0
        %3144 = vmatpush1.msra.mxu0 0.0
        %3145 = vmatprep.subr.mxu0 0.0
        %3146 = vmatpush1.msra.mxu0 0.0
        %3147 = vmatprep.subr.mxu0 0.0
        %3148 = vmatpush1.msra.mxu0 0.0
        %3149 = vmatprep.subr.mxu0 0.0
        %3150 = vmatpush1.msra.mxu0 0.0
        %3151 = vmatprep.mubr.f32.mxu0 0.0
        %3152 = vmatmul.mubr.f32.gmra.mrb[0].mxu0 %v2989
        %v3153 = vpop.f32.mrb[0].mxu0
        %v3154 = vadd.f32 0.0, %v3153
        %v3155 = vpop.f32.mrb[0].mxu0
        %3156 = vmatprep.mubr.f32.mxu0 0.0
        %3157 = vmatmul.mubr.f32.gmra.mrb[0].mxu0 %v2992
        %v3158 = vpop.f32.mrb[0].mxu0
        %v3159 = vadd.f32 0.0, %v3158
        %v3160 = vpop.f32.mrb[0].mxu0
        %3161 = vmatprep.mubr.f32.mxu0 0.0
        %3162 = vmatmul.mubr.f32.gmra.mrb[0].mxu0 %v2995
        %v3163 = vpop.f32.mrb[0].mxu0
        %v3164 = vadd.f32 0.0, %v3163
        %v3165 = vpop.f32.mrb[0].mxu0
        %3166 = vmatprep.mubr.f32.mxu0 0.0
        %3167 = vmatmul.mubr.f32.gmra.mrb[0].mxu0 %v2998
        %v3168 = vpop.f32.mrb[0].mxu0
        %v3169 = vadd.f32 0.0, %v3168
        %v3170 = vpop.f32.mrb[0].mxu0
        %3171 = vmatprep.mubr.f32.mxu0 0.0
        %3172 = vmatmul.mubr.f32.gmra.mrb[0].mxu0 %v3001
        %v3173 = vpop.f32.mrb[0].mxu0
        %v3174 = vadd.f32 0.0, %v3173
        %v3175 = vpop.f32.mrb[0].mxu0
        %3176 = vmatprep.mubr.f32.mxu0 0.0
        %3177 = vmatmul.mubr.f32.gmra.mrb[0].mxu0 %v3004
        %v3178 = vpop.f32.mrb[0].mxu0
        %v3179 = vadd.f32 0.0, %v3178
        %v3180 = vpop.f32.mrb[0].mxu0
        %3181 = vmatprep.mubr.f32.mxu0 0.0
        %3182 = vmatmul.mubr.f32.gmra.mrb[0].mxu0 %v3007
        %v3183 = vpop.f32.mrb[0].mxu0
        %v3184 = vadd.f32 0.0, %v3183
        %v3185 = vpop.f32.mrb[0].mxu0
        %3186 = vmatprep.mubr.f32.mxu0 0.0
        %3187 = vmatmul.mubr.f32.gmra.mrb[0].mxu0 %v3010
        %v3188 = vpop.f32.mrb[0].mxu0
        %v3189 = vadd.f32 0.0, %v3188
        %v3190 = vpop.f32.mrb[0].mxu0
        %3191 = vmatprep.mubr.f32.mxu0 0.0
        %3192 = vmatmul.mubr.f32.gmra.mrb[0].mxu0 %v3013
        %v3193 = vpop.f32.mrb[0].mxu0
        %v3194 = vadd.f32 0.0, %v3193
        %v3195 = vpop.f32.mrb[0].mxu0
        %3196 = vmatprep.mubr.f32.mxu0 0.0
        %3197 = vmatmul.mubr.f32.gmra.mrb[0].mxu0 %v3016
        %v3198 = vpop.f32.mrb[0].mxu0
        %v3199 = vadd.f32 0.0, %v3198
        %v3200 = vpop.f32.mrb[0].mxu0
        %3201 = vmatprep.mubr.f32.mxu0 0.0
        %3202 = vmatmul.mubr.f32.gmra.mrb[0].mxu0 %v3019
        %v3203 = vpop.f32.mrb[0].mxu0
        %v3204 = vadd.f32 0.0, %v3203
        %v3205 = vpop.f32.mrb[0].mxu0
        %3206 = vmatprep.mubr.f32.mxu0 0.0
        %3207 = vmatmul.mubr.f32.gmra.mrb[0].mxu0 %v3022
        %v3208 = vpop.f32.mrb[0].mxu0
        %v3209 = vadd.f32 0.0, %v3208
        %v3210 = vpop.f32.mrb[0].mxu0
        %3211 = vmatprep.mubr.f32.mxu0 0.0
        %3212 = vmatmul.mubr.f32.gmra.mrb[0].mxu0 %v3025
        %v3213 = vpop.f32.mrb[0].mxu0
        %v3214 = vadd.f32 0.0, %v3213
        %v3215 = vpop.f32.mrb[0].mxu0
        %3216 = vmatprep.mubr.f32.mxu0 0.0
        %3217 = vmatmul.mubr.f32.gmra.mrb[0].mxu0 %v3028
        %v3218 = vpop.f32.mrb[0].mxu0
        %v3219 = vadd.f32 0.0, %v3218
        %v3220 = vpop.f32.mrb[0].mxu0
        %3221 = vmatprep.mubr.f32.mxu0 0.0
        %3222 = vmatmul.mubr.f32.gmra.mrb[0].mxu0 %v3031
        %v3223 = vpop.f32.mrb[0].mxu0
        %v3224 = vadd.f32 0.0, %v3223
        %v3225 = vpop.f32.mrb[0].mxu0
        %3226 = vmatprep.mubr.f32.mxu0 0.0
        %3227 = vmatmul.mubr.f32.gmra.mrb[0].mxu0 %v3034
        %v3228 = vpop.f32.mrb[0].mxu0
        %v3229 = vadd.f32 0.0, %v3228
        %v3230 = vpop.f32.mrb[0].mxu0
        %3231 = vmatprep.mubr.f32.mxu0 0.0
        %3232 = vmatmul.mubr.f32.gmra.mrb[0].mxu0 %v3037
        %v3233 = vpop.f32.mrb[0].mxu0
        %v3234 = vadd.f32 0.0, %v3233
        %v3235 = vpop.f32.mrb[0].mxu0
        %3236 = vmatprep.mubr.f32.mxu0 0.0
        %3237 = vmatmul.mubr.f32.gmra.mrb[0].mxu0 %v3040
        %v3238 = vpop.f32.mrb[0].mxu0
        %v3239 = vadd.f32 0.0, %v3238
        %v3240 = vpop.f32.mrb[0].mxu0
        %3241 = vmatprep.mubr.f32.mxu0 0.0
        %3242 = vmatmul.mubr.f32.gmra.mrb[0].mxu0 %v3043
        %v3243 = vpop.f32.mrb[0].mxu0
        %v3244 = vadd.f32 0.0, %v3243
        %v3245 = vpop.f32.mrb[0].mxu0
        %3246 = vmatprep.mubr.f32.mxu0 0.0
        %3247 = vmatmul.mubr.f32.gmra.mrb[0].mxu0 %v3046
        %v3248 = vpop.f32.mrb[0].mxu0
        %v3249 = vadd.f32 0.0, %v3248
        %v3250 = vpop.f32.mrb[0].mxu0
        %3251 = vmatprep.mubr.f32.mxu0 0.0
        %3252 = vmatmul.mubr.f32.gmra.mrb[0].mxu0 %v3049
        %v3253 = vpop.f32.mrb[0].mxu0
        %v3254 = vadd.f32 0.0, %v3253
        %v3255 = vpop.f32.mrb[0].mxu0
        %3256 = vmatprep.mubr.f32.mxu0 0.0
        %3257 = vmatmul.mubr.f32.gmra.mrb[0].mxu0 %v3052
        %v3258 = vpop.f32.mrb[0].mxu0
        %v3259 = vadd.f32 0.0, %v3258
        %v3260 = vpop.f32.mrb[0].mxu0
        %3261 = vmatprep.mubr.f32.mxu0 0.0
        %3262 = vmatmul.mubr.f32.gmra.mrb[0].mxu0 %v3055
        %v3263 = vpop.f32.mrb[0].mxu0
        %v3264 = vadd.f32 0.0, %v3263
        %v3265 = vpop.f32.mrb[0].mxu0
        %3266 = vmatprep.mubr.f32.mxu0 0.0
        %3267 = vmatmul.mubr.f32.gmra.mrb[0].mxu0 %v3058
        %v3268 = vpop.f32.mrb[0].mxu0
        %v3269 = vadd.f32 0.0, %v3268
        %v3270 = vpop.f32.mrb[0].mxu0
        %3271 = vmatprep.mubr.f32.mxu0 0.0
        %3272 = vmatmul.mubr.f32.gmra.mrb[0].mxu0 %v3061
        %v3273 = vpop.f32.mrb[0].mxu0
        %v3274 = vadd.f32 0.0, %v3273
        %v3275 = vpop.f32.mrb[0].mxu0
        %3276 = vmatprep.mubr.f32.mxu0 0.0
        %3277 = vmatmul.mubr.f32.gmra.mrb[0].mxu0 %v3064
        %v3278 = vpop.f32.mrb[0].mxu0
        %v3279 = vadd.f32 0.0, %v3278
        %v3280 = vpop.f32.mrb[0].mxu0
        %3281 = vmatprep.mubr.f32.mxu0 0.0
        %3282 = vmatmul.mubr.f32.gmra.mrb[0].mxu0 %v3067
        %v3283 = vpop.f32.mrb[0].mxu0
        %v3284 = vadd.f32 0.0, %v3283
        %v3285 = vpop.f32.mrb[0].mxu0
        %3286 = vmatprep.mubr.f32.mxu0 0.0
        %3287 = vmatmul.mubr.f32.gmra.mrb[0].mxu0 %v3070
        %v3288 = vpop.f32.mrb[0].mxu0
        %v3289 = vadd.f32 0.0, %v3288
        %v3290 = vpop.f32.mrb[0].mxu0
        %3291 = vmatprep.mubr.f32.mxu0 0.0
        %3292 = vmatmul.mubr.f32.gmra.mrb[0].mxu0 %v3073
        %v3293 = vpop.f32.mrb[0].mxu0
        %v3294 = vadd.f32 0.0, %v3293
        %v3295 = vpop.f32.mrb[0].mxu0
        %3296 = vmatprep.mubr.f32.mxu0 0.0
        %3297 = vmatmul.mubr.f32.gmra.mrb[0].mxu0 %v3076
        %v3298 = vpop.f32.mrb[0].mxu0
        %v3299 = vadd.f32 0.0, %v3298
        %v3300 = vpop.f32.mrb[0].mxu0
        %3301 = vmatprep.mubr.f32.mxu0 0.0
        %3302 = vmatmul.mubr.f32.gmra.mrb[0].mxu0 %v3079
        %v3303 = vpop.f32.mrb[0].mxu0
        %v3304 = vadd.f32 0.0, %v3303
        %v3305 = vpop.f32.mrb[0].mxu0
        %3306 = vmatprep.mubr.f32.mxu0 0.0
        %3307 = vmatmul.mubr.f32.gmra.mrb[0].mxu0 %v3082
        %v3308 = vpop.f32.mrb[0].mxu0
        %v3309 = vadd.f32 0.0, %v3308
        %v3310 = vpop.f32.mrb[0].mxu0
        %3311 = vdwg.mxu0
        %v3312 = vadd.f32 %v2922, %v3154
        %v3313 = vadd.f32 %v2923, %v3159
        %v3314 = vadd.f32 %v2924, %v3164
        %v3315 = vadd.f32 %v2925, %v3169
        %v3316 = vadd.f32 %v2926, %v3174
        %v3317 = vadd.f32 %v2927, %v3179
        %v3318 = vadd.f32 %v2928, %v3184
        %v3319 = vadd.f32 %v2929, %v3189
        %v3320 = vadd.f32 %v2930, %v3194
        %v3321 = vadd.f32 %v2931, %v3199
        %v3322 = vadd.f32 %v2932, %v3204
        %v3323 = vadd.f32 %v2933, %v3209
        %v3324 = vadd.f32 %v2934, %v3214
        %v3325 = vadd.f32 %v2935, %v3219
        %v3326 = vadd.f32 %v2936, %v3224
        %v3327 = vadd.f32 %v2937, %v3229
        %v3328 = vadd.f32 %v2938, %v3234
        %v3329 = vadd.f32 %v2939, %v3239
        %v3330 = vadd.f32 %v2940, %v3244
        %v3331 = vadd.f32 %v2941, %v3249
        %v3332 = vadd.f32 %v2942, %v3254
        %v3333 = vadd.f32 %v2943, %v3259
        %v3334 = vadd.f32 %v2944, %v3264
        %v3335 = vadd.f32 %v2945, %v3269
        %v3336 = vadd.f32 %v2946, %v3274
        %v3337 = vadd.f32 %v2947, %v3279
        %v3338 = vadd.f32 %v2948, %v3284
        %v3339 = vadd.f32 %v2949, %v3289
        %v3340 = vadd.f32 %v2950, %v3294
        %v3341 = vadd.f32 %v2951, %v3299
        %v3342 = vadd.f32 %v2952, %v3304
        %v3343 = vadd.f32 %v2953, %v3309
        %v3344 = vld [vmem:[%s2563 + $0x2] sm:$0xff]
        %v3345 = vld [vmem:[%s2563 + $0xa] sm:$0xff]
        %v3346 = vld [vmem:[%s2563 + $0x1a] sm:$0xff]
        %v3347 = vld [vmem:[%s2563 + $0x22] sm:$0xff]
        %v3348 = vld [vmem:[%s2563 + $0x32] sm:$0xff]
        %v3349 = vld [vmem:[%s2563 + $0x3a] sm:$0xff]
        %v3350 = vld [vmem:[%s2563 + $0x4a] sm:$0xff]
        %v3351 = vld [vmem:[%s2563 + $0x52] sm:$0xff]
        %v3352 = vld [vmem:[%s2563 + $0x62] sm:$0xff]
        %v3353 = vld [vmem:[%s2563 + $0x6a] sm:$0xff]
        %v3354 = vld [vmem:[%s2563 + $0x7a] sm:$0xff]
        %v3355 = vld [vmem:[%s2563 + $0x82] sm:$0xff]
        %v3356 = vld [vmem:[%s2563 + $0x92] sm:$0xff]
        %v3357 = vld [vmem:[%s2563 + $0x9a] sm:$0xff]
        %v3358 = vld [vmem:[%s2563 + $0xaa] sm:$0xff]
        %v3359 = vld [vmem:[%s2563 + $0xb2] sm:$0xff]
        %v3360 = vld [vmem:[%s2563 + $0xc2] sm:$0xff]
        %v3361 = vld [vmem:[%s2563 + $0xca] sm:$0xff]
        %v3362 = vld [vmem:[%s2563 + $0xda] sm:$0xff]
        %v3363 = vld [vmem:[%s2563 + $0xe2] sm:$0xff]
        %v3364 = vld [vmem:[%s2563 + $0xf2] sm:$0xff]
        %v3365 = vld [vmem:[%s2563 + $0xfa] sm:$0xff]
        %v3366 = vld [vmem:[%s2563 + $0x10a] sm:$0xff]
        %v3367 = vld [vmem:[%s2563 + $0x112] sm:$0xff]
        %v3368 = vld [vmem:[%s2563 + $0x122] sm:$0xff]
        %v3369 = vld [vmem:[%s2563 + $0x12a] sm:$0xff]
        %v3370 = vld [vmem:[%s2563 + $0x13a] sm:$0xff]
        %v3371 = vld [vmem:[%s2563 + $0x142] sm:$0xff]
        %v3372 = vld [vmem:[%s2563 + $0x152] sm:$0xff]
        %v3373 = vld [vmem:[%s2563 + $0x15a] sm:$0xff]
        %v3374 = vld [vmem:[%s2563 + $0x16a] sm:$0xff]
        %v3375 = vld [vmem:[%s2563 + $0x172] sm:$0xff]
        %s3376 = scalar_lea.vmem %s210, 32
        %v3377 = vld [vmem:[%s3376] sm:$0xf]
        %v3379 = vsel %vm254, %v3344, 0
        %v3382 = vsel %vm254, %v3345, 0
        %v3385 = vsel %vm254, %v3346, 0
        %v3388 = vsel %vm254, %v3347, 0
        %v3391 = vsel %vm254, %v3348, 0
        %v3394 = vsel %vm254, %v3349, 0
        %v3397 = vsel %vm254, %v3350, 0
        %v3400 = vsel %vm254, %v3351, 0
        %v3403 = vsel %vm254, %v3352, 0
        %v3406 = vsel %vm254, %v3353, 0
        %v3409 = vsel %vm254, %v3354, 0
        %v3412 = vsel %vm254, %v3355, 0
        %v3415 = vsel %vm254, %v3356, 0
        %v3418 = vsel %vm254, %v3357, 0
        %v3421 = vsel %vm254, %v3358, 0
        %v3424 = vsel %vm254, %v3359, 0
        %v3427 = vsel %vm254, %v3360, 0
        %v3430 = vsel %vm254, %v3361, 0
        %v3433 = vsel %vm254, %v3362, 0
        %v3436 = vsel %vm254, %v3363, 0
        %v3439 = vsel %vm254, %v3364, 0
        %v3442 = vsel %vm254, %v3365, 0
        %v3445 = vsel %vm254, %v3366, 0
        %v3448 = vsel %vm254, %v3367, 0
        %v3451 = vsel %vm254, %v3368, 0
        %v3454 = vsel %vm254, %v3369, 0
        %v3457 = vsel %vm254, %v3370, 0
        %v3460 = vsel %vm254, %v3371, 0
        %v3463 = vsel %vm254, %v3372, 0
        %v3466 = vsel %vm254, %v3373, 0
        %v3469 = vsel %vm254, %v3374, 0
        %v3472 = vsel %vm254, %v3375, 0
        %v3475 = vsel %vm351, %v3377, 0
        %3477 = vmatprep.subr.mxu0 0.0
        %3478 = vmatpush1.msra.mxu0 %v3475
        %3479 = vmatprep.subr.mxu0 0.0
        %3480 = vmatpush1.msra.mxu0 0.0
        %3481 = vmatprep.subr.mxu0 0.0
        %3482 = vmatpush1.msra.mxu0 0.0
        %3483 = vmatprep.subr.mxu0 0.0
        %3484 = vmatpush1.msra.mxu0 0.0
        %3485 = vmatprep.subr.mxu0 0.0
        %3486 = vmatpush1.msra.mxu0 0.0
        %3487 = vmatprep.subr.mxu0 0.0
        %3488 = vmatpush1.msra.mxu0 0.0
        %3489 = vmatprep.subr.mxu0 0.0
        %3490 = vmatpush1.msra.mxu0 0.0
        %3491 = vmatprep.subr.mxu0 0.0
        %3492 = vmatpush1.msra.mxu0 0.0
        %3493 = vmatprep.subr.mxu0 0.0
        %3494 = vmatpush1.msra.mxu0 0.0
        %3495 = vmatprep.subr.mxu0 0.0
        %3496 = vmatpush1.msra.mxu0 0.0
        %3497 = vmatprep.subr.mxu0 0.0
        %3498 = vmatpush1.msra.mxu0 0.0
        %3499 = vmatprep.subr.mxu0 0.0
        %3500 = vmatpush1.msra.mxu0 0.0
        %3501 = vmatprep.subr.mxu0 0.0
        %3502 = vmatpush1.msra.mxu0 0.0
        %3503 = vmatprep.subr.mxu0 0.0
        %3504 = vmatpush1.msra.mxu0 0.0
        %3505 = vmatprep.subr.mxu0 0.0
        %3506 = vmatpush1.msra.mxu0 0.0
        %3507 = vmatprep.subr.mxu0 0.0
        %3508 = vmatpush1.msra.mxu0 0.0
        %3509 = vmatprep.subr.mxu0 0.0
        %3510 = vmatpush1.msra.mxu0 0.0
        %3511 = vmatprep.subr.mxu0 0.0
        %3512 = vmatpush1.msra.mxu0 0.0
        %3513 = vmatprep.subr.mxu0 0.0
        %3514 = vmatpush1.msra.mxu0 0.0
        %3515 = vmatprep.subr.mxu0 0.0
        %3516 = vmatpush1.msra.mxu0 0.0
        %3517 = vmatprep.subr.mxu0 0.0
        %3518 = vmatpush1.msra.mxu0 0.0
        %3519 = vmatprep.subr.mxu0 0.0
        %3520 = vmatpush1.msra.mxu0 0.0
        %3521 = vmatprep.subr.mxu0 0.0
        %3522 = vmatpush1.msra.mxu0 0.0
        %3523 = vmatprep.subr.mxu0 0.0
        %3524 = vmatpush1.msra.mxu0 0.0
        %3525 = vmatprep.subr.mxu0 0.0
        %3526 = vmatpush1.msra.mxu0 0.0
        %3527 = vmatprep.subr.mxu0 0.0
        %3528 = vmatpush1.msra.mxu0 0.0
        %3529 = vmatprep.subr.mxu0 0.0
        %3530 = vmatpush1.msra.mxu0 0.0
        %3531 = vmatprep.subr.mxu0 0.0
        %3532 = vmatpush1.msra.mxu0 0.0
        %3533 = vmatprep.subr.mxu0 0.0
        %3534 = vmatpush1.msra.mxu0 0.0
        %3535 = vmatprep.subr.mxu0 0.0
        %3536 = vmatpush1.msra.mxu0 0.0
        %3537 = vmatprep.subr.mxu0 0.0
        %3538 = vmatpush1.msra.mxu0 0.0
        %3539 = vmatprep.subr.mxu0 0.0
        %3540 = vmatpush1.msra.mxu0 0.0
        %3541 = vmatprep.mubr.f32.mxu0 0.0
        %3542 = vmatmul.mubr.f32.gmra.mrb[0].mxu0 %v3379
        %v3543 = vpop.f32.mrb[0].mxu0
        %v3544 = vadd.f32 0.0, %v3543
        %v3545 = vpop.f32.mrb[0].mxu0
        %3546 = vmatprep.mubr.f32.mxu0 0.0
        %3547 = vmatmul.mubr.f32.gmra.mrb[0].mxu0 %v3382
        %v3548 = vpop.f32.mrb[0].mxu0
        %v3549 = vadd.f32 0.0, %v3548
        %v3550 = vpop.f32.mrb[0].mxu0
        %3551 = vmatprep.mubr.f32.mxu0 0.0
        %3552 = vmatmul.mubr.f32.gmra.mrb[0].mxu0 %v3385
        %v3553 = vpop.f32.mrb[0].mxu0
        %v3554 = vadd.f32 0.0, %v3553
        %v3555 = vpop.f32.mrb[0].mxu0
        %3556 = vmatprep.mubr.f32.mxu0 0.0
        %3557 = vmatmul.mubr.f32.gmra.mrb[0].mxu0 %v3388
        %v3558 = vpop.f32.mrb[0].mxu0
        %v3559 = vadd.f32 0.0, %v3558
        %v3560 = vpop.f32.mrb[0].mxu0
        %3561 = vmatprep.mubr.f32.mxu0 0.0
        %3562 = vmatmul.mubr.f32.gmra.mrb[0].mxu0 %v3391
        %v3563 = vpop.f32.mrb[0].mxu0
        %v3564 = vadd.f32 0.0, %v3563
        %v3565 = vpop.f32.mrb[0].mxu0
        %3566 = vmatprep.mubr.f32.mxu0 0.0
        %3567 = vmatmul.mubr.f32.gmra.mrb[0].mxu0 %v3394
        %v3568 = vpop.f32.mrb[0].mxu0
        %v3569 = vadd.f32 0.0, %v3568
        %v3570 = vpop.f32.mrb[0].mxu0
        %3571 = vmatprep.mubr.f32.mxu0 0.0
        %3572 = vmatmul.mubr.f32.gmra.mrb[0].mxu0 %v3397
        %v3573 = vpop.f32.mrb[0].mxu0
        %v3574 = vadd.f32 0.0, %v3573
        %v3575 = vpop.f32.mrb[0].mxu0
        %3576 = vmatprep.mubr.f32.mxu0 0.0
        %3577 = vmatmul.mubr.f32.gmra.mrb[0].mxu0 %v3400
        %v3578 = vpop.f32.mrb[0].mxu0
        %v3579 = vadd.f32 0.0, %v3578
        %v3580 = vpop.f32.mrb[0].mxu0
        %3581 = vmatprep.mubr.f32.mxu0 0.0
        %3582 = vmatmul.mubr.f32.gmra.mrb[0].mxu0 %v3403
        %v3583 = vpop.f32.mrb[0].mxu0
        %v3584 = vadd.f32 0.0, %v3583
        %v3585 = vpop.f32.mrb[0].mxu0
        %3586 = vmatprep.mubr.f32.mxu0 0.0
        %3587 = vmatmul.mubr.f32.gmra.mrb[0].mxu0 %v3406
        %v3588 = vpop.f32.mrb[0].mxu0
        %v3589 = vadd.f32 0.0, %v3588
        %v3590 = vpop.f32.mrb[0].mxu0
        %3591 = vmatprep.mubr.f32.mxu0 0.0
        %3592 = vmatmul.mubr.f32.gmra.mrb[0].mxu0 %v3409
        %v3593 = vpop.f32.mrb[0].mxu0
        %v3594 = vadd.f32 0.0, %v3593
        %v3595 = vpop.f32.mrb[0].mxu0
        %3596 = vmatprep.mubr.f32.mxu0 0.0
        %3597 = vmatmul.mubr.f32.gmra.mrb[0].mxu0 %v3412
        %v3598 = vpop.f32.mrb[0].mxu0
        %v3599 = vadd.f32 0.0, %v3598
        %v3600 = vpop.f32.mrb[0].mxu0
        %3601 = vmatprep.mubr.f32.mxu0 0.0
        %3602 = vmatmul.mubr.f32.gmra.mrb[0].mxu0 %v3415
        %v3603 = vpop.f32.mrb[0].mxu0
        %v3604 = vadd.f32 0.0, %v3603
        %v3605 = vpop.f32.mrb[0].mxu0
        %3606 = vmatprep.mubr.f32.mxu0 0.0
        %3607 = vmatmul.mubr.f32.gmra.mrb[0].mxu0 %v3418
        %v3608 = vpop.f32.mrb[0].mxu0
        %v3609 = vadd.f32 0.0, %v3608
        %v3610 = vpop.f32.mrb[0].mxu0
        %3611 = vmatprep.mubr.f32.mxu0 0.0
        %3612 = vmatmul.mubr.f32.gmra.mrb[0].mxu0 %v3421
        %v3613 = vpop.f32.mrb[0].mxu0
        %v3614 = vadd.f32 0.0, %v3613
        %v3615 = vpop.f32.mrb[0].mxu0
        %3616 = vmatprep.mubr.f32.mxu0 0.0
        %3617 = vmatmul.mubr.f32.gmra.mrb[0].mxu0 %v3424
        %v3618 = vpop.f32.mrb[0].mxu0
        %v3619 = vadd.f32 0.0, %v3618
        %v3620 = vpop.f32.mrb[0].mxu0
        %3621 = vmatprep.mubr.f32.mxu0 0.0
        %3622 = vmatmul.mubr.f32.gmra.mrb[0].mxu0 %v3427
        %v3623 = vpop.f32.mrb[0].mxu0
        %v3624 = vadd.f32 0.0, %v3623
        %v3625 = vpop.f32.mrb[0].mxu0
        %3626 = vmatprep.mubr.f32.mxu0 0.0
        %3627 = vmatmul.mubr.f32.gmra.mrb[0].mxu0 %v3430
        %v3628 = vpop.f32.mrb[0].mxu0
        %v3629 = vadd.f32 0.0, %v3628
        %v3630 = vpop.f32.mrb[0].mxu0
        %3631 = vmatprep.mubr.f32.mxu0 0.0
        %3632 = vmatmul.mubr.f32.gmra.mrb[0].mxu0 %v3433
        %v3633 = vpop.f32.mrb[0].mxu0
        %v3634 = vadd.f32 0.0, %v3633
        %v3635 = vpop.f32.mrb[0].mxu0
        %3636 = vmatprep.mubr.f32.mxu0 0.0
        %3637 = vmatmul.mubr.f32.gmra.mrb[0].mxu0 %v3436
        %v3638 = vpop.f32.mrb[0].mxu0
        %v3639 = vadd.f32 0.0, %v3638
        %v3640 = vpop.f32.mrb[0].mxu0
        %3641 = vmatprep.mubr.f32.mxu0 0.0
        %3642 = vmatmul.mubr.f32.gmra.mrb[0].mxu0 %v3439
        %v3643 = vpop.f32.mrb[0].mxu0
        %v3644 = vadd.f32 0.0, %v3643
        %v3645 = vpop.f32.mrb[0].mxu0
        %3646 = vmatprep.mubr.f32.mxu0 0.0
        %3647 = vmatmul.mubr.f32.gmra.mrb[0].mxu0 %v3442
        %v3648 = vpop.f32.mrb[0].mxu0
        %v3649 = vadd.f32 0.0, %v3648
        %v3650 = vpop.f32.mrb[0].mxu0
        %3651 = vmatprep.mubr.f32.mxu0 0.0
        %3652 = vmatmul.mubr.f32.gmra.mrb[0].mxu0 %v3445
        %v3653 = vpop.f32.mrb[0].mxu0
        %v3654 = vadd.f32 0.0, %v3653
        %v3655 = vpop.f32.mrb[0].mxu0
        %3656 = vmatprep.mubr.f32.mxu0 0.0
        %3657 = vmatmul.mubr.f32.gmra.mrb[0].mxu0 %v3448
        %v3658 = vpop.f32.mrb[0].mxu0
        %v3659 = vadd.f32 0.0, %v3658
        %v3660 = vpop.f32.mrb[0].mxu0
        %3661 = vmatprep.mubr.f32.mxu0 0.0
        %3662 = vmatmul.mubr.f32.gmra.mrb[0].mxu0 %v3451
        %v3663 = vpop.f32.mrb[0].mxu0
        %v3664 = vadd.f32 0.0, %v3663
        %v3665 = vpop.f32.mrb[0].mxu0
        %3666 = vmatprep.mubr.f32.mxu0 0.0
        %3667 = vmatmul.mubr.f32.gmra.mrb[0].mxu0 %v3454
        %v3668 = vpop.f32.mrb[0].mxu0
        %v3669 = vadd.f32 0.0, %v3668
        %v3670 = vpop.f32.mrb[0].mxu0
        %3671 = vmatprep.mubr.f32.mxu0 0.0
        %3672 = vmatmul.mubr.f32.gmra.mrb[0].mxu0 %v3457
        %v3673 = vpop.f32.mrb[0].mxu0
        %v3674 = vadd.f32 0.0, %v3673
        %v3675 = vpop.f32.mrb[0].mxu0
        %3676 = vmatprep.mubr.f32.mxu0 0.0
        %3677 = vmatmul.mubr.f32.gmra.mrb[0].mxu0 %v3460
        %v3678 = vpop.f32.mrb[0].mxu0
        %v3679 = vadd.f32 0.0, %v3678
        %v3680 = vpop.f32.mrb[0].mxu0
        %3681 = vmatprep.mubr.f32.mxu0 0.0
        %3682 = vmatmul.mubr.f32.gmra.mrb[0].mxu0 %v3463
        %v3683 = vpop.f32.mrb[0].mxu0
        %v3684 = vadd.f32 0.0, %v3683
        %v3685 = vpop.f32.mrb[0].mxu0
        %3686 = vmatprep.mubr.f32.mxu0 0.0
        %3687 = vmatmul.mubr.f32.gmra.mrb[0].mxu0 %v3466
        %v3688 = vpop.f32.mrb[0].mxu0
        %v3689 = vadd.f32 0.0, %v3688
        %v3690 = vpop.f32.mrb[0].mxu0
        %3691 = vmatprep.mubr.f32.mxu0 0.0
        %3692 = vmatmul.mubr.f32.gmra.mrb[0].mxu0 %v3469
        %v3693 = vpop.f32.mrb[0].mxu0
        %v3694 = vadd.f32 0.0, %v3693
        %v3695 = vpop.f32.mrb[0].mxu0
        %3696 = vmatprep.mubr.f32.mxu0 0.0
        %3697 = vmatmul.mubr.f32.gmra.mrb[0].mxu0 %v3472
        %v3698 = vpop.f32.mrb[0].mxu0
        %v3699 = vadd.f32 0.0, %v3698
        %v3700 = vpop.f32.mrb[0].mxu0
        %3701 = vdwg.mxu0
        %v3702 = vadd.f32 %v3312, %v3544
        %v3703 = vadd.f32 %v3313, %v3549
        %v3704 = vadd.f32 %v3314, %v3554
        %v3705 = vadd.f32 %v3315, %v3559
        %v3706 = vadd.f32 %v3316, %v3564
        %v3707 = vadd.f32 %v3317, %v3569
        %v3708 = vadd.f32 %v3318, %v3574
        %v3709 = vadd.f32 %v3319, %v3579
        %v3710 = vadd.f32 %v3320, %v3584
        %v3711 = vadd.f32 %v3321, %v3589
        %v3712 = vadd.f32 %v3322, %v3594
        %v3713 = vadd.f32 %v3323, %v3599
        %v3714 = vadd.f32 %v3324, %v3604
        %v3715 = vadd.f32 %v3325, %v3609
        %v3716 = vadd.f32 %v3326, %v3614
        %v3717 = vadd.f32 %v3327, %v3619
        %v3718 = vadd.f32 %v3328, %v3624
        %v3719 = vadd.f32 %v3329, %v3629
        %v3720 = vadd.f32 %v3330, %v3634
        %v3721 = vadd.f32 %v3331, %v3639
        %v3722 = vadd.f32 %v3332, %v3644
        %v3723 = vadd.f32 %v3333, %v3649
        %v3724 = vadd.f32 %v3334, %v3654
        %v3725 = vadd.f32 %v3335, %v3659
        %v3726 = vadd.f32 %v3336, %v3664
        %v3727 = vadd.f32 %v3337, %v3669
        %v3728 = vadd.f32 %v3338, %v3674
        %v3729 = vadd.f32 %v3339, %v3679
        %v3730 = vadd.f32 %v3340, %v3684
        %v3731 = vadd.f32 %v3341, %v3689
        %v3732 = vadd.f32 %v3342, %v3694
        %v3733 = vadd.f32 %v3343, %v3699
        %v3734 = vmax.f32 %v3702, 0.0
        %v3735 = vmax.f32 %v3703, 0.0
        %v3736 = vmax.f32 %v3704, 0.0
        %v3737 = vmax.f32 %v3705, 0.0
        %v3738 = vmax.f32 %v3706, 0.0
        %v3739 = vmax.f32 %v3707, 0.0
        %v3740 = vmax.f32 %v3708, 0.0
        %v3741 = vmax.f32 %v3709, 0.0
        %v3742 = vmax.f32 %v3710, 0.0
        %v3743 = vmax.f32 %v3711, 0.0
        %v3744 = vmax.f32 %v3712, 0.0
        %v3745 = vmax.f32 %v3713, 0.0
        %v3746 = vmax.f32 %v3714, 0.0
        %v3747 = vmax.f32 %v3715, 0.0
        %v3748 = vmax.f32 %v3716, 0.0
        %v3749 = vmax.f32 %v3717, 0.0
        %v3750 = vmax.f32 %v3718, 0.0
        %v3751 = vmax.f32 %v3719, 0.0
        %v3752 = vmax.f32 %v3720, 0.0
        %v3753 = vmax.f32 %v3721, 0.0
        %v3754 = vmax.f32 %v3722, 0.0
        %v3755 = vmax.f32 %v3723, 0.0
        %v3756 = vmax.f32 %v3724, 0.0
        %v3757 = vmax.f32 %v3725, 0.0
        %v3758 = vmax.f32 %v3726, 0.0
        %v3759 = vmax.f32 %v3727, 0.0
        %v3760 = vmax.f32 %v3728, 0.0
        %v3761 = vmax.f32 %v3729, 0.0
        %v3762 = vmax.f32 %v3730, 0.0
        %v3763 = vmax.f32 %v3731, 0.0
        %v3764 = vmax.f32 %v3732, 0.0
        %v3765 = vmax.f32 %v3733, 0.0
        %3766 = vst [vmem:[%s201] sm:$0xff] %v3734
        %3767 = vst [vmem:[%s201 + $0x8] sm:$0xff] %v3735
        %3768 = vst [vmem:[%s201 + $0x10] sm:$0xff] %v3736
        %3769 = vst [vmem:[%s201 + $0x18] sm:$0xff] %v3737
        %3770 = vst [vmem:[%s201 + $0x20] sm:$0xff] %v3738
        %3771 = vst [vmem:[%s201 + $0x28] sm:$0xff] %v3739
        %3772 = vst [vmem:[%s201 + $0x30] sm:$0xff] %v3740
        %3773 = vst [vmem:[%s201 + $0x38] sm:$0xff] %v3741
        %3774 = vst [vmem:[%s201 + $0x40] sm:$0xff] %v3742
        %3775 = vst [vmem:[%s201 + $0x48] sm:$0xff] %v3743
        %3776 = vst [vmem:[%s201 + $0x50] sm:$0xff] %v3744
        %3777 = vst [vmem:[%s201 + $0x58] sm:$0xff] %v3745
        %3778 = vst [vmem:[%s201 + $0x60] sm:$0xff] %v3746
        %3779 = vst [vmem:[%s201 + $0x68] sm:$0xff] %v3747
        %3780 = vst [vmem:[%s201 + $0x70] sm:$0xff] %v3748
        %3781 = vst [vmem:[%s201 + $0x78] sm:$0xff] %v3749
        %3782 = vst [vmem:[%s201 + $0x80] sm:$0xff] %v3750
        %3783 = vst [vmem:[%s201 + $0x88] sm:$0xff] %v3751
        %3784 = vst [vmem:[%s201 + $0x90] sm:$0xff] %v3752
        %3785 = vst [vmem:[%s201 + $0x98] sm:$0xff] %v3753
        %3786 = vst [vmem:[%s201 + $0xa0] sm:$0xff] %v3754
        %3787 = vst [vmem:[%s201 + $0xa8] sm:$0xff] %v3755
        %3788 = vst [vmem:[%s201 + $0xb0] sm:$0xff] %v3756
        %3789 = vst [vmem:[%s201 + $0xb8] sm:$0xff] %v3757
        %3790 = vst [vmem:[%s201 + $0xc0] sm:$0xff] %v3758
        %3791 = vst [vmem:[%s201 + $0xc8] sm:$0xff] %v3759
        %3792 = vst [vmem:[%s201 + $0xd0] sm:$0xff] %v3760
        %3793 = vst [vmem:[%s201 + $0xd8] sm:$0xff] %v3761
        %3794 = vst [vmem:[%s201 + $0xe0] sm:$0xff] %v3762
        %3795 = vst [vmem:[%s201 + $0xe8] sm:$0xff] %v3763
        %3796 = vst [vmem:[%s201 + $0xf0] sm:$0xff] %v3764
        %3797 = vst [vmem:[%s201 + $0xf8] sm:$0xff] %v3765
        %s3798 = sand.u32 %s117, 1
        %s3799 = scalar_lea.sflag [#allocation3], %s3798
        %s3800 = sand.u32 %s117, 1
        %s3801 = smul.addr %s3800, 256
        %s3802 = scalar_lea.vmem [#allocation2], %s3801
        // Predicated region
        $region33: #{tpu_custom_call.1} parent=31 // pred_check
          %p3803 = pneg %p127
        $region34: #{tpu_custom_call.1} parent=31 // pred_check_branch
          %3805 = sbr.rel (%p3803) target = $region36
        $region35: #{tpu_custom_call.1} parent=31 // pred_region
          %s3807 = ssub.s32 4096, 4096
          %3808 = vsyncadd %s3799, %s3807
          %s3809 = smul.addr %s21, 32
          %s3810 = sadd.s32 %s22, %s3809
          %s3811 = smul.addr %s3810, 128
          %s3812 = scalar_lea.hbm %s3, %s3811
          %s3813 = sshll.u32 %s3802, 4
          %s3814 = int_to_ptr.vmem [resolvable:$true] %s3813
          %3819 = dma.vmem_to_hbm [thread:$0]  %s3814, 4096, %s3812, %s3799, 128, 128, 8
        $region36: #{tpu_custom_call.1} parent=31 // pred_fallthru
          _
      $region32: #{tpu_custom_call.1} parent=5 // pred_fallthru
        _
      %p3820 = scmp.le.s32.totalorder 2, %s12
      // Predicated region
      $region37: #{tpu_custom_call.1} parent=5 // pred_check
        %p3821 = pneg %p3820
      $region38: #{tpu_custom_call.1} parent=5 // pred_check_branch
        %3823 = sbr.rel (%p3821) target = $region40
      $region39: #{tpu_custom_call.1} parent=5 // pred_region
        %s3824 = ssub.s32 %s12, 2
        // Predicated region
        $region41: #{tpu_custom_call.1} parent=39 // pred_check
          %p3825 = pneg %p133
        $region42: #{tpu_custom_call.1} parent=39 // pred_check_branch
          %3827 = sbr.rel (%p3825) target = $region44
        $region43: #{tpu_custom_call.1} parent=39 // pred_region
          %s3828 = sand.u32 %s118, 1
          %s3829 = scalar_lea.sflag [#allocation3], %s3828
          %s3830 = sand.u32 %s118, 1
          %s3831 = smul.addr %s3830, 256
          %s3832 = scalar_lea.vmem [#allocation2], %s3831
          %3833 = dma.done %s3829, 4096
        $region44: #{tpu_custom_call.1} parent=39 // pred_fallthru
          _
      $region40: #{tpu_custom_call.1} parent=5 // pred_fallthru
        _
    $region6: #{tpu_custom_call.1} parent=1 // loop_footer
      %s16 = sadd.s32 1, %s12
    $region7: #{tpu_custom_call.1} parent=1 // loop_footer_branch
      %11 = sbr.rel target = $region3
    $region8: #{tpu_custom_call.1} parent=1 // loop_exit
      _
    %3834 = vsyncpa [#allocation3], 1
    %s3835 = scalar_lea.sflag [#allocation3], 1
    %3836 = vsyncpa %s3835, 1

</llo_original>
